<compile_context>
chip_gen: v5e
topology: v5e:2x2
jax: 0.10.0
libtpu: 0.0.40
codegen_flags: <defaults>
</compile_context>

<pallas_src>
import math
import functools

import jax
import jax.numpy as jnp
from jax.experimental import pallas as pl
from jax.experimental.pallas import tpu as pltpu


# --------------------------------------------------------------------------- helpers
def _round_up(x, m):
    return (x + m - 1) // m * m


def _vmem_capacity_bytes():
    try:
        return int(pltpu.get_tpu_info().vmem_capacity_bytes)
    except Exception:
        return 64 << 20          # conservative default: v7x per-TensorCore VMEM


def _vmem_limit(need_bytes, cap_bytes):
    hi = max(cap_bytes - (8 << 20), 16 << 20)       # always leave ~8 MiB headroom
    return int(min(max(need_bytes, 32 << 20), hi))


def _full_spec(arr, resident):
    """Whole-array operand spec.

    resident=True  -> the full array is placed in VMEM (single copy, no double buffering).
    resident=False -> fallback: full-shape block with a constant index map (fetched once by
                      the pipeline, but double-buffered)."""
    if resident:
        return pl.BlockSpec(memory_space=pltpu.MemorySpace.VMEM)
    zeros = (0,) * arr.ndim
    return pl.BlockSpec(arr.shape, lambda *_, _z=zeros: _z)


def _layernorm(x, w, b, eps=1e-5):
    mu = jnp.mean(x, axis=-1, keepdims=True)
    var = jnp.mean((x - mu) ** 2, axis=-1, keepdims=True)
    return (x - mu) * jax.lax.rsqrt(var + eps) * w + b


def _softmax(s):
    # Row softmax in f32; denominator via the (cheap) EUP approximate reciprocal.
    m = jnp.max(s, axis=-1, keepdims=True)
    e = jnp.exp(s - m)
    return e * pl.reciprocal(jnp.sum(e, axis=-1, keepdims=True), approx=True)


# ---------------------------------------------------------------------------
# Kernel 1: differential attention.  grid = (batch, head_group); the head-group axis is the
# inner "arbitrary" (reduction) axis: the fc_out projection is accumulated group by group
# into a resident f32 VMEM scratch, so no (N, 2*D) concat is ever materialized.
# ---------------------------------------------------------------------------
def diff_attn_kernel(
        x_ref, ln1w_ref, ln1b_ref, wq_ref, wk_ref, wv_ref,
        lam_ref, gnw_ref, gnb_ref, wfc_ref,
        out_ref, attn_ref,
        xb_ref, acc_ref,
        *, head_dim, heads_per_step, valid_n):
    p = pl.program_id(1)
    hd = head_dim
    c = 2 * hd
    g_heads = heads_per_step
    n_pad = xb_ref.shape[0]
    scale = 1.0 / math.sqrt(hd)

    @pl.when(p == 0)
    def _init():
        # LayerNorm1 once per batch row; keep a bf16 copy for the MXU.
        xn = _layernorm(x_ref[0], ln1w_ref[...], ln1b_ref[...])
        xb_ref[...] = xn.astype(jnp.bfloat16)
        acc_ref[...] = jnp.zeros_like(acc_ref)

    xb = xb_ref[...]                                                   # (Np, D) bf16

    # Merged projections for the whole head group: 3 matmuls, each G*2*hd lanes wide.
    raw_q = jnp.dot(xb, wq_ref[p], preferred_element_type=jnp.float32)
    raw_k = jnp.dot(xb, wk_ref[p], preferred_element_type=jnp.float32)
    raw_v = jnp.dot(xb, wv_ref[p], preferred_element_type=jnp.float32)

    padded = valid_n < n_pad                                           # static python bool
    if padded:
        key_ok = jax.lax.broadcasted_iota(jnp.int32, (n_pad, n_pad), 1) < valid_n
        row_ok = jax.lax.broadcasted_iota(jnp.int32, (n_pad, 1), 0) < valid_n

    nt = (((1,), (1,)), ((), ()))                                      # x @ y.T
    head_outs = []
    for g in range(g_heads):                                           # unrolled (static)
        q1 = raw_q[:, g * c: g * c + hd].astype(jnp.bfloat16)
        q2 = raw_q[:, g * c + hd: (g + 1) * c].astype(jnp.bfloat16)
        k1 = raw_k[:, g * c: g * c + hd].astype(jnp.bfloat16)
        k2 = raw_k[:, g * c + hd: (g + 1) * c].astype(jnp.bfloat16)
        v = raw_v[:, g * c: (g + 1) * c].astype(jnp.bfloat16)

        s1 = jax.lax.dot_general(q1, k1, nt, preferred_element_type=jnp.float32) * scale
        s2 = jax.lax.dot_general(q2, k2, nt, preferred_element_type=jnp.float32) * scale
        if padded:
            s1 = jnp.where(key_ok, s1, -1e30)                          # mask padded keys
            s2 = jnp.where(key_ok, s2, -1e30)
        a1 = _softmax(s1)
        a2 = _softmax(s2)

        lam = lam_ref[0, p * g_heads + g]                              # scalar from SMEM
        attn_h = a1 - lam * a2                                         # (Np, Np) f32
        attn_ref[0, g] = attn_h.astype(attn_ref.dtype)                 # bf16; dropout=identity

        oh = jnp.dot(attn_h.astype(jnp.bfloat16), v,
                     preferred_element_type=jnp.float32)               # (Np, c)

        # GroupNorm(1, 2*hd): statistics over all (token, channel) elements of this
        # (batch, head) sample — matches nn.GroupNorm on the (B*H, C, N) view.
        if padded:
            denom = float(valid_n * c)
            ohm = jnp.where(row_ok, oh, 0.0)
            mu = jnp.sum(ohm, keepdims=True) / denom
            var = jnp.sum(jnp.where(row_ok, (oh - mu) ** 2, 0.0), keepdims=True) / denom
        else:
            mu = jnp.mean(oh, keepdims=True)
            var = jnp.mean((oh - mu) ** 2, keepdims=True)
        oh = (oh - mu) * jax.lax.rsqrt(var + 1e-5) * gnw_ref[...] + gnb_ref[...]
        head_outs.append(oh.astype(jnp.bfloat16))

    oh_all = head_outs[0] if g_heads == 1 else jnp.concatenate(head_outs, axis=-1)
    # Running fc_out accumulation: concat(heads) @ Wfc == sum_g head_g @ Wfc[g-block].
    acc_ref[...] += jnp.dot(oh_all, wfc_ref[p], preferred_element_type=jnp.float32)

    @pl.when(p == pl.num_programs(1) - 1)
    def _finalize():
        out_ref[0] = acc_ref[...].astype(out_ref.dtype)                # bf16 HBM write


# ---------------------------------------------------------------------------
# Kernel 2: residual + LayerNorm2 + MLP, grid = (batch, token_tiles), fully parallel.
# ---------------------------------------------------------------------------
def mlp_kernel(x_ref, ao_ref, ln2w_ref, ln2b_ref, w1_ref, b1_ref, w2_ref, b2_ref,
               out_ref):
    x = x_ref[0] + ao_ref[0].astype(jnp.float32)                       # residual 1 in f32
    xn = _layernorm(x, ln2w_ref[...], ln2b_ref[...])
    h1 = jnp.dot(xn.astype(jnp.bfloat16), w1_ref[...],
                 preferred_element_type=jnp.float32) + b1_ref[...]
    h1 = jax.nn.gelu(h1, approximate=False)                            # exact GELU (torch default)
    h2 = jnp.dot(h1.astype(jnp.bfloat16), w2_ref[...],
                 preferred_element_type=jnp.float32) + b2_ref[...]
    out_ref[0] = x + h2                                                # residual 2


# --------------------------------------------------------------------------- wrapper
def transformer_encoder_block(x, params, num_heads, *, resident_weights=True):
    B, N, D = x.shape
    H = num_heads
    hd = D // H
    c = 2 * hd
    Hm = params["w1"].shape[1]
    G = 2 if H % 2 == 0 else 1                  # heads processed per grid step
    HP = H // G
    bf16, f32 = jnp.bfloat16, jnp.float32
    cap = _vmem_capacity_bytes()

    # Token padding: multiples of 128 keep the attn-prob stores lane-dense for long
    # sequences; small sequences only pad to the sublane multiple of 8.
    N_pad = _round_up(N, 128) if N >= 64 else _round_up(N, 8)
    x_p = jnp.pad(x, ((0, 0), (0, N_pad - N), (0, 0))) if N_pad != N else x

    # lambda_h = exp(lq1.lk1) - exp(lq2.lk2) + lambda_init (forward-time, as in the module).
    lam = (jnp.exp(jnp.sum(params["lq1"] * params["lk1"], axis=1))
           - jnp.exp(jnp.sum(params["lq2"] * params["lk2"], axis=1))
           + 0.8).reshape(1, H).astype(f32)

    # Host-side weight re-layout: per head-group, lane-aligned, bf16 MXU operands.
    def pack_proj(w):                           # (D, 2*D) -> (HP, D, G*c)
        t = jnp.transpose(w.reshape(D, H, c), (1, 0, 2))               # (H, D, c)
        t = t.reshape(HP, G, D, c).transpose(0, 2, 1, 3)               # (HP, D, G, c)
        return t.reshape(HP, D, G * c).astype(bf16)

    wq_p = pack_proj(params["wq"])
    wk_p = pack_proj(params["wk"])
    wv_p = pack_proj(params["wv"])
    wfc_p = params["wfc"].reshape(HP, G * c, D).astype(bf16)           # rows already head-major
    w1 = params["w1"].astype(bf16)
    w2 = params["w2"].astype(bf16)

    # ---------------- kernel 1: differential attention ----------------
    kern_a = functools.partial(diff_attn_kernel, head_dim=hd,
                               heads_per_step=G, valid_n=N)

    in_specs_a = [
        pl.BlockSpec((1, N_pad, D), lambda b, p: (b, 0, 0)),           # x (resident across heads)
        _full_spec(params["ln1_w"], resident_weights),                 # ln1 w
        _full_spec(params["ln1_b"], resident_weights),                 # ln1 b
        _full_spec(wq_p, resident_weights),                            # Wq (all head groups)
        _full_spec(wk_p, resident_weights),                            # Wk
        _full_spec(wv_p, resident_weights),                            # Wv
        pl.BlockSpec(memory_space=pltpu.MemorySpace.SMEM),             # lambda table (scalars)
        _full_spec(params["gn_w"], resident_weights),                  # group-norm w
        _full_spec(params["gn_b"], resident_weights),                  # group-norm b
        _full_spec(wfc_p, resident_weights),                           # Wfc
    ]
    out_specs_a = (
        pl.BlockSpec((1, N_pad, D), lambda b, p: (b, 0, 0)),           # attention block output
        pl.BlockSpec((1, G, N_pad, N_pad), lambda b, p: (b, p, 0, 0)),  # attention probs
    )
    out_shape_a = (
        jax.ShapeDtypeStruct((B, N_pad, D), bf16),                     # bf16 halves the HBM write
        jax.ShapeDtypeStruct((B, H, N_pad, N_pad), bf16),
    )

    w_bytes_a = 2 * (3 * D * 2 * D + 2 * D * D)                        # resident bf16 weights
    io_bytes_a = (2 * 4 * N_pad * D                                    # x block (double buffered)
                  + 2 * 2 * N_pad * D + 2 * 2 * G * N_pad * N_pad     # output blocks
                  + 2 * N_pad * D + 4 * N_pad * D)                     # scratches
    vmem_a = _vmem_limit(w_bytes_a + io_bytes_a + (8 << 20), cap)
    flops_a = int(B * (16 * N_pad * D * D + 8 * N_pad * N_pad * D))
    trans_a = int(B * H * 2 * N_pad * N_pad)
    bytes_a = int(4 * B * N_pad * D + w_bytes_a
                  + 2 * (B * N_pad * D + B * H * N_pad * N_pad))

    attn_out, attn = pl.pallas_call(
        kern_a,
        grid=(B, HP),
        in_specs=in_specs_a,
        out_specs=out_specs_a,
        out_shape=out_shape_a,
        scratch_shapes=[
            pltpu.VMEM((N_pad, D), bf16),      # LayerNorm1(x) in bf16, reused across heads
            pltpu.VMEM((N_pad, D), f32),       # fc_out accumulator
        ],
        compiler_params=pltpu.CompilerParams(
            dimension_semantics=("parallel", "arbitrary"),
            vmem_limit_bytes=vmem_a),
        cost_estimate=pl.CostEstimate(
            flops=flops_a, transcendentals=trans_a, bytes_accessed=bytes_a),
    )(x_p, params["ln1_w"], params["ln1_b"], wq_p, wk_p, wv_p,
      lam, params["gn_w"], params["gn_b"], wfc_p)

    # ---------------- kernel 2: residual + LayerNorm2 + MLP ----------------
    tn_opts = (512, 256, 128) if cap >= (100 << 20) else (256, 128)    # 512 only on big-VMEM gens
    TN = next((t for t in tn_opts if N_pad % t == 0), N_pad)

    in_specs_b = [
        pl.BlockSpec((1, TN, D), lambda b, t: (b, t, 0)),              # x
        pl.BlockSpec((1, TN, D), lambda b, t: (b, t, 0)),              # attention output (bf16)
        _full_spec(params["ln2_w"], resident_weights),
        _full_spec(params["ln2_b"], resident_weights),
        _full_spec(w1, resident_weights),
        _full_spec(params["b1"], resident_weights),
        _full_spec(w2, resident_weights),
        _full_spec(params["b2"], resident_weights),
    ]
    out_specs_b = pl.BlockSpec((1, TN, D), lambda b, t: (b, t, 0))
    out_shape_b = jax.ShapeDtypeStruct((B, N_pad, D), f32)

    w_bytes_b = 2 * 2 * D * Hm + 4 * (Hm + 3 * D)
    io_bytes_b = 2 * (4 + 2 + 4) * TN * D + 4 * TN * Hm
    vmem_b = _vmem_limit(w_bytes_b + io_bytes_b + (8 << 20), cap)
    flops_b = int(4 * B * N_pad * D * Hm)
    trans_b = int(B * N_pad * Hm)
    bytes_b = int((4 + 2 + 4) * B * N_pad * D + w_bytes_b)

    out = pl.pallas_call(
        mlp_kernel,
        grid=(B, N_pad // TN),
        in_specs=in_specs_b,
        out_specs=out_specs_b,
        out_shape=out_shape_b,
        compiler_params=pltpu.CompilerParams(
            dimension_semantics=("parallel", "parallel"),
            vmem_limit_bytes=vmem_b),
        cost_estimate=pl.CostEstimate(
            flops=flops_b, transcendentals=trans_b, bytes_accessed=bytes_b),
    )(x_p, attn_out, params["ln2_w"], params["ln2_b"], w1, params["b1"], w2, params["b2"])

    if N_pad != N:
        out = out[:, :N, :]
        attn = attn[:, :, :N, :N]
    return out, attn


# --------------------------------------------------------------------------- reference
def reference_jax(x, params, num_heads):
    """Pure-JAX f32 reference mirroring the PyTorch forward (eval mode)."""
    B, N, D = x.shape
    hd = D // num_heads
    xn = _layernorm(x, params["ln1_w"], params["ln1_b"])
    rq = (xn @ params["wq"]).reshape(B, N, num_heads, 2 * hd).transpose(0, 2, 1, 3)
    rk = (xn @ params["wk"]).reshape(B, N, num_heads, 2 * hd).transpose(0, 2, 1, 3)
    rv = (xn @ params["wv"]).reshape(B, N, num_heads, 2 * hd).transpose(0, 2, 1, 3)
    q1, q2 = rq[..., :hd], rq[..., hd:]
    k1, k2 = rk[..., :hd], rk[..., hd:]
    A1 = q1 @ jnp.swapaxes(k1, -2, -1) / math.sqrt(hd)
    A2 = q2 @ jnp.swapaxes(k2, -2, -1) / math.sqrt(hd)
    a1 = jax.nn.softmax(A1, axis=-1)
    a2 = jax.nn.softmax(A2, axis=-1)
    lam = (jnp.exp(jnp.sum(params["lq1"] * params["lk1"], axis=1))
           - jnp.exp(jnp.sum(params["lq2"] * params["lk2"], axis=1)) + 0.8)
    attn = a1 - lam.reshape(1, num_heads, 1, 1) * a2
    out = attn @ rv                                                    # (B, H, N, 2*hd)
    mu = jnp.mean(out, axis=(2, 3), keepdims=True)
    var = jnp.mean((out - mu) ** 2, axis=(2, 3), keepdims=True)
    out = (out - mu) * jax.lax.rsqrt(var + 1e-5)
    out = out * params["gn_w"].reshape(1, 1, 1, 2 * hd) + params["gn_b"].reshape(1, 1, 1, 2 * hd)
    out = out.transpose(0, 2, 1, 3).reshape(B, N, 2 * D) @ params["wfc"]
    y = x + out
    xn2 = _layernorm(y, params["ln2_w"], params["ln2_b"])
    h1 = jax.nn.gelu(xn2 @ params["w1"] + params["b1"], approximate=False)
    y = y + (h1 @ params["w2"] + params["b2"])
    return y, attn


def init_params(key, emb_dim, num_heads, mlp_hidden_dim):
    hd = emb_dim // num_heads
    ks = jax.random.split(key, 16)
    s = 0.02
    f32 = jnp.float32
    return {
        # LayerNorm / GroupNorm affines perturbed away from (1, 0) so the test is non-trivial.
        "ln1_w": 1.0 + 0.1 * jax.random.normal(ks[0], (1, emb_dim), f32),
        "ln1_b": 0.1 * jax.random.normal(ks[1], (1, emb_dim), f32),
        "wq": jax.random.normal(ks[2], (emb_dim, 2 * emb_dim), f32) * s,
        "wk": jax.random.normal(ks[3], (emb_dim, 2 * emb_dim), f32) * s,
        "wv": jax.random.normal(ks[4], (emb_dim, 2 * emb_dim), f32) * s,
        # torch init is zeros (=> lam == lambda_init); perturb for a non-trivial test.
        "lq1": 0.1 * jax.random.normal(ks[5], (num_heads, hd), f32),
        "lk1": 0.1 * jax.random.normal(ks[6], (num_heads, hd), f32),
        "lq2": 0.1 * jax.random.normal(ks[7], (num_heads, hd), f32),
        "lk2": 0.1 * jax.random.normal(ks[8], (num_heads, hd), f32),
        "gn_w": 1.0 + 0.1 * jax.random.normal(ks[9], (1, 2 * hd), f32),
        "gn_b": 0.1 * jax.random.normal(ks[10], (1, 2 * hd), f32),
        "wfc": jax.random.normal(ks[11], (2 * emb_dim, emb_dim), f32) * s,
        "ln2_w": 1.0 + 0.1 * jax.random.normal(ks[12], (1, emb_dim), f32),
        "ln2_b": 0.1 * jax.random.normal(ks[13], (1, emb_dim), f32),
        "w1": jax.random.normal(ks[14], (emb_dim, mlp_hidden_dim), f32) * s,
        "b1": jnp.zeros((1, mlp_hidden_dim), f32),
        "w2": jax.random.normal(ks[15], (mlp_hidden_dim, emb_dim), f32) * s,
        "b2": jnp.zeros((1, emb_dim), f32),
    }


if __name__ == "__main__":
    B, N, emb_dim, num_heads, mlp_hidden_dim = 2, 8, 32, 4, 64

    root = jax.random.PRNGKey(0)
    kx, kp, kx2 = jax.random.split(root, 3)
    x = jax.random.normal(kx, (B, N, emb_dim), jnp.float32)
    params = init_params(kp, emb_dim, num_heads, mlp_hidden_dim)

    def run(xx):
        try:
            return transformer_encoder_block(xx, params, num_heads)
        except Exception:
            # Fallback for JAX versions without whole-array VMEM operand placement.
            return transformer_encoder_block(xx, params, num_heads, resident_weights=False)

    out, attn = run(x)
    out = jax.block_until_ready(out)
    attn = jax.block_until_ready(attn)

    ref_out, ref_attn = reference_jax(x, params, num_heads)
    assert out.shape == (B, N, emb_dim) and out.dtype == jnp.float32
    assert attn.shape == (B, num_heads, N, N)
    err_attn = float(jnp.max(jnp.abs(attn.astype(jnp.float32) - ref_attn)))
    err_out = float(jnp.max(jnp.abs(out - ref_out)))
    assert err_attn < 2e-2, f"attn max-abs-err {err_attn}"
    assert err_out < 2e-2, f"out max-abs-err {err_out}"

    # Second check with a non-multiple-of-8 sequence length: exercises token padding,
    # softmax key masking and masked GroupNorm statistics.
    N2 = 12
    x2 = jax.random.normal(kx2, (B, N2, emb_dim), jnp.float32)
    out2, attn2 = run(x2)
    out2 = jax.block_until_ready(out2)
    ref_out2, ref_attn2 = reference_jax(x2, params, num_heads)
    assert out2.shape == (B, N2, emb_dim) and attn2.shape == (B, num_heads, N2, N2)
    err2 = max(float(jnp.max(jnp.abs(out2 - ref_out2))),
               float(jnp.max(jnp.abs(attn2.astype(jnp.float32) - ref_attn2))))
    assert err2 < 2e-2, f"padded-path max-abs-err {err2}"

    print("KERNEL_OK")
</pallas_src>

<mosaic_0001>
module attributes {stable_mosaic.version = 11 : i64} {
  func.func @diff_attn_kernel(%arg0: i32, %arg1: i32, %arg2: memref<1x8x32xf32, #tpu.memory_space<vmem>>, %arg3: memref<1x32xf32, #tpu.memory_space<vmem>>, %arg4: memref<1x32xf32, #tpu.memory_space<vmem>>, %arg5: memref<2x32x32xbf16, #tpu.memory_space<vmem>>, %arg6: memref<2x32x32xbf16, #tpu.memory_space<vmem>>, %arg7: memref<2x32x32xbf16, #tpu.memory_space<vmem>>, %arg8: memref<1x4xf32, #tpu.memory_space<smem>>, %arg9: memref<1x16xf32, #tpu.memory_space<vmem>>, %arg10: memref<1x16xf32, #tpu.memory_space<vmem>>, %arg11: memref<2x32x32xbf16, #tpu.memory_space<vmem>>, %arg12: memref<1x8x32xbf16, #tpu.memory_space<vmem>>, %arg13: memref<1x2x8x8xbf16, #tpu.memory_space<vmem>>, %arg14: memref<8x32xbf16, #tpu.memory_space<vmem>>, %arg15: memref<8x32xf32, #tpu.memory_space<vmem>>) attributes {dimension_semantics = [#tpu.dimension_semantics<parallel>, #tpu.dimension_semantics<arbitrary>], iteration_bounds = array<i64: 2, 2>, scalar_prefetch = 0 : i64, scratch_operands = 2 : i64, tpu.core_type = #tpu.core_type<tc>, window_params = [{transform_indices = @transform_0, window_bounds = array<i64: 1, 8, 32>}, {pipeline_mode = #tpu.pipeline_mode<synchronous>, transform_indices = @transform_1, window_bounds = array<i64: 1, 32>}, {pipeline_mode = #tpu.pipeline_mode<synchronous>, transform_indices = @transform_2, window_bounds = array<i64: 1, 32>}, {pipeline_mode = #tpu.pipeline_mode<synchronous>, transform_indices = @transform_3, window_bounds = array<i64: 2, 32, 32>}, {pipeline_mode = #tpu.pipeline_mode<synchronous>, transform_indices = @transform_4, window_bounds = array<i64: 2, 32, 32>}, {pipeline_mode = #tpu.pipeline_mode<synchronous>, transform_indices = @transform_5, window_bounds = array<i64: 2, 32, 32>}, {transform_indices = @transform_6, window_bounds = array<i64: 1, 4>}, {pipeline_mode = #tpu.pipeline_mode<synchronous>, transform_indices = @transform_7, window_bounds = array<i64: 1, 16>}, {pipeline_mode = #tpu.pipeline_mode<synchronous>, transform_indices = @transform_8, window_bounds = array<i64: 1, 16>}, {pipeline_mode = #tpu.pipeline_mode<synchronous>, transform_indices = @transform_9, window_bounds = array<i64: 2, 32, 32>}, {transform_indices = @transform_10, window_bounds = array<i64: 1, 8, 32>}, {transform_indices = @transform_11, window_bounds = array<i64: 1, 2, 8, 8>}]} {
    %c0_i32 = arith.constant 0 : i32
    %0 = arith.cmpi eq, %arg1, %c0_i32 : i32
    %1 = arith.extui %0 : i1 to i32
    %c0_i32_0 = arith.constant 0 : i32
    %2 = arith.cmpi ne, %1, %c0_i32_0 : i32
    scf.if %2 {
      %c0_66 = arith.constant 0 : index
      %c0_67 = arith.constant 0 : index
      %c0_68 = arith.constant 0 : index
      %187 = vector.load %arg2[%c0_66, %c0_67, %c0_68] : memref<1x8x32xf32, #tpu.memory_space<vmem>>, vector<1x8x32xf32>
      %188 = vector.shape_cast %187 : vector<1x8x32xf32> to vector<8x32xf32>
      %c0_69 = arith.constant 0 : index
      %c0_70 = arith.constant 0 : index
      %189 = vector.load %arg3[%c0_69, %c0_70] : memref<1x32xf32, #tpu.memory_space<vmem>>, vector<1x32xf32>
      %c0_71 = arith.constant 0 : index
      %c0_72 = arith.constant 0 : index
      %190 = vector.load %arg4[%c0_71, %c0_72] : memref<1x32xf32, #tpu.memory_space<vmem>>, vector<1x32xf32>
      %cst_73 = arith.constant dense<0.000000e+00> : vector<8xf32>
      %191 = vector.multi_reduction <add>, %188, %cst_73 [1] : vector<8x32xf32> to vector<8xf32>
      %192 = vector.shape_cast %191 : vector<8xf32> to vector<8x1xf32>
      %cst_74 = arith.constant 3.200000e+01 : f32
      %193 = vector.broadcast %cst_74 : f32 to vector<8x1xf32>
      %194 = arith.divf %192, %193 : vector<8x1xf32>
      %195 = vector.broadcast %194 : vector<8x1xf32> to vector<8x32xf32>
      %196 = arith.subf %188, %195 : vector<8x32xf32>
      %197 = arith.mulf %196, %196 : vector<8x32xf32>
      %cst_75 = arith.constant dense<0.000000e+00> : vector<8xf32>
      %198 = vector.multi_reduction <add>, %197, %cst_75 [1] : vector<8x32xf32> to vector<8xf32>
      %199 = vector.shape_cast %198 : vector<8xf32> to vector<8x1xf32>
      %cst_76 = arith.constant 3.200000e+01 : f32
      %200 = vector.broadcast %cst_76 : f32 to vector<8x1xf32>
      %201 = arith.divf %199, %200 : vector<8x1xf32>
      %202 = vector.broadcast %194 : vector<8x1xf32> to vector<8x32xf32>
      %203 = arith.subf %188, %202 : vector<8x32xf32>
      %cst_77 = arith.constant 9.99999974E-6 : f32
      %204 = vector.broadcast %cst_77 : f32 to vector<8x1xf32>
      %205 = arith.addf %201, %204 : vector<8x1xf32>
      %206 = math.rsqrt %205 : vector<8x1xf32>
      %207 = vector.broadcast %206 : vector<8x1xf32> to vector<8x32xf32>
      %208 = arith.mulf %203, %207 : vector<8x32xf32>
      %209 = vector.broadcast %189 : vector<1x32xf32> to vector<8x32xf32>
      %210 = arith.mulf %208, %209 : vector<8x32xf32>
      %211 = vector.broadcast %190 : vector<1x32xf32> to vector<8x32xf32>
      %212 = arith.addf %210, %211 : vector<8x32xf32>
      %213 = arith.truncf %212 : vector<8x32xf32> to vector<8x32xbf16>
      %c0_78 = arith.constant 0 : index
      %c0_79 = arith.constant 0 : index
      %214 = vector.load %arg14[%c0_78, %c0_79] : memref<8x32xbf16, #tpu.memory_space<vmem>>, vector<8x32xbf16>
      tpu.vector_store %arg14[%c0_78, %c0_79], %213 {strides = array<i32>} : memref<8x32xbf16, #tpu.memory_space<vmem>>, vector<8x32xbf16>,
      %cst_80 = arith.constant 0.000000e+00 : f32
      %215 = vector.broadcast %cst_80 : f32 to vector<8x32xf32>
      %c0_81 = arith.constant 0 : index
      %c0_82 = arith.constant 0 : index
      %216 = vector.load %arg15[%c0_81, %c0_82] : memref<8x32xf32, #tpu.memory_space<vmem>>, vector<8x32xf32>
      tpu.vector_store %arg15[%c0_81, %c0_82], %215 {strides = array<i32>} : memref<8x32xf32, #tpu.memory_space<vmem>>, vector<8x32xf32>,
    } else {
    }
    %c0 = arith.constant 0 : index
    %c0_1 = arith.constant 0 : index
    %3 = vector.load %arg14[%c0, %c0_1] : memref<8x32xbf16, #tpu.memory_space<vmem>>, vector<8x32xbf16>
    %4 = arith.index_cast %arg1 : i32 to index
    %c0_2 = arith.constant 0 : index
    %c0_3 = arith.constant 0 : index
    %5 = vector.load %arg5[%4, %c0_2, %c0_3] : memref<2x32x32xbf16, #tpu.memory_space<vmem>>, vector<1x32x32xbf16>
    %6 = vector.shape_cast %5 : vector<1x32x32xbf16> to vector<32x32xbf16>
    %cst = arith.constant dense<0.000000e+00> : vector<8x32xf32>
    %7 = tpu.matmul %3, %6, %cst {dimension_numbers = #tpu.dot_dimension_numbers<[1], [0], [0], [1], [0, 0, 1, 1], [], []>} : vector<8x32xbf16>, vector<32x32xbf16>, vector<8x32xf32> -> vector<8x32xf32>
    %8 = arith.index_cast %arg1 : i32 to index
    %c0_4 = arith.constant 0 : index
    %c0_5 = arith.constant 0 : index
    %9 = vector.load %arg6[%8, %c0_4, %c0_5] : memref<2x32x32xbf16, #tpu.memory_space<vmem>>, vector<1x32x32xbf16>
    %10 = vector.shape_cast %9 : vector<1x32x32xbf16> to vector<32x32xbf16>
    %cst_6 = arith.constant dense<0.000000e+00> : vector<8x32xf32>
    %11 = tpu.matmul %3, %10, %cst_6 {dimension_numbers = #tpu.dot_dimension_numbers<[1], [0], [0], [1], [0, 0, 1, 1], [], []>} : vector<8x32xbf16>, vector<32x32xbf16>, vector<8x32xf32> -> vector<8x32xf32>
    %12 = arith.index_cast %arg1 : i32 to index
    %c0_7 = arith.constant 0 : index
    %c0_8 = arith.constant 0 : index
    %13 = vector.load %arg7[%12, %c0_7, %c0_8] : memref<2x32x32xbf16, #tpu.memory_space<vmem>>, vector<1x32x32xbf16>
    %14 = vector.shape_cast %13 : vector<1x32x32xbf16> to vector<32x32xbf16>
    %cst_9 = arith.constant dense<0.000000e+00> : vector<8x32xf32>
    %15 = tpu.matmul %3, %14, %cst_9 {dimension_numbers = #tpu.dot_dimension_numbers<[1], [0], [0], [1], [0, 0, 1, 1], [], []>} : vector<8x32xbf16>, vector<32x32xbf16>, vector<8x32xf32> -> vector<8x32xf32>
    %16 = vector.extract_strided_slice %7 {offsets = [0, 0], sizes = [8, 8], strides = [1, 1]} : vector<8x32xf32> to vector<8x8xf32>
    %17 = arith.truncf %16 : vector<8x8xf32> to vector<8x8xbf16>
    %18 = vector.extract_strided_slice %7 {offsets = [0, 8], sizes = [8, 8], strides = [1, 1]} : vector<8x32xf32> to vector<8x8xf32>
    %19 = arith.truncf %18 : vector<8x8xf32> to vector<8x8xbf16>
    %20 = vector.extract_strided_slice %11 {offsets = [0, 0], sizes = [8, 8], strides = [1, 1]} : vector<8x32xf32> to vector<8x8xf32>
    %21 = arith.truncf %20 : vector<8x8xf32> to vector<8x8xbf16>
    %22 = vector.extract_strided_slice %11 {offsets = [0, 8], sizes = [8, 8], strides = [1, 1]} : vector<8x32xf32> to vector<8x8xf32>
    %23 = arith.truncf %22 : vector<8x8xf32> to vector<8x8xbf16>
    %24 = vector.extract_strided_slice %15 {offsets = [0, 0], sizes = [8, 16], strides = [1, 1]} : vector<8x32xf32> to vector<8x16xf32>
    %25 = arith.truncf %24 : vector<8x16xf32> to vector<8x16xbf16>
    %cst_10 = arith.constant dense<0.000000e+00> : vector<8x8xf32>
    %26 = tpu.matmul %17, %21, %cst_10 {dimension_numbers = #tpu.dot_dimension_numbers<[1], [1], [0], [0], [0, 0, 1, 0], [], []>} : vector<8x8xbf16>, vector<8x8xbf16>, vector<8x8xf32> -> vector<8x8xf32>
    %cst_11 = arith.constant 0.353553385 : f32
    %27 = vector.broadcast %cst_11 : f32 to vector<8x8xf32>
    %28 = arith.mulf %26, %27 : vector<8x8xf32>
    %cst_12 = arith.constant dense<0.000000e+00> : vector<8x8xf32>
    %29 = tpu.matmul %19, %23, %cst_12 {dimension_numbers = #tpu.dot_dimension_numbers<[1], [1], [0], [0], [0, 0, 1, 0], [], []>} : vector<8x8xbf16>, vector<8x8xbf16>, vector<8x8xf32> -> vector<8x8xf32>
    %cst_13 = arith.constant 0.353553385 : f32
    %30 = vector.broadcast %cst_13 : f32 to vector<8x8xf32>
    %31 = arith.mulf %29, %30 : vector<8x8xf32>
    %cst_14 = arith.constant dense<0xFF800000> : vector<8xf32>
    %32 = vector.multi_reduction <maximumf>, %28, %cst_14 [1] : vector<8x8xf32> to vector<8xf32>
    %33 = vector.shape_cast %32 : vector<8xf32> to vector<8x1xf32>
    %34 = vector.broadcast %33 : vector<8x1xf32> to vector<8x8xf32>
    %35 = arith.subf %28, %34 : vector<8x8xf32>
    %36 = math.exp %35 : vector<8x8xf32>
    %cst_15 = arith.constant dense<0.000000e+00> : vector<8xf32>
    %37 = vector.multi_reduction <add>, %36, %cst_15 [1] : vector<8x8xf32> to vector<8xf32>
    %38 = vector.shape_cast %37 : vector<8xf32> to vector<8x1xf32>
    %39 = tpu.reciprocal %38 {approx = true} : vector<8x1xf32> -> vector<8x1xf32>
    %40 = vector.broadcast %39 : vector<8x1xf32> to vector<8x8xf32>
    %41 = arith.mulf %36, %40 : vector<8x8xf32>
    %cst_16 = arith.constant dense<0xFF800000> : vector<8xf32>
    %42 = vector.multi_reduction <maximumf>, %31, %cst_16 [1] : vector<8x8xf32> to vector<8xf32>
    %43 = vector.shape_cast %42 : vector<8xf32> to vector<8x1xf32>
    %44 = vector.broadcast %43 : vector<8x1xf32> to vector<8x8xf32>
    %45 = arith.subf %31, %44 : vector<8x8xf32>
    %46 = math.exp %45 : vector<8x8xf32>
    %cst_17 = arith.constant dense<0.000000e+00> : vector<8xf32>
    %47 = vector.multi_reduction <add>, %46, %cst_17 [1] : vector<8x8xf32> to vector<8xf32>
    %48 = vector.shape_cast %47 : vector<8xf32> to vector<8x1xf32>
    %49 = tpu.reciprocal %48 {approx = true} : vector<8x1xf32> -> vector<8x1xf32>
    %50 = vector.broadcast %49 : vector<8x1xf32> to vector<8x8xf32>
    %51 = arith.mulf %46, %50 : vector<8x8xf32>
    %c2_i32 = arith.constant 2 : i32
    %52 = arith.muli %arg1, %c2_i32 : i32
    %c0_i32_18 = arith.constant 0 : i32
    %53 = arith.addi %52, %c0_i32_18 : i32
    %c0_19 = arith.constant 0 : index
    %54 = arith.index_cast %53 : i32 to index
    %55 = memref.load %arg8[%c0_19, %54] : memref<1x4xf32, #tpu.memory_space<smem>>
    %56 = vector.broadcast %55 : f32 to vector<8x8xf32>
    %57 = arith.mulf %56, %51 : vector<8x8xf32>
    %58 = arith.subf %41, %57 : vector<8x8xf32>
    %59 = arith.truncf %58 : vector<8x8xf32> to vector<8x8xbf16>
    %c0_20 = arith.constant 0 : index
    %c0_21 = arith.constant 0 : index
    %c0_22 = arith.constant 0 : index
    %c0_23 = arith.constant 0 : index
    %60 = vector.load %arg13[%c0_20, %c0_21, %c0_22, %c0_23] : memref<1x2x8x8xbf16, #tpu.memory_space<vmem>>, vector<1x1x8x8xbf16>
    %61 = vector.shape_cast %60 : vector<1x1x8x8xbf16> to vector<8x8xbf16>
    %62 = vector.shape_cast %59 : vector<8x8xbf16> to vector<1x1x8x8xbf16>
    tpu.vector_store %arg13[%c0_20, %c0_21, %c0_22, %c0_23], %62 {strides = array<i32>} : memref<1x2x8x8xbf16, #tpu.memory_space<vmem>>, vector<1x1x8x8xbf16>,
    %63 = arith.truncf %58 : vector<8x8xf32> to vector<8x8xbf16>
    %cst_24 = arith.constant dense<0.000000e+00> : vector<8x16xf32>
    %64 = tpu.matmul %63, %25, %cst_24 {dimension_numbers = #tpu.dot_dimension_numbers<[1], [0], [0], [1], [0, 0, 1, 1], [], []>} : vector<8x8xbf16>, vector<8x16xbf16>, vector<8x16xf32> -> vector<8x16xf32>
    %65 = vector.shape_cast %64 : vector<8x16xf32> to vector<1x8x16xf32>
    %cst_25 = arith.constant dense<0.000000e+00> : vector<1xf32>
    %66 = vector.multi_reduction <add>, %65, %cst_25 [1, 2] : vector<1x8x16xf32> to vector<1xf32>
    %67 = vector.shape_cast %66 : vector<1xf32> to vector<1x1x1xf32>
    %68 = vector.extract %67[0, 0, 0] : f32 from vector<1x1x1xf32>
    %69 = vector.broadcast %68 : f32 to vector<1x1xf32>
    %cst_26 = arith.constant 1.280000e+02 : f32
    %70 = vector.broadcast %cst_26 : f32 to vector<1x1xf32>
    %71 = arith.divf %69, %70 : vector<1x1xf32>
    %72 = vector.broadcast %71 : vector<1x1xf32> to vector<8x16xf32>
    %73 = arith.subf %64, %72 : vector<8x16xf32>
    %74 = arith.mulf %73, %73 : vector<8x16xf32>
    %75 = vector.shape_cast %74 : vector<8x16xf32> to vector<1x8x16xf32>
    %cst_27 = arith.constant dense<0.000000e+00> : vector<1xf32>
    %76 = vector.multi_reduction <add>, %75, %cst_27 [1, 2] : vector<1x8x16xf32> to vector<1xf32>
    %77 = vector.shape_cast %76 : vector<1xf32> to vector<1x1x1xf32>
    %78 = vector.extract %77[0, 0, 0] : f32 from vector<1x1x1xf32>
    %79 = vector.broadcast %78 : f32 to vector<1x1xf32>
    %cst_28 = arith.constant 1.280000e+02 : f32
    %80 = vector.broadcast %cst_28 : f32 to vector<1x1xf32>
    %81 = arith.divf %79, %80 : vector<1x1xf32>
    %82 = vector.broadcast %71 : vector<1x1xf32> to vector<8x16xf32>
    %83 = arith.subf %64, %82 : vector<8x16xf32>
    %cst_29 = arith.constant 9.99999974E-6 : f32
    %84 = vector.broadcast %cst_29 : f32 to vector<1x1xf32>
    %85 = arith.addf %81, %84 : vector<1x1xf32>
    %86 = math.rsqrt %85 : vector<1x1xf32>
    %87 = vector.broadcast %86 : vector<1x1xf32> to vector<8x16xf32>
    %88 = arith.mulf %83, %87 : vector<8x16xf32>
    %c0_30 = arith.constant 0 : index
    %c0_31 = arith.constant 0 : index
    %89 = vector.load %arg9[%c0_30, %c0_31] : memref<1x16xf32, #tpu.memory_space<vmem>>, vector<1x16xf32>
    %90 = vector.broadcast %89 : vector<1x16xf32> to vector<8x16xf32>
    %91 = arith.mulf %88, %90 : vector<8x16xf32>
    %c0_32 = arith.constant 0 : index
    %c0_33 = arith.constant 0 : index
    %92 = vector.load %arg10[%c0_32, %c0_33] : memref<1x16xf32, #tpu.memory_space<vmem>>, vector<1x16xf32>
    %93 = vector.broadcast %92 : vector<1x16xf32> to vector<8x16xf32>
    %94 = arith.addf %91, %93 : vector<8x16xf32>
    %95 = arith.truncf %94 : vector<8x16xf32> to vector<8x16xbf16>
    %96 = vector.extract_strided_slice %7 {offsets = [0, 16], sizes = [8, 8], strides = [1, 1]} : vector<8x32xf32> to vector<8x8xf32>
    %97 = arith.truncf %96 : vector<8x8xf32> to vector<8x8xbf16>
    %98 = vector.extract_strided_slice %7 {offsets = [0, 24], sizes = [8, 8], strides = [1, 1]} : vector<8x32xf32> to vector<8x8xf32>
    %99 = arith.truncf %98 : vector<8x8xf32> to vector<8x8xbf16>
    %100 = vector.extract_strided_slice %11 {offsets = [0, 16], sizes = [8, 8], strides = [1, 1]} : vector<8x32xf32> to vector<8x8xf32>
    %101 = arith.truncf %100 : vector<8x8xf32> to vector<8x8xbf16>
    %102 = vector.extract_strided_slice %11 {offsets = [0, 24], sizes = [8, 8], strides = [1, 1]} : vector<8x32xf32> to vector<8x8xf32>
    %103 = arith.truncf %102 : vector<8x8xf32> to vector<8x8xbf16>
    %104 = vector.extract_strided_slice %15 {offsets = [0, 16], sizes = [8, 16], strides = [1, 1]} : vector<8x32xf32> to vector<8x16xf32>
    %105 = arith.truncf %104 : vector<8x16xf32> to vector<8x16xbf16>
    %cst_34 = arith.constant dense<0.000000e+00> : vector<8x8xf32>
    %106 = tpu.matmul %97, %101, %cst_34 {dimension_numbers = #tpu.dot_dimension_numbers<[1], [1], [0], [0], [0, 0, 1, 0], [], []>} : vector<8x8xbf16>, vector<8x8xbf16>, vector<8x8xf32> -> vector<8x8xf32>
    %cst_35 = arith.constant 0.353553385 : f32
    %107 = vector.broadcast %cst_35 : f32 to vector<8x8xf32>
    %108 = arith.mulf %106, %107 : vector<8x8xf32>
    %cst_36 = arith.constant dense<0.000000e+00> : vector<8x8xf32>
    %109 = tpu.matmul %99, %103, %cst_36 {dimension_numbers = #tpu.dot_dimension_numbers<[1], [1], [0], [0], [0, 0, 1, 0], [], []>} : vector<8x8xbf16>, vector<8x8xbf16>, vector<8x8xf32> -> vector<8x8xf32>
    %cst_37 = arith.constant 0.353553385 : f32
    %110 = vector.broadcast %cst_37 : f32 to vector<8x8xf32>
    %111 = arith.mulf %109, %110 : vector<8x8xf32>
    %cst_38 = arith.constant dense<0xFF800000> : vector<8xf32>
    %112 = vector.multi_reduction <maximumf>, %108, %cst_38 [1] : vector<8x8xf32> to vector<8xf32>
    %113 = vector.shape_cast %112 : vector<8xf32> to vector<8x1xf32>
    %114 = vector.broadcast %113 : vector<8x1xf32> to vector<8x8xf32>
    %115 = arith.subf %108, %114 : vector<8x8xf32>
    %116 = math.exp %115 : vector<8x8xf32>
    %cst_39 = arith.constant dense<0.000000e+00> : vector<8xf32>
    %117 = vector.multi_reduction <add>, %116, %cst_39 [1] : vector<8x8xf32> to vector<8xf32>
    %118 = vector.shape_cast %117 : vector<8xf32> to vector<8x1xf32>
    %119 = tpu.reciprocal %118 {approx = true} : vector<8x1xf32> -> vector<8x1xf32>
    %120 = vector.broadcast %119 : vector<8x1xf32> to vector<8x8xf32>
    %121 = arith.mulf %116, %120 : vector<8x8xf32>
    %cst_40 = arith.constant dense<0xFF800000> : vector<8xf32>
    %122 = vector.multi_reduction <maximumf>, %111, %cst_40 [1] : vector<8x8xf32> to vector<8xf32>
    %123 = vector.shape_cast %122 : vector<8xf32> to vector<8x1xf32>
    %124 = vector.broadcast %123 : vector<8x1xf32> to vector<8x8xf32>
    %125 = arith.subf %111, %124 : vector<8x8xf32>
    %126 = math.exp %125 : vector<8x8xf32>
    %cst_41 = arith.constant dense<0.000000e+00> : vector<8xf32>
    %127 = vector.multi_reduction <add>, %126, %cst_41 [1] : vector<8x8xf32> to vector<8xf32>
    %128 = vector.shape_cast %127 : vector<8xf32> to vector<8x1xf32>
    %129 = tpu.reciprocal %128 {approx = true} : vector<8x1xf32> -> vector<8x1xf32>
    %130 = vector.broadcast %129 : vector<8x1xf32> to vector<8x8xf32>
    %131 = arith.mulf %126, %130 : vector<8x8xf32>
    %c2_i32_42 = arith.constant 2 : i32
    %132 = arith.muli %arg1, %c2_i32_42 : i32
    %c1_i32 = arith.constant 1 : i32
    %133 = arith.addi %132, %c1_i32 : i32
    %c0_43 = arith.constant 0 : index
    %134 = arith.index_cast %133 : i32 to index
    %135 = memref.load %arg8[%c0_43, %134] : memref<1x4xf32, #tpu.memory_space<smem>>
    %136 = vector.broadcast %135 : f32 to vector<8x8xf32>
    %137 = arith.mulf %136, %131 : vector<8x8xf32>
    %138 = arith.subf %121, %137 : vector<8x8xf32>
    %139 = arith.truncf %138 : vector<8x8xf32> to vector<8x8xbf16>
    %c0_44 = arith.constant 0 : index
    %c1 = arith.constant 1 : index
    %c0_45 = arith.constant 0 : index
    %c0_46 = arith.constant 0 : index
    %140 = vector.load %arg13[%c0_44, %c1, %c0_45, %c0_46] : memref<1x2x8x8xbf16, #tpu.memory_space<vmem>>, vector<1x1x8x8xbf16>
    %141 = vector.shape_cast %140 : vector<1x1x8x8xbf16> to vector<8x8xbf16>
    %142 = vector.shape_cast %139 : vector<8x8xbf16> to vector<1x1x8x8xbf16>
    tpu.vector_store %arg13[%c0_44, %c1, %c0_45, %c0_46], %142 {strides = array<i32>} : memref<1x2x8x8xbf16, #tpu.memory_space<vmem>>, vector<1x1x8x8xbf16>,
    %143 = arith.truncf %138 : vector<8x8xf32> to vector<8x8xbf16>
    %cst_47 = arith.constant dense<0.000000e+00> : vector<8x16xf32>
    %144 = tpu.matmul %143, %105, %cst_47 {dimension_numbers = #tpu.dot_dimension_numbers<[1], [0], [0], [1], [0, 0, 1, 1], [], []>} : vector<8x8xbf16>, vector<8x16xbf16>, vector<8x16xf32> -> vector<8x16xf32>
    %145 = vector.shape_cast %144 : vector<8x16xf32> to vector<1x8x16xf32>
    %cst_48 = arith.constant dense<0.000000e+00> : vector<1xf32>
    %146 = vector.multi_reduction <add>, %145, %cst_48 [1, 2] : vector<1x8x16xf32> to vector<1xf32>
    %147 = vector.shape_cast %146 : vector<1xf32> to vector<1x1x1xf32>
    %148 = vector.extract %147[0, 0, 0] : f32 from vector<1x1x1xf32>
    %149 = vector.broadcast %148 : f32 to vector<1x1xf32>
    %cst_49 = arith.constant 1.280000e+02 : f32
    %150 = vector.broadcast %cst_49 : f32 to vector<1x1xf32>
    %151 = arith.divf %149, %150 : vector<1x1xf32>
    %152 = vector.broadcast %151 : vector<1x1xf32> to vector<8x16xf32>
    %153 = arith.subf %144, %152 : vector<8x16xf32>
    %154 = arith.mulf %153, %153 : vector<8x16xf32>
    %155 = vector.shape_cast %154 : vector<8x16xf32> to vector<1x8x16xf32>
    %cst_50 = arith.constant dense<0.000000e+00> : vector<1xf32>
    %156 = vector.multi_reduction <add>, %155, %cst_50 [1, 2] : vector<1x8x16xf32> to vector<1xf32>
    %157 = vector.shape_cast %156 : vector<1xf32> to vector<1x1x1xf32>
    %158 = vector.extract %157[0, 0, 0] : f32 from vector<1x1x1xf32>
    %159 = vector.broadcast %158 : f32 to vector<1x1xf32>
    %cst_51 = arith.constant 1.280000e+02 : f32
    %160 = vector.broadcast %cst_51 : f32 to vector<1x1xf32>
    %161 = arith.divf %159, %160 : vector<1x1xf32>
    %162 = vector.broadcast %151 : vector<1x1xf32> to vector<8x16xf32>
    %163 = arith.subf %144, %162 : vector<8x16xf32>
    %cst_52 = arith.constant 9.99999974E-6 : f32
    %164 = vector.broadcast %cst_52 : f32 to vector<1x1xf32>
    %165 = arith.addf %161, %164 : vector<1x1xf32>
    %166 = math.rsqrt %165 : vector<1x1xf32>
    %167 = vector.broadcast %166 : vector<1x1xf32> to vector<8x16xf32>
    %168 = arith.mulf %163, %167 : vector<8x16xf32>
    %c0_53 = arith.constant 0 : index
    %c0_54 = arith.constant 0 : index
    %169 = vector.load %arg9[%c0_53, %c0_54] : memref<1x16xf32, #tpu.memory_space<vmem>>, vector<1x16xf32>
    %170 = vector.broadcast %169 : vector<1x16xf32> to vector<8x16xf32>
    %171 = arith.mulf %168, %170 : vector<8x16xf32>
    %c0_55 = arith.constant 0 : index
    %c0_56 = arith.constant 0 : index
    %172 = vector.load %arg10[%c0_55, %c0_56] : memref<1x16xf32, #tpu.memory_space<vmem>>, vector<1x16xf32>
    %173 = vector.broadcast %172 : vector<1x16xf32> to vector<8x16xf32>
    %174 = arith.addf %171, %173 : vector<8x16xf32>
    %175 = arith.truncf %174 : vector<8x16xf32> to vector<8x16xbf16>
    %176 = tpu.concatenate %95, %175 in 1 : vector<8x16xbf16>, vector<8x16xbf16> -> vector<8x32xbf16>
    %c0_57 = arith.constant 0 : index
    %c0_58 = arith.constant 0 : index
    %177 = vector.load %arg15[%c0_57, %c0_58] : memref<8x32xf32, #tpu.memory_space<vmem>>, vector<8x32xf32>
    %178 = arith.index_cast %arg1 : i32 to index
    %c0_59 = arith.constant 0 : index
    %c0_60 = arith.constant 0 : index
    %179 = vector.load %arg11[%178, %c0_59, %c0_60] : memref<2x32x32xbf16, #tpu.memory_space<vmem>>, vector<1x32x32xbf16>
    %180 = vector.shape_cast %179 : vector<1x32x32xbf16> to vector<32x32xbf16>
    %cst_61 = arith.constant dense<0.000000e+00> : vector<8x32xf32>
    %181 = tpu.matmul %176, %180, %cst_61 {dimension_numbers = #tpu.dot_dimension_numbers<[1], [0], [0], [1], [0, 0, 1, 1], [], []>} : vector<8x32xbf16>, vector<32x32xbf16>, vector<8x32xf32> -> vector<8x32xf32>
    %182 = arith.addf %177, %181 : vector<8x32xf32>
    %c0_62 = arith.constant 0 : index
    %c0_63 = arith.constant 0 : index
    %183 = vector.load %arg15[%c0_62, %c0_63] : memref<8x32xf32, #tpu.memory_space<vmem>>, vector<8x32xf32>
    tpu.vector_store %arg15[%c0_62, %c0_63], %182 {strides = array<i32>} : memref<8x32xf32, #tpu.memory_space<vmem>>, vector<8x32xf32>,
    %c1_i32_64 = arith.constant 1 : i32
    %184 = arith.cmpi eq, %arg1, %c1_i32_64 : i32
    %185 = arith.extui %184 : i1 to i32
    %c0_i32_65 = arith.constant 0 : i32
    %186 = arith.cmpi ne, %185, %c0_i32_65 : i32
    scf.if %186 {
      %c0_66 = arith.constant 0 : index
      %c0_67 = arith.constant 0 : index
      %187 = vector.load %arg15[%c0_66, %c0_67] : memref<8x32xf32, #tpu.memory_space<vmem>>, vector<8x32xf32>
      %188 = arith.truncf %187 : vector<8x32xf32> to vector<8x32xbf16>
      %c0_68 = arith.constant 0 : index
      %c0_69 = arith.constant 0 : index
      %c0_70 = arith.constant 0 : index
      %189 = vector.load %arg12[%c0_68, %c0_69, %c0_70] : memref<1x8x32xbf16, #tpu.memory_space<vmem>>, vector<1x8x32xbf16>
      %190 = vector.shape_cast %189 : vector<1x8x32xbf16> to vector<8x32xbf16>
      %191 = vector.shape_cast %188 : vector<8x32xbf16> to vector<1x8x32xbf16>
      tpu.vector_store %arg12[%c0_68, %c0_69, %c0_70], %191 {strides = array<i32>} : memref<1x8x32xbf16, #tpu.memory_space<vmem>>, vector<1x8x32xbf16>,
    } else {
    }
    return
  }
  func.func @transform_0(%arg0: i32, %arg1: i32) -> (i32, i32, i32) {
    %c0_i32 = arith.constant 0 : i32
    %c0_i32_0 = arith.constant 0 : i32
    %c0_i32_1 = arith.constant 0 : i32
    return %arg0, %c0_i32, %c0_i32_0 : i32, i32, i32
  }
  func.func @transform_1(%arg0: i32, %arg1: i32) -> (i32, i32) {
    %c0_i32 = arith.constant 0 : i32
    %c0_i32_0 = arith.constant 0 : i32
    %c0_i32_1 = arith.constant 0 : i32
    return %c0_i32, %c0_i32_0 : i32, i32
  }
  func.func @transform_2(%arg0: i32, %arg1: i32) -> (i32, i32) {
    %c0_i32 = arith.constant 0 : i32
    %c0_i32_0 = arith.constant 0 : i32
    %c0_i32_1 = arith.constant 0 : i32
    return %c0_i32, %c0_i32_0 : i32, i32
  }
  func.func @transform_3(%arg0: i32, %arg1: i32) -> (i32, i32, i32) {
    %c0_i32 = arith.constant 0 : i32
    %c0_i32_0 = arith.constant 0 : i32
    %c0_i32_1 = arith.constant 0 : i32
    %c0_i32_2 = arith.constant 0 : i32
    return %c0_i32, %c0_i32_0, %c0_i32_1 : i32, i32, i32
  }
  func.func @transform_4(%arg0: i32, %arg1: i32) -> (i32, i32, i32) {
    %c0_i32 = arith.constant 0 : i32
    %c0_i32_0 = arith.constant 0 : i32
    %c0_i32_1 = arith.constant 0 : i32
    %c0_i32_2 = arith.constant 0 : i32
    return %c0_i32, %c0_i32_0, %c0_i32_1 : i32, i32, i32
  }
  func.func @transform_5(%arg0: i32, %arg1: i32) -> (i32, i32, i32) {
    %c0_i32 = arith.constant 0 : i32
    %c0_i32_0 = arith.constant 0 : i32
    %c0_i32_1 = arith.constant 0 : i32
    %c0_i32_2 = arith.constant 0 : i32
    return %c0_i32, %c0_i32_0, %c0_i32_1 : i32, i32, i32
  }
  func.func @transform_6(%arg0: i32, %arg1: i32) -> (i32, i32) {
    %c0_i32 = arith.constant 0 : i32
    %c0_i32_0 = arith.constant 0 : i32
    %c0_i32_1 = arith.constant 0 : i32
    return %c0_i32, %c0_i32_0 : i32, i32
  }
  func.func @transform_7(%arg0: i32, %arg1: i32) -> (i32, i32) {
    %c0_i32 = arith.constant 0 : i32
    %c0_i32_0 = arith.constant 0 : i32
    %c0_i32_1 = arith.constant 0 : i32
    return %c0_i32, %c0_i32_0 : i32, i32
  }
  func.func @transform_8(%arg0: i32, %arg1: i32) -> (i32, i32) {
    %c0_i32 = arith.constant 0 : i32
    %c0_i32_0 = arith.constant 0 : i32
    %c0_i32_1 = arith.constant 0 : i32
    return %c0_i32, %c0_i32_0 : i32, i32
  }
  func.func @transform_9(%arg0: i32, %arg1: i32) -> (i32, i32, i32) {
    %c0_i32 = arith.constant 0 : i32
    %c0_i32_0 = arith.constant 0 : i32
    %c0_i32_1 = arith.constant 0 : i32
    %c0_i32_2 = arith.constant 0 : i32
    return %c0_i32, %c0_i32_0, %c0_i32_1 : i32, i32, i32
  }
  func.func @transform_10(%arg0: i32, %arg1: i32) -> (i32, i32, i32) {
    %c0_i32 = arith.constant 0 : i32
    %c0_i32_0 = arith.constant 0 : i32
    %c0_i32_1 = arith.constant 0 : i32
    return %arg0, %c0_i32, %c0_i32_0 : i32, i32, i32
  }
  func.func @transform_11(%arg0: i32, %arg1: i32) -> (i32, i32, i32, i32) {
    %c0_i32 = arith.constant 0 : i32
    %c0_i32_0 = arith.constant 0 : i32
    %c0_i32_1 = arith.constant 0 : i32
    return %arg0, %arg1, %c0_i32, %c0_i32_0 : i32, i32, i32, i32
  }
}

module attributes {stable_mosaic.version = 11 : i64} {
  func.func @diff_attn_kernel(%arg0: i32, %arg1: i32, %arg2: memref<1x8x32xf32, #tpu.memory_space<vmem>>, %arg3: memref<1x32xf32, #tpu.memory_space<vmem>>, %arg4: memref<1x32xf32, #tpu.memory_space<vmem>>, %arg5: memref<2x32x32xbf16, #tpu.memory_space<vmem>>, %arg6: memref<2x32x32xbf16, #tpu.memory_space<vmem>>, %arg7: memref<2x32x32xbf16, #tpu.memory_space<vmem>>, %arg8: memref<1x4xf32, #tpu.memory_space<smem>>, %arg9: memref<1x16xf32, #tpu.memory_space<vmem>>, %arg10: memref<1x16xf32, #tpu.memory_space<vmem>>, %arg11: memref<2x32x32xbf16, #tpu.memory_space<vmem>>, %arg12: memref<1x8x32xbf16, #tpu.memory_space<vmem>>, %arg13: memref<1x2x8x8xbf16, #tpu.memory_space<vmem>>, %arg14: memref<8x32xbf16, #tpu.memory_space<vmem>>, %arg15: memref<8x32xf32, #tpu.memory_space<vmem>>) attributes {dimension_semantics = [#tpu.dimension_semantics<parallel>, #tpu.dimension_semantics<arbitrary>], iteration_bounds = array<i64: 2, 2>, scalar_prefetch = 0 : i64, scratch_operands = 2 : i64, tpu.core_type = #tpu.core_type<tc>, window_params = [{transform_indices = @transform_0, window_bounds = array<i64: 1, 8, 32>}, {pipeline_mode = #tpu.pipeline_mode<synchronous>, transform_indices = @transform_1, window_bounds = array<i64: 1, 32>}, {pipeline_mode = #tpu.pipeline_mode<synchronous>, transform_indices = @transform_2, window_bounds = array<i64: 1, 32>}, {pipeline_mode = #tpu.pipeline_mode<synchronous>, transform_indices = @transform_3, window_bounds = array<i64: 2, 32, 32>}, {pipeline_mode = #tpu.pipeline_mode<synchronous>, transform_indices = @transform_4, window_bounds = array<i64: 2, 32, 32>}, {pipeline_mode = #tpu.pipeline_mode<synchronous>, transform_indices = @transform_5, window_bounds = array<i64: 2, 32, 32>}, {transform_indices = @transform_6, window_bounds = array<i64: 1, 4>}, {pipeline_mode = #tpu.pipeline_mode<synchronous>, transform_indices = @transform_7, window_bounds = array<i64: 1, 16>}, {pipeline_mode = #tpu.pipeline_mode<synchronous>, transform_indices = @transform_8, window_bounds = array<i64: 1, 16>}, {pipeline_mode = #tpu.pipeline_mode<synchronous>, transform_indices = @transform_9, window_bounds = array<i64: 2, 32, 32>}, {transform_indices = @transform_10, window_bounds = array<i64: 1, 8, 32>}, {transform_indices = @transform_11, window_bounds = array<i64: 1, 2, 8, 8>}]} {
    %c0_i32 = arith.constant 0 : i32
    %0 = arith.cmpi eq, %arg1, %c0_i32 : i32
    %1 = arith.extui %0 : i1 to i32
    %c0_i32_0 = arith.constant 0 : i32
    %2 = arith.cmpi ne, %1, %c0_i32_0 : i32
    scf.if %2 {
      %c0_66 = arith.constant 0 : index
      %c0_67 = arith.constant 0 : index
      %c0_68 = arith.constant 0 : index
      %187 = vector.load %arg2[%c0_66, %c0_67, %c0_68] : memref<1x8x32xf32, #tpu.memory_space<vmem>>, vector<1x8x32xf32>
      %188 = vector.shape_cast %187 : vector<1x8x32xf32> to vector<8x32xf32>
      %c0_69 = arith.constant 0 : index
      %c0_70 = arith.constant 0 : index
      %189 = vector.load %arg3[%c0_69, %c0_70] : memref<1x32xf32, #tpu.memory_space<vmem>>, vector<1x32xf32>
      %c0_71 = arith.constant 0 : index
      %c0_72 = arith.constant 0 : index
      %190 = vector.load %arg4[%c0_71, %c0_72] : memref<1x32xf32, #tpu.memory_space<vmem>>, vector<1x32xf32>
      %cst_73 = arith.constant dense<0.000000e+00> : vector<8xf32>
      %191 = vector.multi_reduction <add>, %188, %cst_73 [1] : vector<8x32xf32> to vector<8xf32>
      %192 = vector.shape_cast %191 : vector<8xf32> to vector<8x1xf32>
      %cst_74 = arith.constant 3.200000e+01 : f32
      %193 = vector.broadcast %cst_74 : f32 to vector<8x1xf32>
      %194 = arith.divf %192, %193 : vector<8x1xf32>
      %195 = vector.broadcast %194 : vector<8x1xf32> to vector<8x32xf32>
      %196 = arith.subf %188, %195 : vector<8x32xf32>
      %197 = arith.mulf %196, %196 : vector<8x32xf32>
      %cst_75 = arith.constant dense<0.000000e+00> : vector<8xf32>
      %198 = vector.multi_reduction <add>, %197, %cst_75 [1] : vector<8x32xf32> to vector<8xf32>
      %199 = vector.shape_cast %198 : vector<8xf32> to vector<8x1xf32>
      %cst_76 = arith.constant 3.200000e+01 : f32
      %200 = vector.broadcast %cst_76 : f32 to vector<8x1xf32>
      %201 = arith.divf %199, %200 : vector<8x1xf32>
      %202 = vector.broadcast %194 : vector<8x1xf32> to vector<8x32xf32>
      %203 = arith.subf %188, %202 : vector<8x32xf32>
      %cst_77 = arith.constant 9.99999974E-6 : f32
      %204 = vector.broadcast %cst_77 : f32 to vector<8x1xf32>
      %205 = arith.addf %201, %204 : vector<8x1xf32>
      %206 = math.rsqrt %205 : vector<8x1xf32>
      %207 = vector.broadcast %206 : vector<8x1xf32> to vector<8x32xf32>
      %208 = arith.mulf %203, %207 : vector<8x32xf32>
      %209 = vector.broadcast %189 : vector<1x32xf32> to vector<8x32xf32>
      %210 = arith.mulf %208, %209 : vector<8x32xf32>
      %211 = vector.broadcast %190 : vector<1x32xf32> to vector<8x32xf32>
      %212 = arith.addf %210, %211 : vector<8x32xf32>
      %213 = arith.truncf %212 : vector<8x32xf32> to vector<8x32xbf16>
      %c0_78 = arith.constant 0 : index
      %c0_79 = arith.constant 0 : index
      %214 = vector.load %arg14[%c0_78, %c0_79] : memref<8x32xbf16, #tpu.memory_space<vmem>>, vector<8x32xbf16>
      tpu.vector_store %arg14[%c0_78, %c0_79], %213 {strides = array<i32>} : memref<8x32xbf16, #tpu.memory_space<vmem>>, vector<8x32xbf16>,
      %cst_80 = arith.constant 0.000000e+00 : f32
      %215 = vector.broadcast %cst_80 : f32 to vector<8x32xf32>
      %c0_81 = arith.constant 0 : index
      %c0_82 = arith.constant 0 : index
      %216 = vector.load %arg15[%c0_81, %c0_82] : memref<8x32xf32, #tpu.memory_space<vmem>>, vector<8x32xf32>
      tpu.vector_store %arg15[%c0_81, %c0_82], %215 {strides = array<i32>} : memref<8x32xf32, #tpu.memory_space<vmem>>, vector<8x32xf32>,
    } else {
    }
    %c0 = arith.constant 0 : index
    %c0_1 = arith.constant 0 : index
    %3 = vector.load %arg14[%c0, %c0_1] : memref<8x32xbf16, #tpu.memory_space<vmem>>, vector<8x32xbf16>
    %4 = arith.index_cast %arg1 : i32 to index
    %c0_2 = arith.constant 0 : index
    %c0_3 = arith.constant 0 : index
    %5 = vector.load %arg5[%4, %c0_2, %c0_3] : memref<2x32x32xbf16, #tpu.memory_space<vmem>>, vector<1x32x32xbf16>
    %6 = vector.shape_cast %5 : vector<1x32x32xbf16> to vector<32x32xbf16>
    %cst = arith.constant dense<0.000000e+00> : vector<8x32xf32>
    %7 = tpu.matmul %3, %6, %cst {dimension_numbers = #tpu.dot_dimension_numbers<[1], [0], [0], [1], [0, 0, 1, 1], [], []>} : vector<8x32xbf16>, vector<32x32xbf16>, vector<8x32xf32> -> vector<8x32xf32>
    %8 = arith.index_cast %arg1 : i32 to index
    %c0_4 = arith.constant 0 : index
    %c0_5 = arith.constant 0 : index
    %9 = vector.load %arg6[%8, %c0_4, %c0_5] : memref<2x32x32xbf16, #tpu.memory_space<vmem>>, vector<1x32x32xbf16>
    %10 = vector.shape_cast %9 : vector<1x32x32xbf16> to vector<32x32xbf16>
    %cst_6 = arith.constant dense<0.000000e+00> : vector<8x32xf32>
    %11 = tpu.matmul %3, %10, %cst_6 {dimension_numbers = #tpu.dot_dimension_numbers<[1], [0], [0], [1], [0, 0, 1, 1], [], []>} : vector<8x32xbf16>, vector<32x32xbf16>, vector<8x32xf32> -> vector<8x32xf32>
    %12 = arith.index_cast %arg1 : i32 to index
    %c0_7 = arith.constant 0 : index
    %c0_8 = arith.constant 0 : index
    %13 = vector.load %arg7[%12, %c0_7, %c0_8] : memref<2x32x32xbf16, #tpu.memory_space<vmem>>, vector<1x32x32xbf16>
    %14 = vector.shape_cast %13 : vector<1x32x32xbf16> to vector<32x32xbf16>
    %cst_9 = arith.constant dense<0.000000e+00> : vector<8x32xf32>
    %15 = tpu.matmul %3, %14, %cst_9 {dimension_numbers = #tpu.dot_dimension_numbers<[1], [0], [0], [1], [0, 0, 1, 1], [], []>} : vector<8x32xbf16>, vector<32x32xbf16>, vector<8x32xf32> -> vector<8x32xf32>
    %16 = vector.extract_strided_slice %7 {offsets = [0, 0], sizes = [8, 8], strides = [1, 1]} : vector<8x32xf32> to vector<8x8xf32>
    %17 = arith.truncf %16 : vector<8x8xf32> to vector<8x8xbf16>
    %18 = vector.extract_strided_slice %7 {offsets = [0, 8], sizes = [8, 8], strides = [1, 1]} : vector<8x32xf32> to vector<8x8xf32>
    %19 = arith.truncf %18 : vector<8x8xf32> to vector<8x8xbf16>
    %20 = vector.extract_strided_slice %11 {offsets = [0, 0], sizes = [8, 8], strides = [1, 1]} : vector<8x32xf32> to vector<8x8xf32>
    %21 = arith.truncf %20 : vector<8x8xf32> to vector<8x8xbf16>
    %22 = vector.extract_strided_slice %11 {offsets = [0, 8], sizes = [8, 8], strides = [1, 1]} : vector<8x32xf32> to vector<8x8xf32>
    %23 = arith.truncf %22 : vector<8x8xf32> to vector<8x8xbf16>
    %24 = vector.extract_strided_slice %15 {offsets = [0, 0], sizes = [8, 16], strides = [1, 1]} : vector<8x32xf32> to vector<8x16xf32>
    %25 = arith.truncf %24 : vector<8x16xf32> to vector<8x16xbf16>
    %cst_10 = arith.constant dense<0.000000e+00> : vector<8x8xf32>
    %26 = tpu.matmul %17, %21, %cst_10 {dimension_numbers = #tpu.dot_dimension_numbers<[1], [1], [0], [0], [0, 0, 1, 0], [], []>} : vector<8x8xbf16>, vector<8x8xbf16>, vector<8x8xf32> -> vector<8x8xf32>
    %cst_11 = arith.constant 0.353553385 : f32
    %27 = vector.broadcast %cst_11 : f32 to vector<8x8xf32>
    %28 = arith.mulf %26, %27 : vector<8x8xf32>
    %cst_12 = arith.constant dense<0.000000e+00> : vector<8x8xf32>
    %29 = tpu.matmul %19, %23, %cst_12 {dimension_numbers = #tpu.dot_dimension_numbers<[1], [1], [0], [0], [0, 0, 1, 0], [], []>} : vector<8x8xbf16>, vector<8x8xbf16>, vector<8x8xf32> -> vector<8x8xf32>
    %cst_13 = arith.constant 0.353553385 : f32
    %30 = vector.broadcast %cst_13 : f32 to vector<8x8xf32>
    %31 = arith.mulf %29, %30 : vector<8x8xf32>
    %cst_14 = arith.constant dense<0xFF800000> : vector<8xf32>
    %32 = vector.multi_reduction <maximumf>, %28, %cst_14 [1] : vector<8x8xf32> to vector<8xf32>
    %33 = vector.shape_cast %32 : vector<8xf32> to vector<8x1xf32>
    %34 = vector.broadcast %33 : vector<8x1xf32> to vector<8x8xf32>
    %35 = arith.subf %28, %34 : vector<8x8xf32>
    %36 = math.exp %35 : vector<8x8xf32>
    %cst_15 = arith.constant dense<0.000000e+00> : vector<8xf32>
    %37 = vector.multi_reduction <add>, %36, %cst_15 [1] : vector<8x8xf32> to vector<8xf32>
    %38 = vector.shape_cast %37 : vector<8xf32> to vector<8x1xf32>
    %39 = tpu.reciprocal %38 {approx = true} : vector<8x1xf32> -> vector<8x1xf32>
    %40 = vector.broadcast %39 : vector<8x1xf32> to vector<8x8xf32>
    %41 = arith.mulf %36, %40 : vector<8x8xf32>
    %cst_16 = arith.constant dense<0xFF800000> : vector<8xf32>
    %42 = vector.multi_reduction <maximumf>, %31, %cst_16 [1] : vector<8x8xf32> to vector<8xf32>
    %43 = vector.shape_cast %42 : vector<8xf32> to vector<8x1xf32>
    %44 = vector.broadcast %43 : vector<8x1xf32> to vector<8x8xf32>
    %45 = arith.subf %31, %44 : vector<8x8xf32>
    %46 = math.exp %45 : vector<8x8xf32>
    %cst_17 = arith.constant dense<0.000000e+00> : vector<8xf32>
    %47 = vector.multi_reduction <add>, %46, %cst_17 [1] : vector<8x8xf32> to vector<8xf32>
    %48 = vector.shape_cast %47 : vector<8xf32> to vector<8x1xf32>
    %49 = tpu.reciprocal %48 {approx = true} : vector<8x1xf32> -> vector<8x1xf32>
    %50 = vector.broadcast %49 : vector<8x1xf32> to vector<8x8xf32>
    %51 = arith.mulf %46, %50 : vector<8x8xf32>
    %c2_i32 = arith.constant 2 : i32
    %52 = arith.muli %arg1, %c2_i32 : i32
    %c0_i32_18 = arith.constant 0 : i32
    %53 = arith.addi %52, %c0_i32_18 : i32
    %c0_19 = arith.constant 0 : index
    %54 = arith.index_cast %53 : i32 to index
    %55 = memref.load %arg8[%c0_19, %54] : memref<1x4xf32, #tpu.memory_space<smem>>
    %56 = vector.broadcast %55 : f32 to vector<8x8xf32>
    %57 = arith.mulf %56, %51 : vector<8x8xf32>
    %58 = arith.subf %41, %57 : vector<8x8xf32>
    %59 = arith.truncf %58 : vector<8x8xf32> to vector<8x8xbf16>
    %c0_20 = arith.constant 0 : index
    %c0_21 = arith.constant 0 : index
    %c0_22 = arith.constant 0 : index
    %c0_23 = arith.constant 0 : index
    %60 = vector.load %arg13[%c0_20, %c0_21, %c0_22, %c0_23] : memref<1x2x8x8xbf16, #tpu.memory_space<vmem>>, vector<1x1x8x8xbf16>
    %61 = vector.shape_cast %60 : vector<1x1x8x8xbf16> to vector<8x8xbf16>
    %62 = vector.shape_cast %59 : vector<8x8xbf16> to vector<1x1x8x8xbf16>
    tpu.vector_store %arg13[%c0_20, %c0_21, %c0_22, %c0_23], %62 {strides = array<i32>} : memref<1x2x8x8xbf16, #tpu.memory_space<vmem>>, vector<1x1x8x8xbf16>,
    %63 = arith.truncf %58 : vector<8x8xf32> to vector<8x8xbf16>
    %cst_24 = arith.constant dense<0.000000e+00> : vector<8x16xf32>
    %64 = tpu.matmul %63, %25, %cst_24 {dimension_numbers = #tpu.dot_dimension_numbers<[1], [0], [0], [1], [0, 0, 1, 1], [], []>} : vector<8x8xbf16>, vector<8x16xbf16>, vector<8x16xf32> -> vector<8x16xf32>
    %65 = vector.shape_cast %64 : vector<8x16xf32> to vector<1x8x16xf32>
    %cst_25 = arith.constant dense<0.000000e+00> : vector<1xf32>
    %66 = vector.multi_reduction <add>, %65, %cst_25 [1, 2] : vector<1x8x16xf32> to vector<1xf32>
    %67 = vector.shape_cast %66 : vector<1xf32> to vector<1x1x1xf32>
    %68 = vector.extract %67[0, 0, 0] : f32 from vector<1x1x1xf32>
    %69 = vector.broadcast %68 : f32 to vector<1x1xf32>
    %cst_26 = arith.constant 1.280000e+02 : f32
    %70 = vector.broadcast %cst_26 : f32 to vector<1x1xf32>
    %71 = arith.divf %69, %70 : vector<1x1xf32>
    %72 = vector.broadcast %71 : vector<1x1xf32> to vector<8x16xf32>
    %73 = arith.subf %64, %72 : vector<8x16xf32>
    %74 = arith.mulf %73, %73 : vector<8x16xf32>
    %75 = vector.shape_cast %74 : vector<8x16xf32> to vector<1x8x16xf32>
    %cst_27 = arith.constant dense<0.000000e+00> : vector<1xf32>
    %76 = vector.multi_reduction <add>, %75, %cst_27 [1, 2] : vector<1x8x16xf32> to vector<1xf32>
    %77 = vector.shape_cast %76 : vector<1xf32> to vector<1x1x1xf32>
    %78 = vector.extract %77[0, 0, 0] : f32 from vector<1x1x1xf32>
    %79 = vector.broadcast %78 : f32 to vector<1x1xf32>
    %cst_28 = arith.constant 1.280000e+02 : f32
    %80 = vector.broadcast %cst_28 : f32 to vector<1x1xf32>
    %81 = arith.divf %79, %80 : vector<1x1xf32>
    %82 = vector.broadcast %71 : vector<1x1xf32> to vector<8x16xf32>
    %83 = arith.subf %64, %82 : vector<8x16xf32>
    %cst_29 = arith.constant 9.99999974E-6 : f32
    %84 = vector.broadcast %cst_29 : f32 to vector<1x1xf32>
    %85 = arith.addf %81, %84 : vector<1x1xf32>
    %86 = math.rsqrt %85 : vector<1x1xf32>
    %87 = vector.broadcast %86 : vector<1x1xf32> to vector<8x16xf32>
    %88 = arith.mulf %83, %87 : vector<8x16xf32>
    %c0_30 = arith.constant 0 : index
    %c0_31 = arith.constant 0 : index
    %89 = vector.load %arg9[%c0_30, %c0_31] : memref<1x16xf32, #tpu.memory_space<vmem>>, vector<1x16xf32>
    %90 = vector.broadcast %89 : vector<1x16xf32> to vector<8x16xf32>
    %91 = arith.mulf %88, %90 : vector<8x16xf32>
    %c0_32 = arith.constant 0 : index
    %c0_33 = arith.constant 0 : index
    %92 = vector.load %arg10[%c0_32, %c0_33] : memref<1x16xf32, #tpu.memory_space<vmem>>, vector<1x16xf32>
    %93 = vector.broadcast %92 : vector<1x16xf32> to vector<8x16xf32>
    %94 = arith.addf %91, %93 : vector<8x16xf32>
    %95 = arith.truncf %94 : vector<8x16xf32> to vector<8x16xbf16>
    %96 = vector.extract_strided_slice %7 {offsets = [0, 16], sizes = [8, 8], strides = [1, 1]} : vector<8x32xf32> to vector<8x8xf32>
    %97 = arith.truncf %96 : vector<8x8xf32> to vector<8x8xbf16>
    %98 = vector.extract_strided_slice %7 {offsets = [0, 24], sizes = [8, 8], strides = [1, 1]} : vector<8x32xf32> to vector<8x8xf32>
    %99 = arith.truncf %98 : vector<8x8xf32> to vector<8x8xbf16>
    %100 = vector.extract_strided_slice %11 {offsets = [0, 16], sizes = [8, 8], strides = [1, 1]} : vector<8x32xf32> to vector<8x8xf32>
    %101 = arith.truncf %100 : vector<8x8xf32> to vector<8x8xbf16>
    %102 = vector.extract_strided_slice %11 {offsets = [0, 24], sizes = [8, 8], strides = [1, 1]} : vector<8x32xf32> to vector<8x8xf32>
    %103 = arith.truncf %102 : vector<8x8xf32> to vector<8x8xbf16>
    %104 = vector.extract_strided_slice %15 {offsets = [0, 16], sizes = [8, 16], strides = [1, 1]} : vector<8x32xf32> to vector<8x16xf32>
    %105 = arith.truncf %104 : vector<8x16xf32> to vector<8x16xbf16>
    %cst_34 = arith.constant dense<0.000000e+00> : vector<8x8xf32>
    %106 = tpu.matmul %97, %101, %cst_34 {dimension_numbers = #tpu.dot_dimension_numbers<[1], [1], [0], [0], [0, 0, 1, 0], [], []>} : vector<8x8xbf16>, vector<8x8xbf16>, vector<8x8xf32> -> vector<8x8xf32>
    %cst_35 = arith.constant 0.353553385 : f32
    %107 = vector.broadcast %cst_35 : f32 to vector<8x8xf32>
    %108 = arith.mulf %106, %107 : vector<8x8xf32>
    %cst_36 = arith.constant dense<0.000000e+00> : vector<8x8xf32>
    %109 = tpu.matmul %99, %103, %cst_36 {dimension_numbers = #tpu.dot_dimension_numbers<[1], [1], [0], [0], [0, 0, 1, 0], [], []>} : vector<8x8xbf16>, vector<8x8xbf16>, vector<8x8xf32> -> vector<8x8xf32>
    %cst_37 = arith.constant 0.353553385 : f32
    %110 = vector.broadcast %cst_37 : f32 to vector<8x8xf32>
    %111 = arith.mulf %109, %110 : vector<8x8xf32>
    %cst_38 = arith.constant dense<0xFF800000> : vector<8xf32>
    %112 = vector.multi_reduction <maximumf>, %108, %cst_38 [1] : vector<8x8xf32> to vector<8xf32>
    %113 = vector.shape_cast %112 : vector<8xf32> to vector<8x1xf32>
    %114 = vector.broadcast %113 : vector<8x1xf32> to vector<8x8xf32>
    %115 = arith.subf %108, %114 : vector<8x8xf32>
    %116 = math.exp %115 : vector<8x8xf32>
    %cst_39 = arith.constant dense<0.000000e+00> : vector<8xf32>
    %117 = vector.multi_reduction <add>, %116, %cst_39 [1] : vector<8x8xf32> to vector<8xf32>
    %118 = vector.shape_cast %117 : vector<8xf32> to vector<8x1xf32>
    %119 = tpu.reciprocal %118 {approx = true} : vector<8x1xf32> -> vector<8x1xf32>
    %120 = vector.broadcast %119 : vector<8x1xf32> to vector<8x8xf32>
    %121 = arith.mulf %116, %120 : vector<8x8xf32>
    %cst_40 = arith.constant dense<0xFF800000> : vector<8xf32>
    %122 = vector.multi_reduction <maximumf>, %111, %cst_40 [1] : vector<8x8xf32> to vector<8xf32>
    %123 = vector.shape_cast %122 : vector<8xf32> to vector<8x1xf32>
    %124 = vector.broadcast %123 : vector<8x1xf32> to vector<8x8xf32>
    %125 = arith.subf %111, %124 : vector<8x8xf32>
    %126 = math.exp %125 : vector<8x8xf32>
    %cst_41 = arith.constant dense<0.000000e+00> : vector<8xf32>
    %127 = vector.multi_reduction <add>, %126, %cst_41 [1] : vector<8x8xf32> to vector<8xf32>
    %128 = vector.shape_cast %127 : vector<8xf32> to vector<8x1xf32>
    %129 = tpu.reciprocal %128 {approx = true} : vector<8x1xf32> -> vector<8x1xf32>
    %130 = vector.broadcast %129 : vector<8x1xf32> to vector<8x8xf32>
    %131 = arith.mulf %126, %130 : vector<8x8xf32>
    %c2_i32_42 = arith.constant 2 : i32
    %132 = arith.muli %arg1, %c2_i32_42 : i32
    %c1_i32 = arith.constant 1 : i32
    %133 = arith.addi %132, %c1_i32 : i32
    %c0_43 = arith.constant 0 : index
    %134 = arith.index_cast %133 : i32 to index
    %135 = memref.load %arg8[%c0_43, %134] : memref<1x4xf32, #tpu.memory_space<smem>>
    %136 = vector.broadcast %135 : f32 to vector<8x8xf32>
    %137 = arith.mulf %136, %131 : vector<8x8xf32>
    %138 = arith.subf %121, %137 : vector<8x8xf32>
    %139 = arith.truncf %138 : vector<8x8xf32> to vector<8x8xbf16>
    %c0_44 = arith.constant 0 : index
    %c1 = arith.constant 1 : index
    %c0_45 = arith.constant 0 : index
    %c0_46 = arith.constant 0 : index
    %140 = vector.load %arg13[%c0_44, %c1, %c0_45, %c0_46] : memref<1x2x8x8xbf16, #tpu.memory_space<vmem>>, vector<1x1x8x8xbf16>
    %141 = vector.shape_cast %140 : vector<1x1x8x8xbf16> to vector<8x8xbf16>
    %142 = vector.shape_cast %139 : vector<8x8xbf16> to vector<1x1x8x8xbf16>
    tpu.vector_store %arg13[%c0_44, %c1, %c0_45, %c0_46], %142 {strides = array<i32>} : memref<1x2x8x8xbf16, #tpu.memory_space<vmem>>, vector<1x1x8x8xbf16>,
    %143 = arith.truncf %138 : vector<8x8xf32> to vector<8x8xbf16>
    %cst_47 = arith.constant dense<0.000000e+00> : vector<8x16xf32>
    %144 = tpu.matmul %143, %105, %cst_47 {dimension_numbers = #tpu.dot_dimension_numbers<[1], [0], [0], [1], [0, 0, 1, 1], [], []>} : vector<8x8xbf16>, vector<8x16xbf16>, vector<8x16xf32> -> vector<8x16xf32>
    %145 = vector.shape_cast %144 : vector<8x16xf32> to vector<1x8x16xf32>
    %cst_48 = arith.constant dense<0.000000e+00> : vector<1xf32>
    %146 = vector.multi_reduction <add>, %145, %cst_48 [1, 2] : vector<1x8x16xf32> to vector<1xf32>
    %147 = vector.shape_cast %146 : vector<1xf32> to vector<1x1x1xf32>
    %148 = vector.extract %147[0, 0, 0] : f32 from vector<1x1x1xf32>
    %149 = vector.broadcast %148 : f32 to vector<1x1xf32>
    %cst_49 = arith.constant 1.280000e+02 : f32
    %150 = vector.broadcast %cst_49 : f32 to vector<1x1xf32>
    %151 = arith.divf %149, %150 : vector<1x1xf32>
    %152 = vector.broadcast %151 : vector<1x1xf32> to vector<8x16xf32>
    %153 = arith.subf %144, %152 : vector<8x16xf32>
    %154 = arith.mulf %153, %153 : vector<8x16xf32>
    %155 = vector.shape_cast %154 : vector<8x16xf32> to vector<1x8x16xf32>
    %cst_50 = arith.constant dense<0.000000e+00> : vector<1xf32>
    %156 = vector.multi_reduction <add>, %155, %cst_50 [1, 2] : vector<1x8x16xf32> to vector<1xf32>
    %157 = vector.shape_cast %156 : vector<1xf32> to vector<1x1x1xf32>
    %158 = vector.extract %157[0, 0, 0] : f32 from vector<1x1x1xf32>
    %159 = vector.broadcast %158 : f32 to vector<1x1xf32>
    %cst_51 = arith.constant 1.280000e+02 : f32
    %160 = vector.broadcast %cst_51 : f32 to vector<1x1xf32>
    %161 = arith.divf %159, %160 : vector<1x1xf32>
    %162 = vector.broadcast %151 : vector<1x1xf32> to vector<8x16xf32>
    %163 = arith.subf %144, %162 : vector<8x16xf32>
    %cst_52 = arith.constant 9.99999974E-6 : f32
    %164 = vector.broadcast %cst_52 : f32 to vector<1x1xf32>
    %165 = arith.addf %161, %164 : vector<1x1xf32>
    %166 = math.rsqrt %165 : vector<1x1xf32>
    %167 = vector.broadcast %166 : vector<1x1xf32> to vector<8x16xf32>
    %168 = arith.mulf %163, %167 : vector<8x16xf32>
    %c0_53 = arith.constant 0 : index
    %c0_54 = arith.constant 0 : index
    %169 = vector.load %arg9[%c0_53, %c0_54] : memref<1x16xf32, #tpu.memory_space<vmem>>, vector<1x16xf32>
    %170 = vector.broadcast %169 : vector<1x16xf32> to vector<8x16xf32>
    %171 = arith.mulf %168, %170 : vector<8x16xf32>
    %c0_55 = arith.constant 0 : index
    %c0_56 = arith.constant 0 : index
    %172 = vector.load %arg10[%c0_55, %c0_56] : memref<1x16xf32, #tpu.memory_space<vmem>>, vector<1x16xf32>
    %173 = vector.broadcast %172 : vector<1x16xf32> to vector<8x16xf32>
    %174 = arith.addf %171, %173 : vector<8x16xf32>
    %175 = arith.truncf %174 : vector<8x16xf32> to vector<8x16xbf16>
    %176 = tpu.concatenate %95, %175 in 1 : vector<8x16xbf16>, vector<8x16xbf16> -> vector<8x32xbf16>
    %c0_57 = arith.constant 0 : index
    %c0_58 = arith.constant 0 : index
    %177 = vector.load %arg15[%c0_57, %c0_58] : memref<8x32xf32, #tpu.memory_space<vmem>>, vector<8x32xf32>
    %178 = arith.index_cast %arg1 : i32 to index
    %c0_59 = arith.constant 0 : index
    %c0_60 = arith.constant 0 : index
    %179 = vector.load %arg11[%178, %c0_59, %c0_60] : memref<2x32x32xbf16, #tpu.memory_space<vmem>>, vector<1x32x32xbf16>
    %180 = vector.shape_cast %179 : vector<1x32x32xbf16> to vector<32x32xbf16>
    %cst_61 = arith.constant dense<0.000000e+00> : vector<8x32xf32>
    %181 = tpu.matmul %176, %180, %cst_61 {dimension_numbers = #tpu.dot_dimension_numbers<[1], [0], [0], [1], [0, 0, 1, 1], [], []>} : vector<8x32xbf16>, vector<32x32xbf16>, vector<8x32xf32> -> vector<8x32xf32>
    %182 = arith.addf %177, %181 : vector<8x32xf32>
    %c0_62 = arith.constant 0 : index
    %c0_63 = arith.constant 0 : index
    %183 = vector.load %arg15[%c0_62, %c0_63] : memref<8x32xf32, #tpu.memory_space<vmem>>, vector<8x32xf32>
    tpu.vector_store %arg15[%c0_62, %c0_63], %182 {strides = array<i32>} : memref<8x32xf32, #tpu.memory_space<vmem>>, vector<8x32xf32>,
    %c1_i32_64 = arith.constant 1 : i32
    %184 = arith.cmpi eq, %arg1, %c1_i32_64 : i32
    %185 = arith.extui %184 : i1 to i32
    %c0_i32_65 = arith.constant 0 : i32
    %186 = arith.cmpi ne, %185, %c0_i32_65 : i32
    scf.if %186 {
      %c0_66 = arith.constant 0 : index
      %c0_67 = arith.constant 0 : index
      %187 = vector.load %arg15[%c0_66, %c0_67] : memref<8x32xf32, #tpu.memory_space<vmem>>, vector<8x32xf32>
      %188 = arith.truncf %187 : vector<8x32xf32> to vector<8x32xbf16>
      %c0_68 = arith.constant 0 : index
      %c0_69 = arith.constant 0 : index
      %c0_70 = arith.constant 0 : index
      %189 = vector.load %arg12[%c0_68, %c0_69, %c0_70] : memref<1x8x32xbf16, #tpu.memory_space<vmem>>, vector<1x8x32xbf16>
      %190 = vector.shape_cast %189 : vector<1x8x32xbf16> to vector<8x32xbf16>
      %191 = vector.shape_cast %188 : vector<8x32xbf16> to vector<1x8x32xbf16>
      tpu.vector_store %arg12[%c0_68, %c0_69, %c0_70], %191 {strides = array<i32>} : memref<1x8x32xbf16, #tpu.memory_space<vmem>>, vector<1x8x32xbf16>,
    } else {
    }
    return
  }
  func.func @transform_0(%arg0: i32, %arg1: i32) -> (i32, i32, i32) {
    %c0_i32 = arith.constant 0 : i32
    %c0_i32_0 = arith.constant 0 : i32
    %c0_i32_1 = arith.constant 0 : i32
    return %arg0, %c0_i32, %c0_i32_0 : i32, i32, i32
  }
  func.func @transform_1(%arg0: i32, %arg1: i32) -> (i32, i32) {
    %c0_i32 = arith.constant 0 : i32
    %c0_i32_0 = arith.constant 0 : i32
    %c0_i32_1 = arith.constant 0 : i32
    return %c0_i32, %c0_i32_0 : i32, i32
  }
  func.func @transform_2(%arg0: i32, %arg1: i32) -> (i32, i32) {
    %c0_i32 = arith.constant 0 : i32
    %c0_i32_0 = arith.constant 0 : i32
    %c0_i32_1 = arith.constant 0 : i32
    return %c0_i32, %c0_i32_0 : i32, i32
  }
  func.func @transform_3(%arg0: i32, %arg1: i32) -> (i32, i32, i32) {
    %c0_i32 = arith.constant 0 : i32
    %c0_i32_0 = arith.constant 0 : i32
    %c0_i32_1 = arith.constant 0 : i32
    %c0_i32_2 = arith.constant 0 : i32
    return %c0_i32, %c0_i32_0, %c0_i32_1 : i32, i32, i32
  }
  func.func @transform_4(%arg0: i32, %arg1: i32) -> (i32, i32, i32) {
    %c0_i32 = arith.constant 0 : i32
    %c0_i32_0 = arith.constant 0 : i32
    %c0_i32_1 = arith.constant 0 : i32
    %c0_i32_2 = arith.constant 0 : i32
    return %c0_i32, %c0_i32_0, %c0_i32_1 : i32, i32, i32
  }
  func.func @transform_5(%arg0: i32, %arg1: i32) -> (i32, i32, i32) {
    %c0_i32 = arith.constant 0 : i32
    %c0_i32_0 = arith.constant 0 : i32
    %c0_i32_1 = arith.constant 0 : i32
    %c0_i32_2 = arith.constant 0 : i32
    return %c0_i32, %c0_i32_0, %c0_i32_1 : i32, i32, i32
  }
  func.func @transform_6(%arg0: i32, %arg1: i32) -> (i32, i32) {
    %c0_i32 = arith.constant 0 : i32
    %c0_i32_0 = arith.constant 0 : i32
    %c0_i32_1 = arith.constant 0 : i32
    return %c0_i32, %c0_i32_0 : i32, i32
  }
  func.func @transform_7(%arg0: i32, %arg1: i32) -> (i32, i32) {
    %c0_i32 = arith.constant 0 : i32
    %c0_i32_0 = arith.constant 0 : i32
    %c0_i32_1 = arith.constant 0 : i32
    return %c0_i32, %c0_i32_0 : i32, i32
  }
  func.func @transform_8(%arg0: i32, %arg1: i32) -> (i32, i32) {
    %c0_i32 = arith.constant 0 : i32
    %c0_i32_0 = arith.constant 0 : i32
    %c0_i32_1 = arith.constant 0 : i32
    return %c0_i32, %c0_i32_0 : i32, i32
  }
  func.func @transform_9(%arg0: i32, %arg1: i32) -> (i32, i32, i32) {
    %c0_i32 = arith.constant 0 : i32
    %c0_i32_0 = arith.constant 0 : i32
    %c0_i32_1 = arith.constant 0 : i32
    %c0_i32_2 = arith.constant 0 : i32
    return %c0_i32, %c0_i32_0, %c0_i32_1 : i32, i32, i32
  }
  func.func @transform_10(%arg0: i32, %arg1: i32) -> (i32, i32, i32) {
    %c0_i32 = arith.constant 0 : i32
    %c0_i32_0 = arith.constant 0 : i32
    %c0_i32_1 = arith.constant 0 : i32
    return %arg0, %c0_i32, %c0_i32_0 : i32, i32, i32
  }
  func.func @transform_11(%arg0: i32, %arg1: i32) -> (i32, i32, i32, i32) {
    %c0_i32 = arith.constant 0 : i32
    %c0_i32_0 = arith.constant 0 : i32
    %c0_i32_1 = arith.constant 0 : i32
    return %arg0, %arg1, %c0_i32, %c0_i32_0 : i32, i32, i32, i32
  }
}

</mosaic_0001>

<llo_original>
// kernel: tpu_custom_call.1
$region0: #{tpu_custom_call.1}
  #allocation0 [shape = 'u32[]', space=smem, size = 0x4, offset = 0x4, fixed_abs, tag = 'smem constant byte address 0x4 - core index']
  #allocation1 [shape = 'u32[72,128]{1,0:T(1,128)}', space=vmem, size = 0x9000, scoped, tag = 'internal scratch']
  #allocation2 [shape = 'bf16[8,32]{1,0:T(8,128)(2,1)}', space=vmem, size = 0x800, scoped, tag = 'scratch operand']
  #allocation3 [shape = 'f32[8,32]{1,0:T(8,128)}', space=vmem, size = 0x1000, scoped, tag = 'scratch operand']
  %s0 = inlined_call_operand.hbm [shape: f32[2,8,32], index: 0, kind: input, shape index: {}]
  %s1 = inlined_call_operand.hbm [shape: f32[1,32], index: 1, kind: input, shape index: {}]
  %s2 = inlined_call_operand.vmem [shape: f32[1,32], index: 2, kind: input, shape index: {}]
  %s3 = inlined_call_operand.hbm [shape: bf16[2,32,32], index: 3, kind: input, shape index: {}]
  %s4 = inlined_call_operand.hbm [shape: bf16[2,32,32], index: 4, kind: input, shape index: {}]
  %s5 = inlined_call_operand.hbm [shape: bf16[2,32,32], index: 5, kind: input, shape index: {}]
  %s6 = inlined_call_operand.vmem [shape: f32[1,4], index: 6, kind: input, shape index: {}]
  %s7 = inlined_call_operand.vmem [shape: f32[1,16], index: 7, kind: input, shape index: {}]
  %s8 = inlined_call_operand.vmem [shape: f32[1,16], index: 8, kind: input, shape index: {}]
  %s9 = inlined_call_operand.hbm [shape: bf16[2,32,32], index: 9, kind: input, shape index: {}]
  %s10 = inlined_call_operand.hbm [shape: bf16[2,8,32], index: 10, kind: output, shape index: {0}]
  %s11 = inlined_call_operand.hbm [shape: bf16[2,4,8,8], index: 11, kind: output, shape index: {1}]
  %12 = xla_tuple %s10, %s11
  %s13 = sld [smem:[#allocation0]]
  $region117: #{tpu_custom_call.1} parent=0
    _
  %s15 = ssub.s32 1, %s13
  %s16 = scalar_select 0, %s15, %s13
  $region1: #{tpu_custom_call.1} parent=0
    #allocation4 [shape = 'u8[8192]{0}', space=vmem, size = 0x2000, scoped, tag = 'input window, operand 0']
    #allocation5 [shape = 's32[2]{0}', space=sflag, size = 0x8, scoped, tag = 'scoped memory for tpu_custom_call.1']
    #allocation6 [shape = 's32[2]{0}', space=sflag, size = 0x8, scoped, tag = 'scoped memory for tpu_custom_call.1']
    #allocation7 [shape = 's32[2]{0}', space=sflag, size = 0x8, scoped, tag = 'scoped memory for tpu_custom_call.1']
    #allocation8 [shape = 'u8[512]{0}', space=vmem, size = 0x400, scoped, tag = 'input window, operand 1, single buffered']
    #allocation9 [shape = 's32[1]{0}', space=sflag, size = 0x4, scoped, tag = 'scoped memory for tpu_custom_call.1']
    #allocation10 [shape = 'u8[16384]{0}', space=vmem, size = 0x4000, scoped, tag = 'input window, operand 3, single buffered']
    #allocation11 [shape = 'u8[16384]{0}', space=vmem, size = 0x4000, scoped, tag = 'input window, operand 4, single buffered']
    #allocation12 [shape = 's32[1]{0}', space=sflag, size = 0x4, scoped, tag = 'scoped memory for tpu_custom_call.1']
    #allocation13 [shape = 'u8[16384]{0}', space=vmem, size = 0x4000, scoped, tag = 'input window, operand 5, single buffered']
    #allocation14 [shape = 'u8[512]{0}', space=smem, size = 0x200, scoped, tag = 'input window, operand 6, single buffered']
    #allocation15 [shape = 'u8[16384]{0}', space=vmem, size = 0x4000, scoped, tag = 'input window, operand 9, single buffered']
    #allocation16 [shape = 's32[1]{0}', space=sflag, size = 0x4, scoped, tag = 'scoped memory for tpu_custom_call.1']
    #allocation17 [shape = 'u8[4096]{0}', space=vmem, size = 0x1000, scoped, tag = 'output window, operand 0']
    #allocation18 [shape = 'u8[8192]{0}', space=vmem, size = 0x2000, scoped, tag = 'output window, operand 1']
    #allocation19 [shape = 's32[2]{0}', space=sflag, size = 0x8, scoped, tag = 'scoped memory for tpu_custom_call.1']
    %17 = vsyncpa [#allocation5], 0
    %s18 = scalar_lea.sflag [#allocation5], 1
    %19 = vsyncpa %s18, 0
    %20 = vsyncpa [#allocation9], 0
    %21 = vsyncpa [#allocation12], 0
    %22 = vsyncpa [#allocation7], 0
    %23 = vsyncpa [#allocation16], 0
    %24 = vsyncpa [#allocation6], 0
    %s25 = scalar_lea.sflag [#allocation6], 1
    %26 = vsyncpa %s25, 0
    %27 = vsyncpa [#allocation19], 0
    %s28 = scalar_lea.sflag [#allocation19], 1
    %29 = vsyncpa %s28, 0
    loop: start=0, step=1, limit=6
    $region2: #{tpu_custom_call.1} parent=1 // loop_pre_header
      _
    $region3: #{tpu_custom_call.1} parent=1 // loop_header
      %s31 = sphi 0, %s35
      %p32 = scmp.ge.s32.totalorder %s31, 6
      %s38 = sphi 0, %s50
      %s39 = sphi 0, %s46
      %s40 = sphi 0, %s38
      %s41 = sphi 0, %s39
      %s42 = sphi 0, %s40
      %s43 = sphi 0, %s41
      %s53 = sphi 0, %s55
      %s56 = sphi 0, %s53
      %s57 = sphi 0, %s56
      %s73 = sphi 0, %s57
      %s77 = sphi 0, %s77
      %s79 = sphi 0, %s77
      %s80 = sphi 0, %s79
      %s94 = sphi 0, %s80
      %s98 = sphi 0, %s98
      %s100 = sphi 0, %s98
      %s101 = sphi 0, %s100
      %s115 = sphi 0, %s101
      %s119 = sphi 0, %s119
      %s121 = sphi 0, %s119
      %s122 = sphi 0, %s121
      %s136 = sphi 0, %s122
      %s140 = sphi 0, %s140
      %s142 = sphi 0, %s140
      %s143 = sphi 0, %s142
      %s157 = sphi 0, %s143
      %s161 = sphi 0, %s161
      %s163 = sphi 0, %s161
      %s164 = sphi 0, %s163
      %s178 = sphi 0, %s164
      %s182 = sphi 0, %s182
      %s184 = sphi 0, %s182
      %s185 = sphi 0, %s184
      %s199 = sphi 0, %s185
      %s203 = sphi 0, %s203
      %s205 = sphi 0, %s203
      %s206 = sphi 0, %s205
      %s220 = sphi 0, %s206
      %s224 = sphi 0, %s224
      %s226 = sphi 0, %s224
      %s227 = sphi 0, %s226
      %s241 = sphi 0, %s227
      %s245 = sphi 0, %s245
      %s247 = sphi 0, %s245
      %s248 = sphi 0, %s247
      %s262 = sphi 0, %s248
      %s268 = sphi 0, %s270
      %s271 = sphi 0, %s268
      %s272 = sphi 0, %s271
      %s288 = sphi 0, %s272
      %s296 = sphi 0, %s298
      %s299 = sphi 0, %s296
      %s300 = sphi 0, %s299
      %s316 = sphi 0, %s300
    $region4: #{tpu_custom_call.1} parent=1 // loop_header_branch
      %34 = sbr.rel (%p32) target = $region8
    $region5: #{tpu_custom_call.1} parent=1 // loop_body
      %s36 = ssub.s32 %s31, 1
      %s37 = ssub.s32 %s31, 2
      %s44 = sadd.s32 1, %s39
      %p45 = scmp.ge.s32.totalorder %s44, 2
      %s46 = scalar_select %p45, 0, %s44
      %s47 = sadd.s32 1, %s38
      %s48 = scalar_select %p45, %s47, %s38
      %p49 = scmp.ge.s32.totalorder %s48, 2
      %s50 = scalar_select %p49, 0, %s48
      %s51 = ssub.s32 %s38, %s50
      %p52 = scmp.eq.s32.totalorder %s51, 0
      %s54 = sadd.s32 %s53, 1
      %s55 = scalar_select %p52, %s53, %s54
      %p58 = pneg %p52
      %p59 = scmp.eq.s32.totalorder %s31, 3
      %p60 = por %p58, %p59
      %p61 = scmp.ne.s32.totalorder %s53, %s56
      %p62 = scmp.eq.s32.totalorder %s31, 0
      %p63 = por %p61, %p62
      %p64 = scmp.ne.s32.totalorder %s53, %s56
      %p65 = scmp.eq.s32.totalorder %s36, 3
      %p66 = por %p64, %p65
      %p67 = scmp.ne.s32.totalorder %s56, %s57
      %p68 = scmp.eq.s32.totalorder %s36, 0
      %p69 = por %p67, %p68
      %p70 = scmp.ne.s32.totalorder %s56, %s57
      %p71 = scmp.eq.s32.totalorder %s37, 3
      %p72 = por %p70, %p71
      %p74 = scmp.ne.s32.totalorder %s57, %s73
      %p75 = scmp.eq.s32.totalorder %s37, 0
      %p76 = por %p74, %p75
      %s78 = sadd.s32 %s77, 1
      %p81 = scmp.eq.s32.totalorder %s31, 3
      %p82 = scmp.ne.s32.totalorder %s77, %s79
      %p83 = scmp.eq.s32.totalorder %s31, 0
      %p84 = por %p82, %p83
      %p85 = scmp.ne.s32.totalorder %s77, %s79
      %p86 = scmp.eq.s32.totalorder %s36, 3
      %p87 = por %p85, %p86
      %p88 = scmp.ne.s32.totalorder %s79, %s80
      %p89 = scmp.eq.s32.totalorder %s36, 0
      %p90 = por %p88, %p89
      %p91 = scmp.ne.s32.totalorder %s79, %s80
      %p92 = scmp.eq.s32.totalorder %s37, 3
      %p93 = por %p91, %p92
      %p95 = scmp.ne.s32.totalorder %s80, %s94
      %p96 = scmp.eq.s32.totalorder %s37, 0
      %p97 = por %p95, %p96
      %s99 = sadd.s32 %s98, 1
      %p102 = scmp.eq.s32.totalorder %s31, 3
      %p103 = scmp.ne.s32.totalorder %s98, %s100
      %p104 = scmp.eq.s32.totalorder %s31, 0
      %p105 = por %p103, %p104
      %p106 = scmp.ne.s32.totalorder %s98, %s100
      %p107 = scmp.eq.s32.totalorder %s36, 3
      %p108 = por %p106, %p107
      %p109 = scmp.ne.s32.totalorder %s100, %s101
      %p110 = scmp.eq.s32.totalorder %s36, 0
      %p111 = por %p109, %p110
      %p112 = scmp.ne.s32.totalorder %s100, %s101
      %p113 = scmp.eq.s32.totalorder %s37, 3
      %p114 = por %p112, %p113
      %p116 = scmp.ne.s32.totalorder %s101, %s115
      %p117 = scmp.eq.s32.totalorder %s37, 0
      %p118 = por %p116, %p117
      %s120 = sadd.s32 %s119, 1
      %p123 = scmp.eq.s32.totalorder %s31, 3
      %p124 = scmp.ne.s32.totalorder %s119, %s121
      %p125 = scmp.eq.s32.totalorder %s31, 0
      %p126 = por %p124, %p125
      %p127 = scmp.ne.s32.totalorder %s119, %s121
      %p128 = scmp.eq.s32.totalorder %s36, 3
      %p129 = por %p127, %p128
      %p130 = scmp.ne.s32.totalorder %s121, %s122
      %p131 = scmp.eq.s32.totalorder %s36, 0
      %p132 = por %p130, %p131
      %p133 = scmp.ne.s32.totalorder %s121, %s122
      %p134 = scmp.eq.s32.totalorder %s37, 3
      %p135 = por %p133, %p134
      %p137 = scmp.ne.s32.totalorder %s122, %s136
      %p138 = scmp.eq.s32.totalorder %s37, 0
      %p139 = por %p137, %p138
      %s141 = sadd.s32 %s140, 1
      %p144 = scmp.eq.s32.totalorder %s31, 3
      %p145 = scmp.ne.s32.totalorder %s140, %s142
      %p146 = scmp.eq.s32.totalorder %s31, 0
      %p147 = por %p145, %p146
      %p148 = scmp.ne.s32.totalorder %s140, %s142
      %p149 = scmp.eq.s32.totalorder %s36, 3
      %p150 = por %p148, %p149
      %p151 = scmp.ne.s32.totalorder %s142, %s143
      %p152 = scmp.eq.s32.totalorder %s36, 0
      %p153 = por %p151, %p152
      %p154 = scmp.ne.s32.totalorder %s142, %s143
      %p155 = scmp.eq.s32.totalorder %s37, 3
      %p156 = por %p154, %p155
      %p158 = scmp.ne.s32.totalorder %s143, %s157
      %p159 = scmp.eq.s32.totalorder %s37, 0
      %p160 = por %p158, %p159
      %s162 = sadd.s32 %s161, 1
      %p165 = scmp.eq.s32.totalorder %s31, 3
      %p166 = scmp.ne.s32.totalorder %s161, %s163
      %p167 = scmp.eq.s32.totalorder %s31, 0
      %p168 = por %p166, %p167
      %p169 = scmp.ne.s32.totalorder %s161, %s163
      %p170 = scmp.eq.s32.totalorder %s36, 3
      %p171 = por %p169, %p170
      %p172 = scmp.ne.s32.totalorder %s163, %s164
      %p173 = scmp.eq.s32.totalorder %s36, 0
      %p174 = por %p172, %p173
      %p175 = scmp.ne.s32.totalorder %s163, %s164
      %p176 = scmp.eq.s32.totalorder %s37, 3
      %p177 = por %p175, %p176
      %p179 = scmp.ne.s32.totalorder %s164, %s178
      %p180 = scmp.eq.s32.totalorder %s37, 0
      %p181 = por %p179, %p180
      %s183 = sadd.s32 %s182, 1
      %p186 = scmp.eq.s32.totalorder %s31, 3
      %p187 = scmp.ne.s32.totalorder %s182, %s184
      %p188 = scmp.eq.s32.totalorder %s31, 0
      %p189 = por %p187, %p188
      %p190 = scmp.ne.s32.totalorder %s182, %s184
      %p191 = scmp.eq.s32.totalorder %s36, 3
      %p192 = por %p190, %p191
      %p193 = scmp.ne.s32.totalorder %s184, %s185
      %p194 = scmp.eq.s32.totalorder %s36, 0
      %p195 = por %p193, %p194
      %p196 = scmp.ne.s32.totalorder %s184, %s185
      %p197 = scmp.eq.s32.totalorder %s37, 3
      %p198 = por %p196, %p197
      %p200 = scmp.ne.s32.totalorder %s185, %s199
      %p201 = scmp.eq.s32.totalorder %s37, 0
      %p202 = por %p200, %p201
      %s204 = sadd.s32 %s203, 1
      %p207 = scmp.eq.s32.totalorder %s31, 3
      %p208 = scmp.ne.s32.totalorder %s203, %s205
      %p209 = scmp.eq.s32.totalorder %s31, 0
      %p210 = por %p208, %p209
      %p211 = scmp.ne.s32.totalorder %s203, %s205
      %p212 = scmp.eq.s32.totalorder %s36, 3
      %p213 = por %p211, %p212
      %p214 = scmp.ne.s32.totalorder %s205, %s206
      %p215 = scmp.eq.s32.totalorder %s36, 0
      %p216 = por %p214, %p215
      %p217 = scmp.ne.s32.totalorder %s205, %s206
      %p218 = scmp.eq.s32.totalorder %s37, 3
      %p219 = por %p217, %p218
      %p221 = scmp.ne.s32.totalorder %s206, %s220
      %p222 = scmp.eq.s32.totalorder %s37, 0
      %p223 = por %p221, %p222
      %s225 = sadd.s32 %s224, 1
      %p228 = scmp.eq.s32.totalorder %s31, 3
      %p229 = scmp.ne.s32.totalorder %s224, %s226
      %p230 = scmp.eq.s32.totalorder %s31, 0
      %p231 = por %p229, %p230
      %p232 = scmp.ne.s32.totalorder %s224, %s226
      %p233 = scmp.eq.s32.totalorder %s36, 3
      %p234 = por %p232, %p233
      %p235 = scmp.ne.s32.totalorder %s226, %s227
      %p236 = scmp.eq.s32.totalorder %s36, 0
      %p237 = por %p235, %p236
      %p238 = scmp.ne.s32.totalorder %s226, %s227
      %p239 = scmp.eq.s32.totalorder %s37, 3
      %p240 = por %p238, %p239
      %p242 = scmp.ne.s32.totalorder %s227, %s241
      %p243 = scmp.eq.s32.totalorder %s37, 0
      %p244 = por %p242, %p243
      %s246 = sadd.s32 %s245, 1
      %p249 = scmp.eq.s32.totalorder %s31, 3
      %p250 = scmp.ne.s32.totalorder %s245, %s247
      %p251 = scmp.eq.s32.totalorder %s31, 0
      %p252 = por %p250, %p251
      %p253 = scmp.ne.s32.totalorder %s245, %s247
      %p254 = scmp.eq.s32.totalorder %s36, 3
      %p255 = por %p253, %p254
      %p256 = scmp.ne.s32.totalorder %s247, %s248
      %p257 = scmp.eq.s32.totalorder %s36, 0
      %p258 = por %p256, %p257
      %p259 = scmp.ne.s32.totalorder %s247, %s248
      %p260 = scmp.eq.s32.totalorder %s37, 3
      %p261 = por %p259, %p260
      %p263 = scmp.ne.s32.totalorder %s248, %s262
      %p264 = scmp.eq.s32.totalorder %s37, 0
      %p265 = por %p263, %p264
      %s266 = ssub.s32 %s38, %s50
      %p267 = scmp.eq.s32.totalorder %s266, 0
      %s269 = sadd.s32 %s268, 1
      %s270 = scalar_select %p267, %s268, %s269
      %p273 = pneg %p267
      %p274 = scmp.eq.s32.totalorder %s31, 3
      %p275 = por %p273, %p274
      %p276 = scmp.ne.s32.totalorder %s268, %s271
      %p277 = scmp.eq.s32.totalorder %s31, 0
      %p278 = por %p276, %p277
      %p279 = scmp.ne.s32.totalorder %s268, %s271
      %p280 = scmp.eq.s32.totalorder %s36, 3
      %p281 = por %p279, %p280
      %p282 = scmp.ne.s32.totalorder %s271, %s272
      %p283 = scmp.eq.s32.totalorder %s36, 0
      %p284 = por %p282, %p283
      %p285 = scmp.ne.s32.totalorder %s271, %s272
      %p286 = scmp.eq.s32.totalorder %s37, 3
      %p287 = por %p285, %p286
      %p289 = scmp.ne.s32.totalorder %s272, %s288
      %p290 = scmp.eq.s32.totalorder %s37, 0
      %p291 = por %p289, %p290
      %s292 = ssub.s32 %s38, %s50
      %s293 = ssub.s32 %s39, %s46
      %s294 = sor.u32 %s292, %s293
      %p295 = scmp.eq.s32.totalorder %s294, 0
      %s297 = sadd.s32 %s296, 1
      %s298 = scalar_select %p295, %s296, %s297
      %p301 = pneg %p295
      %p302 = scmp.eq.s32.totalorder %s31, 3
      %p303 = por %p301, %p302
      %p304 = scmp.ne.s32.totalorder %s296, %s299
      %p305 = scmp.eq.s32.totalorder %s31, 0
      %p306 = por %p304, %p305
      %p307 = scmp.ne.s32.totalorder %s296, %s299
      %p308 = scmp.eq.s32.totalorder %s36, 3
      %p309 = por %p307, %p308
      %p310 = scmp.ne.s32.totalorder %s299, %s300
      %p311 = scmp.eq.s32.totalorder %s36, 0
      %p312 = por %p310, %p311
      %p313 = scmp.ne.s32.totalorder %s299, %s300
      %p314 = scmp.eq.s32.totalorder %s37, 3
      %p315 = por %p313, %p314
      %p317 = scmp.ne.s32.totalorder %s300, %s316
      %p318 = scmp.eq.s32.totalorder %s37, 0
      %p319 = por %p317, %p318
      %p320 = scmp.le.s32.totalorder 1, %s31
      %p321 = scmp.lt.s32.totalorder %s31, 5
      %p322 = pnand %p320, %p321
      %p323 = pneg %p322
      // Predicated region
      $region9: #{tpu_custom_call.1} parent=5 // pred_check
        _
      $region10: #{tpu_custom_call.1} parent=5 // pred_check_branch
        %325 = sbr.rel (%p322) target = $region12
      $region11: #{tpu_custom_call.1} parent=5 // pred_region
        %s326 = ssub.s32 %s31, 1
        // Predicated region
        $region13: #{tpu_custom_call.1} parent=11 // pred_check
          %p327 = pneg %p90
        $region14: #{tpu_custom_call.1} parent=11 // pred_check_branch
          %329 = sbr.rel (%p327) target = $region16
        $region15: #{tpu_custom_call.1} parent=11 // pred_region
          %331 = vsyncadd [#allocation9], 0
          %s333 = sshll.u32 %s1, 4
          %s334 = int_to_ptr.hbm [resolvable:$true] %s333
          %s335 = sshll.u32 [#allocation8], 4
          %s336 = int_to_ptr.vmem [resolvable:$true] %s335
          %338 = dma.hbm_to_vmem [thread:$0]  %s334, 16, %s336, [#allocation9]
        $region16: #{tpu_custom_call.1} parent=11 // pred_fallthru
          _
        // Predicated region
        $region17: #{tpu_custom_call.1} parent=11 // pred_check
          %p339 = pneg %p111
        $region18: #{tpu_custom_call.1} parent=11 // pred_check_branch
          %341 = sbr.rel (%p339) target = $region20
        $region19: #{tpu_custom_call.1} parent=11 // pred_region
          _
        $region20: #{tpu_custom_call.1} parent=11 // pred_fallthru
          _
        // Predicated region
        $region21: #{tpu_custom_call.1} parent=11 // pred_check
          %p342 = pneg %p132
        $region22: #{tpu_custom_call.1} parent=11 // pred_check_branch
          %344 = sbr.rel (%p342) target = $region24
        $region23: #{tpu_custom_call.1} parent=11 // pred_region
          %346 = vsyncadd [#allocation9], 0
          %s347 = sshll.u32 %s3, 4
          %s348 = int_to_ptr.hbm [resolvable:$true] %s347
          %s349 = sshll.u32 [#allocation10], 4
          %s350 = int_to_ptr.vmem [resolvable:$true] %s349
          %355 = dma.hbm_to_vmem [thread:$0]  %s348, 512, %s350, [#allocation9], 64, 64, 4
        $region24: #{tpu_custom_call.1} parent=11 // pred_fallthru
          _
        // Predicated region
        $region25: #{tpu_custom_call.1} parent=11 // pred_check
          %p356 = pneg %p153
        $region26: #{tpu_custom_call.1} parent=11 // pred_check_branch
          %358 = sbr.rel (%p356) target = $region28
        $region27: #{tpu_custom_call.1} parent=11 // pred_region
          %360 = vsyncadd [#allocation12], 0
          %s361 = sshll.u32 %s4, 4
          %s362 = int_to_ptr.hbm [resolvable:$true] %s361
          %s363 = sshll.u32 [#allocation11], 4
          %s364 = int_to_ptr.vmem [resolvable:$true] %s363
          %369 = dma.hbm_to_vmem [thread:$0]  %s362, 512, %s364, [#allocation12], 64, 64, 4
        $region28: #{tpu_custom_call.1} parent=11 // pred_fallthru
          _
        // Predicated region
        $region29: #{tpu_custom_call.1} parent=11 // pred_check
          %p370 = pneg %p174
        $region30: #{tpu_custom_call.1} parent=11 // pred_check_branch
          %372 = sbr.rel (%p370) target = $region32
        $region31: #{tpu_custom_call.1} parent=11 // pred_region
          %374 = vsyncadd [#allocation12], 0
          %s375 = sshll.u32 %s5, 4
          %s376 = int_to_ptr.hbm [resolvable:$true] %s375
          %s377 = sshll.u32 [#allocation13], 4
          %s378 = int_to_ptr.vmem [resolvable:$true] %s377
          %383 = dma.hbm_to_vmem [thread:$0]  %s376, 512, %s378, [#allocation12], 64, 64, 4
        $region32: #{tpu_custom_call.1} parent=11 // pred_fallthru
          _
        // Predicated region
        $region33: #{tpu_custom_call.1} parent=11 // pred_check
          %p384 = pneg %p195
        $region34: #{tpu_custom_call.1} parent=11 // pred_check_branch
          %386 = sbr.rel (%p384) target = $region36
        $region35: #{tpu_custom_call.1} parent=11 // pred_region
          %388 = vsyncadd [#allocation7], 0
          %s390 = sshll.u32 %s6, 4
          %s391 = int_to_ptr.vmem [resolvable:$true] %s390
          %393 = dma.vmem_to_smem %s391, 16, [#allocation14], [#allocation7]
        $region36: #{tpu_custom_call.1} parent=11 // pred_fallthru
          _
        // Predicated region
        $region37: #{tpu_custom_call.1} parent=11 // pred_check
          %p394 = pneg %p216
        $region38: #{tpu_custom_call.1} parent=11 // pred_check_branch
          %396 = sbr.rel (%p394) target = $region40
        $region39: #{tpu_custom_call.1} parent=11 // pred_region
          _
        $region40: #{tpu_custom_call.1} parent=11 // pred_fallthru
          _
        // Predicated region
        $region41: #{tpu_custom_call.1} parent=11 // pred_check
          %p397 = pneg %p237
        $region42: #{tpu_custom_call.1} parent=11 // pred_check_branch
          %399 = sbr.rel (%p397) target = $region44
        $region43: #{tpu_custom_call.1} parent=11 // pred_region
          _
        $region44: #{tpu_custom_call.1} parent=11 // pred_fallthru
          _
        // Predicated region
        $region45: #{tpu_custom_call.1} parent=11 // pred_check
          %p400 = pneg %p258
        $region46: #{tpu_custom_call.1} parent=11 // pred_check_branch
          %402 = sbr.rel (%p400) target = $region48
        $region47: #{tpu_custom_call.1} parent=11 // pred_region
          %404 = vsyncadd [#allocation16], 0
          %s405 = sshll.u32 %s9, 4
          %s406 = int_to_ptr.hbm [resolvable:$true] %s405
          %s407 = sshll.u32 [#allocation15], 4
          %s408 = int_to_ptr.vmem [resolvable:$true] %s407
          %413 = dma.hbm_to_vmem [thread:$0]  %s406, 512, %s408, [#allocation16], 64, 64, 4
        $region48: #{tpu_custom_call.1} parent=11 // pred_fallthru
          _
      $region12: #{tpu_custom_call.1} parent=5 // pred_fallthru
        _
      %p414 = scmp.lt.s32.totalorder %s31, 4
      // Predicated region
      $region49: #{tpu_custom_call.1} parent=5 // pred_check
        %p415 = pneg %p414
      $region50: #{tpu_custom_call.1} parent=5 // pred_check_branch
        %417 = sbr.rel (%p415) target = $region52
      $region51: #{tpu_custom_call.1} parent=5 // pred_region
        // Predicated region
        $region53: #{tpu_custom_call.1} parent=51 // pred_check
          %p418 = pneg %p63
        $region54: #{tpu_custom_call.1} parent=51 // pred_check_branch
          %420 = sbr.rel (%p418) target = $region56
        $region55: #{tpu_custom_call.1} parent=51 // pred_region
          %s421 = sand.u32 %s53, 1
          %s422 = scalar_lea.sflag [#allocation5], %s421
          %s423 = sand.u32 %s53, 1
          %s424 = smul.addr %s423, 8
          %s425 = scalar_lea.vmem [#allocation4], %s424
          %427 = vsyncadd %s422, 0
          %s428 = smul.addr %s38, 8
          %s429 = scalar_lea.hbm %s0, %s428
          %s431 = sshll.u32 %s429, 4
          %s432 = int_to_ptr.hbm [resolvable:$true] %s431
          %s433 = sshll.u32 %s425, 4
          %s434 = int_to_ptr.vmem [resolvable:$true] %s433
          %436 = dma.hbm_to_vmem [thread:$0]  %s432, 128, %s434, %s422
        $region56: #{tpu_custom_call.1} parent=51 // pred_fallthru
          _
      $region52: #{tpu_custom_call.1} parent=5 // pred_fallthru
        _
      %p437 = scmp.le.s32.totalorder 1, %s31
      %p438 = scmp.lt.s32.totalorder %s31, 5
      %p439 = pnand %p437, %p438
      %p440 = pneg %p439
      // Predicated region
      $region57: #{tpu_custom_call.1} parent=5 // pred_check
        _
      $region58: #{tpu_custom_call.1} parent=5 // pred_check_branch
        %442 = sbr.rel (%p439) target = $region60
      $region59: #{tpu_custom_call.1} parent=5 // pred_region
        %s443 = ssub.s32 %s31, 1
        %s444 = sand.u32 %s56, 1
        %s445 = scalar_lea.sflag [#allocation5], %s444
        %s446 = sand.u32 %s56, 1
        %s447 = smul.addr %s446, 8
        %s448 = scalar_lea.vmem [#allocation4], %s447
        // Predicated region
        $region61: #{tpu_custom_call.1} parent=59 // pred_check
          %p449 = pneg %p69
        $region62: #{tpu_custom_call.1} parent=59 // pred_check_branch
          %451 = sbr.rel (%p449) target = $region64
        $region63: #{tpu_custom_call.1} parent=59 // pred_region
          %453 = dma.done %s445, 128
        $region64: #{tpu_custom_call.1} parent=59 // pred_fallthru
          _
        // Predicated region
        $region65: #{tpu_custom_call.1} parent=59 // pred_check
          %p454 = pneg %p90
        $region66: #{tpu_custom_call.1} parent=59 // pred_check_branch
          %456 = sbr.rel (%p454) target = $region68
        $region67: #{tpu_custom_call.1} parent=59 // pred_region
          %458 = dma.done [#allocation9], 16
        $region68: #{tpu_custom_call.1} parent=59 // pred_fallthru
          _
        // Predicated region
        $region69: #{tpu_custom_call.1} parent=59 // pred_check
          %p459 = pneg %p132
        $region70: #{tpu_custom_call.1} parent=59 // pred_check_branch
          %461 = sbr.rel (%p459) target = $region72
        $region71: #{tpu_custom_call.1} parent=59 // pred_region
          %463 = dma.done [#allocation9], 512
        $region72: #{tpu_custom_call.1} parent=59 // pred_fallthru
          _
        // Predicated region
        $region73: #{tpu_custom_call.1} parent=59 // pred_check
          %p464 = pneg %p153
        $region74: #{tpu_custom_call.1} parent=59 // pred_check_branch
          %466 = sbr.rel (%p464) target = $region76
        $region75: #{tpu_custom_call.1} parent=59 // pred_region
          %468 = dma.done [#allocation12], 512
        $region76: #{tpu_custom_call.1} parent=59 // pred_fallthru
          _
        // Predicated region
        $region77: #{tpu_custom_call.1} parent=59 // pred_check
          %p469 = pneg %p174
        $region78: #{tpu_custom_call.1} parent=59 // pred_check_branch
          %471 = sbr.rel (%p469) target = $region80
        $region79: #{tpu_custom_call.1} parent=59 // pred_region
          %473 = dma.done [#allocation12], 512
        $region80: #{tpu_custom_call.1} parent=59 // pred_fallthru
          _
        // Predicated region
        $region81: #{tpu_custom_call.1} parent=59 // pred_check
          %p474 = pneg %p195
        $region82: #{tpu_custom_call.1} parent=59 // pred_check_branch
          %476 = sbr.rel (%p474) target = $region84
        $region83: #{tpu_custom_call.1} parent=59 // pred_region
          %478 = dma.done [#allocation7], 16
        $region84: #{tpu_custom_call.1} parent=59 // pred_fallthru
          _
        // Predicated region
        $region85: #{tpu_custom_call.1} parent=59 // pred_check
          %p479 = pneg %p258
        $region86: #{tpu_custom_call.1} parent=59 // pred_check_branch
          %481 = sbr.rel (%p479) target = $region88
        $region87: #{tpu_custom_call.1} parent=59 // pred_region
          %483 = dma.done [#allocation16], 512
        $region88: #{tpu_custom_call.1} parent=59 // pred_fallthru
          _
        %484 = sfence
        %s485 = sand.u32 %s56, 1
        %s486 = scalar_lea.sflag [#allocation5], %s485
        %s487 = sand.u32 %s56, 1
        %s488 = smul.addr %s487, 8
        %s489 = scalar_lea.vmem [#allocation4], %s488
        %p490 = pneg %p69
        %p491 = pneg %p66
        %p492 = pneg %p90
        %p493 = pneg %p87
        %p494 = pneg %p111
        %p495 = pneg %p108
        %p496 = pneg %p132
        %p497 = pneg %p129
        %p498 = pneg %p153
        %p499 = pneg %p150
        %p500 = pneg %p174
        %p501 = pneg %p171
        %p502 = pneg %p195
        %p503 = pneg %p192
        %p504 = pneg %p216
        %p505 = pneg %p213
        %p506 = pneg %p237
        %p507 = pneg %p234
        %p508 = pneg %p258
        %p509 = pneg %p255
        %p510 = pneg %p284
        %p511 = pneg %p281
        %s512 = sand.u32 %s271, 1
        %s513 = scalar_lea.sflag [#allocation6], %s512
        %s514 = sand.u32 %s271, 1
        %s515 = smul.addr %s514, 4
        %s516 = scalar_lea.vmem [#allocation17], %s515
        %p517 = pneg %p312
        %p518 = pneg %p309
        %s519 = sand.u32 %s299, 1
        %s520 = scalar_lea.sflag [#allocation19], %s519
        %s521 = sand.u32 %s299, 1
        %s522 = smul.addr %s521, 8
        %s523 = scalar_lea.vmem [#allocation18], %s522
        %s524 = smul.u32 2, %s41
        %p526 = scmp.eq.s32.totalorder %s41, 0
        // Predicated region
        $region89: #{tpu_custom_call.1} parent=59 // pred_check
          %p527 = pneg %p526
        $region90: #{tpu_custom_call.1} parent=59 // pred_check_branch
          %529 = sbr.rel (%p527) target = $region92
        $region91: #{tpu_custom_call.1} parent=59 // pred_region
          %v530 = vld [vmem:[%s448] sm:$0xff]
          %v531 = vld [vmem:[#allocation8] sm:$0x1]
          %v532 = vld [vmem:[%s2] sm:$0x1]
          %vm533 = vcmask 261120
          %v534 = vsel %vm533, %v530, 0.0
          %535 = vadd.xlane.f32.xlu0 %v534
          %v536 = vpop.xlane.xlu0 %535
          %v537 = vrcp.pop 32.0
          %v538 = vmul.f32 32.0, %v537
          %v539 = vsub.f32 1.0, %v538
          %v540 = vmul.f32 %v537, %v539
          %v541 = vadd.f32 %v537, %v540
          %vm542 = vweird.f32 %v537
          %v543 = vsel %vm542, %v537, %v541
          %v544 = vmul.f32 %v536, %v543
          %v545 = vsub.f32 %v530, %v544
          %v546 = vmul.f32 %v545, %v545
          %v547 = vsel %vm533, %v546, 0.0
          %548 = vadd.xlane.f32.xlu0 %v547
          %v549 = vpop.xlane.xlu0 %548
          %v550 = vmul.f32 %v549, %v543
          %v551 = vadd.f32 %v550, 1e-05
          %v552 = vrsqrt.pop %v551
          %v553 = vmul.f32 %v552, %v551
          %v554 = vmul.f32 %v553, %v552
          %v555 = vmul.f32 0.5, %v554
          %v556 = vsub.f32 1.5, %v555
          %v557 = vmul.f32 %v552, %v556
          %vm558 = vweird.f32 %v551
          %vm559 = vweird.f32 %v552
          %vm560 = vmor %vm558, %vm559
          %v561 = vsel %vm560, %v552, %v557
          %v562 = vmul.f32 %v545, %v561
          %v564 = vperm.slane %v531, 0
          %v566 = vmul.f32 %v562, %v564
          %v568 = vperm.slane %v532, 0
          %v570 = vadd.f32 %v566, %v568
          %v571 = vpack.c.bf16 %v570, %v570
          %vm572 = vcmask 257024
          %573 = vst.msk [vmem:[#allocation2] sm:$0xf] %vm572, %v571
          %574 = vst.msk [vmem:[#allocation3] sm:$0xff] %vm533, 0.0
        $region92: #{tpu_custom_call.1} parent=59 // pred_fallthru
          _
        %v575 = vld [vmem:[#allocation2] sm:$0xf]
        %s576 = smul.u32 %s41, 4
        %s577 = smul.addr %s576, 4
        %s578 = scalar_lea.vmem [#allocation10], %s577
        %v579 = vld [vmem:[%s578] sm:$0xf]
        %v580 = vld [vmem:[%s578 + $0x4] sm:$0xf]
        %v581 = vld [vmem:[%s578 + $0x8] sm:$0xf]
        %v582 = vld [vmem:[%s578 + $0xc] sm:$0xf]
        %v587 = vunpack.c.l.b16 %v579
        %v588 = vunpack.c.l.b16 %v580
        %v589 = vunpack.c.l.b16 %v581
        %v590 = vunpack.c.l.b16 %v582
        %v591 = vpack.c.b16 %v588, %v587
        %v592 = vpack.c.b16 %v590, %v589
        %vm595 = vcmask 261120
        %v597 = vsel %vm595, %v575, 0
        %599 = vmatpush.bf16.msra.mxu0 0
        %600 = vmatpush.bf16.msra.mxu0 0
        %601 = vmatpush.bf16.msra.mxu0 0
        %602 = vmatpush.bf16.msra.mxu0 0
        %603 = vmatpush.bf16.msra.mxu0 0
        %604 = vmatpush.bf16.msra.mxu0 0
        %605 = vmatpush.bf16.msra.mxu0 %v592
        %606 = vmatpush.bf16.msra.mxu0 %v591
        %607 = vmatmul.bf16.gmra.mxu0 %v597
        %v608 = vpop.f32.mrf.mxu0
        %v609 = vadd.f32 0.0, %v608
        %v610 = vpop.f32.mrf.mxu0
        %611 = vdwg.mxu0
        %s612 = smul.addr %s576, 4
        %s613 = scalar_lea.vmem [#allocation11], %s612
        %v614 = vld [vmem:[%s613] sm:$0xf]
        %v615 = vld [vmem:[%s613 + $0x4] sm:$0xf]
        %v616 = vld [vmem:[%s613 + $0x8] sm:$0xf]
        %v617 = vld [vmem:[%s613 + $0xc] sm:$0xf]
        %v622 = vunpack.c.l.b16 %v614
        %v623 = vunpack.c.l.b16 %v615
        %v624 = vunpack.c.l.b16 %v616
        %v625 = vunpack.c.l.b16 %v617
        %v626 = vpack.c.b16 %v623, %v622
        %v627 = vpack.c.b16 %v625, %v624
        %630 = vmatpush.bf16.msra.mxu0 0
        %631 = vmatpush.bf16.msra.mxu0 0
        %632 = vmatpush.bf16.msra.mxu0 0
        %633 = vmatpush.bf16.msra.mxu0 0
        %634 = vmatpush.bf16.msra.mxu0 0
        %635 = vmatpush.bf16.msra.mxu0 0
        %636 = vmatpush.bf16.msra.mxu0 %v627
        %637 = vmatpush.bf16.msra.mxu0 %v626
        %638 = vmatmul.bf16.gmra.mxu0 %v597
        %v639 = vpop.f32.mrf.mxu0
        %v640 = vadd.f32 0.0, %v639
        %v641 = vpop.f32.mrf.mxu0
        %642 = vdwg.mxu0
        %s643 = smul.addr %s576, 4
        %s644 = scalar_lea.vmem [#allocation13], %s643
        %v645 = vld [vmem:[%s644] sm:$0xf]
        %v646 = vld [vmem:[%s644 + $0x4] sm:$0xf]
        %v647 = vld [vmem:[%s644 + $0x8] sm:$0xf]
        %v648 = vld [vmem:[%s644 + $0xc] sm:$0xf]
        %v653 = vunpack.c.l.b16 %v645
        %v654 = vunpack.c.l.b16 %v646
        %v655 = vunpack.c.l.b16 %v647
        %v656 = vunpack.c.l.b16 %v648
        %v657 = vpack.c.b16 %v654, %v653
        %v658 = vpack.c.b16 %v656, %v655
        %661 = vmatpush.bf16.msra.mxu0 0
        %662 = vmatpush.bf16.msra.mxu0 0
        %663 = vmatpush.bf16.msra.mxu0 0
        %664 = vmatpush.bf16.msra.mxu0 0
        %665 = vmatpush.bf16.msra.mxu0 0
        %666 = vmatpush.bf16.msra.mxu0 0
        %667 = vmatpush.bf16.msra.mxu0 %v658
        %668 = vmatpush.bf16.msra.mxu0 %v657
        %669 = vmatmul.bf16.gmra.mxu0 %v597
        %v670 = vpop.f32.mrf.mxu0
        %v671 = vadd.f32 0.0, %v670
        %v672 = vpop.f32.mrf.mxu0
        %673 = vdwg.mxu0
        %v674 = vpack.c.bf16 %v609, %v609
        %v675 = vpack.c.bf16 %v640, %v640
        %v676 = vpack.c.bf16 %v671, %v671
        %vm677 = vcmask 64512
        %v679 = vsel %vm677, %v674, 0
        %v682 = vsel %vm677, %v675, 0
        %684 = vmatpush.bf16.xpose.msra.mxu0 0
        %685 = vmatpush.bf16.xpose.msra.mxu0 0
        %686 = vmatpush.bf16.xpose.msra.mxu0 0
        %687 = vmatpush.bf16.xpose.msra.mxu0 0
        %688 = vmatpush.bf16.xpose.msra.mxu0 0
        %689 = vmatpush.bf16.xpose.msra.mxu0 0
        %690 = vmatpush.bf16.xpose.msra.mxu0 0
        %691 = vmatpush.bf16.xpose.msra.mxu0 %v682
        %692 = vmatmul.bf16.gmra.mxu0 %v679
        %v693 = vpop.f32.mrf.mxu0
        %v694 = vadd.f32 0.0, %v693
        %v695 = vpop.f32.mrf.mxu0
        %696 = vdwg.mxu0
        %v697 = vmul.f32 %v694, 0.35355338
        %699 = vrot.lane.b32.xlu0 %v674, 120
        %v700 = vpop.permute.xlu0 %699
        %702 = vrot.lane.b32.xlu0 %v675, 120
        %v703 = vpop.permute.xlu0 %702
        %v705 = vsel %vm677, %v700, 0
        %v708 = vsel %vm677, %v703, 0
        %710 = vmatpush.bf16.xpose.msra.mxu0 0
        %711 = vmatpush.bf16.xpose.msra.mxu0 0
        %712 = vmatpush.bf16.xpose.msra.mxu0 0
        %713 = vmatpush.bf16.xpose.msra.mxu0 0
        %714 = vmatpush.bf16.xpose.msra.mxu0 0
        %715 = vmatpush.bf16.xpose.msra.mxu0 0
        %716 = vmatpush.bf16.xpose.msra.mxu0 0
        %717 = vmatpush.bf16.xpose.msra.mxu0 %v708
        %718 = vmatmul.bf16.gmra.mxu0 %v705
        %v719 = vpop.f32.mrf.mxu0
        %v720 = vadd.f32 0.0, %v719
        %v721 = vpop.f32.mrf.mxu0
        %722 = vdwg.mxu0
        %v723 = vmul.f32 %v720, 0.35355338
        %v724 = vsel %vm677, %v697, -inf
        %725 = vmax.xlane.f32.xlu0 %v724
        %v726 = vpop.xlane.xlu0 %725
        %v727 = vsub.f32 %v697, %v726
        %v728 = vmul.f32 %v727, 1.442695
        %v729 = vpow.pop %v728
        %v730 = vsel %vm677, %v729, 0.0
        %731 = vadd.xlane.f32.xlu0 %v730
        %v732 = vpop.xlane.xlu0 %731
        %v733 = vrcp.pop %v732
        %v734 = vmul.f32 %v729, %v733
        %v735 = vsel %vm677, %v723, -inf
        %736 = vmax.xlane.f32.xlu0 %v735
        %v737 = vpop.xlane.xlu0 %736
        %v738 = vsub.f32 %v723, %v737
        %v739 = vmul.f32 %v738, 1.442695
        %v740 = vpow.pop %v739
        %v741 = vsel %vm677, %v740, 0.0
        %742 = vadd.xlane.f32.xlu0 %v741
        %v743 = vpop.xlane.xlu0 %742
        %v744 = vrcp.pop %v743
        %v745 = vmul.f32 %v740, %v744
        %s746 = smul.u32 %s41, 2
        %s747 = sld [smem:[#allocation14 + %s746]]
        %v748 = vstv %s747
        %v749 = vmul.f32 %v748, %v745
        %v750 = vsub.f32 %v734, %v749
        %v751 = vpack.c.bf16 %v750, %v750
        %vm752 = vcmask 60416
        %753 = vst.msk [vmem:[%s523] sm:$0xf] %vm752, %v751
        %v755 = vsel %vm677, %v751, 0
        %vm757 = vcmask 1043456
        %v759 = vsel %vm757, %v676, 0
        %761 = vmatpush.bf16.msra.mxu0 0
        %762 = vmatpush.bf16.msra.mxu0 0
        %763 = vmatpush.bf16.msra.mxu0 0
        %764 = vmatpush.bf16.msra.mxu0 0
        %765 = vmatpush.bf16.msra.mxu0 0
        %766 = vmatpush.bf16.msra.mxu0 0
        %767 = vmatpush.bf16.msra.mxu0 0
        %768 = vmatpush.bf16.msra.mxu0 %v759
        %769 = vmatmul.bf16.gmra.mxu0 %v755
        %v770 = vpop.f32.mrf.mxu0
        %v771 = vadd.f32 0.0, %v770
        %v772 = vpop.f32.mrf.mxu0
        %773 = vdwg.mxu0
        %vm774 = vcmask 130048
        %v775 = vsel %vm774, %v771, 0.0
        %776 = vadd.xlane.f32.xlu0 %v775
        %v777 = vpop.xlane.xlu0 %776
        %v778 = vrot.slane %v777, 4
        %v779 = vadd.f32 %v777, %v778
        %v780 = vrot.slane %v779, 2
        %v781 = vadd.f32 %v779, %v780
        %v782 = vrot.slane %v781, 1
        %v783 = vadd.f32 %v781, %v782
        %s784 = vtos %v783
        %v785 = vstv %s784
        %v786 = vrcp.pop 128.0
        %v787 = vmul.f32 128.0, %v786
        %v788 = vsub.f32 1.0, %v787
        %v789 = vmul.f32 %v786, %v788
        %v790 = vadd.f32 %v786, %v789
        %vm791 = vweird.f32 %v786
        %v792 = vsel %vm791, %v786, %v790
        %v793 = vmul.f32 %v785, %v792
        %v794 = vsub.f32 %v771, %v793
        %v795 = vmul.f32 %v794, %v794
        %v796 = vsel %vm774, %v795, 0.0
        %797 = vadd.xlane.f32.xlu0 %v796
        %v798 = vpop.xlane.xlu0 %797
        %v799 = vrot.slane %v798, 4
        %v800 = vadd.f32 %v798, %v799
        %v801 = vrot.slane %v800, 2
        %v802 = vadd.f32 %v800, %v801
        %v803 = vrot.slane %v802, 1
        %v804 = vadd.f32 %v802, %v803
        %s805 = vtos %v804
        %v806 = vstv %s805
        %v807 = vmul.f32 %v806, %v792
        %v808 = vadd.f32 %v807, 1e-05
        %v809 = vrsqrt.pop %v808
        %v810 = vmul.f32 %v809, %v808
        %v811 = vmul.f32 %v810, %v809
        %v812 = vmul.f32 0.5, %v811
        %v813 = vsub.f32 1.5, %v812
        %v814 = vmul.f32 %v809, %v813
        %vm815 = vweird.f32 %v808
        %vm816 = vweird.f32 %v809
        %vm817 = vmor %vm815, %vm816
        %v818 = vsel %vm817, %v809, %v814
        %v819 = vmul.f32 %v794, %v818
        %v820 = vld [vmem:[%s7] sm:$0x1]
        %v822 = vperm.slane %v820, 0
        %v824 = vmul.f32 %v819, %v822
        %v825 = vld [vmem:[%s8] sm:$0x1]
        %v827 = vperm.slane %v825, 0
        %v829 = vadd.f32 %v824, %v827
        %v830 = vpack.c.bf16 %v829, %v829
        %831 = vrot.lane.b32.xlu0 %v674, 112
        %v832 = vpop.permute.xlu0 %831
        %833 = vrot.lane.b32.xlu0 %v675, 112
        %v834 = vpop.permute.xlu0 %833
        %v836 = vsel %vm677, %v832, 0
        %v839 = vsel %vm677, %v834, 0
        %841 = vmatpush.bf16.xpose.msra.mxu0 0
        %842 = vmatpush.bf16.xpose.msra.mxu0 0
        %843 = vmatpush.bf16.xpose.msra.mxu0 0
        %844 = vmatpush.bf16.xpose.msra.mxu0 0
        %845 = vmatpush.bf16.xpose.msra.mxu0 0
        %846 = vmatpush.bf16.xpose.msra.mxu0 0
        %847 = vmatpush.bf16.xpose.msra.mxu0 0
        %848 = vmatpush.bf16.xpose.msra.mxu0 %v839
        %849 = vmatmul.bf16.gmra.mxu0 %v836
        %v850 = vpop.f32.mrf.mxu0
        %v851 = vadd.f32 0.0, %v850
        %v852 = vpop.f32.mrf.mxu0
        %853 = vdwg.mxu0
        %v854 = vmul.f32 %v851, 0.35355338
        %855 = vrot.lane.b32.xlu0 %v674, 104
        %v856 = vpop.permute.xlu0 %855
        %857 = vrot.lane.b32.xlu0 %v675, 104
        %v858 = vpop.permute.xlu0 %857
        %v860 = vsel %vm677, %v856, 0
        %v863 = vsel %vm677, %v858, 0
        %865 = vmatpush.bf16.xpose.msra.mxu0 0
        %866 = vmatpush.bf16.xpose.msra.mxu0 0
        %867 = vmatpush.bf16.xpose.msra.mxu0 0
        %868 = vmatpush.bf16.xpose.msra.mxu0 0
        %869 = vmatpush.bf16.xpose.msra.mxu0 0
        %870 = vmatpush.bf16.xpose.msra.mxu0 0
        %871 = vmatpush.bf16.xpose.msra.mxu0 0
        %872 = vmatpush.bf16.xpose.msra.mxu0 %v863
        %873 = vmatmul.bf16.gmra.mxu0 %v860
        %v874 = vpop.f32.mrf.mxu0
        %v875 = vadd.f32 0.0, %v874
        %v876 = vpop.f32.mrf.mxu0
        %877 = vdwg.mxu0
        %v878 = vmul.f32 %v875, 0.35355338
        %v879 = vsel %vm677, %v854, -inf
        %880 = vmax.xlane.f32.xlu0 %v879
        %v881 = vpop.xlane.xlu0 %880
        %v882 = vsub.f32 %v854, %v881
        %v883 = vmul.f32 %v882, 1.442695
        %v884 = vpow.pop %v883
        %v885 = vsel %vm677, %v884, 0.0
        %886 = vadd.xlane.f32.xlu0 %v885
        %v887 = vpop.xlane.xlu0 %886
        %v888 = vrcp.pop %v887
        %v889 = vmul.f32 %v884, %v888
        %v890 = vsel %vm677, %v878, -inf
        %891 = vmax.xlane.f32.xlu0 %v890
        %v892 = vpop.xlane.xlu0 %891
        %v893 = vsub.f32 %v878, %v892
        %v894 = vmul.f32 %v893, 1.442695
        %v895 = vpow.pop %v894
        %v896 = vsel %vm677, %v895, 0.0
        %897 = vadd.xlane.f32.xlu0 %v896
        %v898 = vpop.xlane.xlu0 %897
        %v899 = vrcp.pop %v898
        %v900 = vmul.f32 %v895, %v899
        %s901 = sadd.s32 %s746, 1
        %s902 = sld [smem:[#allocation14 + %s901]]
        %v903 = vstv %s902
        %v904 = vmul.f32 %v903, %v900
        %v905 = vsub.f32 %v889, %v904
        %v906 = vpack.c.bf16 %v905, %v905
        %s907 = scalar_lea.vmem %s523, 4 [#allocation18]
        %908 = vst.msk [vmem:[%s907] sm:$0xf] %vm752, %v906
        %910 = vrot.lane.b32.xlu0 %v676, 112
        %v911 = vpop.permute.xlu0 %910
        %v913 = vsel %vm677, %v906, 0
        %v916 = vsel %vm757, %v911, 0
        %918 = vmatpush.bf16.msra.mxu0 0
        %919 = vmatpush.bf16.msra.mxu0 0
        %920 = vmatpush.bf16.msra.mxu0 0
        %921 = vmatpush.bf16.msra.mxu0 0
        %922 = vmatpush.bf16.msra.mxu0 0
        %923 = vmatpush.bf16.msra.mxu0 0
        %924 = vmatpush.bf16.msra.mxu0 0
        %925 = vmatpush.bf16.msra.mxu0 %v916
        %926 = vmatmul.bf16.gmra.mxu0 %v913
        %v927 = vpop.f32.mrf.mxu0
        %v928 = vadd.f32 0.0, %v927
        %v929 = vpop.f32.mrf.mxu0
        %930 = vdwg.mxu0
        %v931 = vsel %vm774, %v928, 0.0
        %932 = vadd.xlane.f32.xlu0 %v931
        %v933 = vpop.xlane.xlu0 %932
        %v934 = vrot.slane %v933, 4
        %v935 = vadd.f32 %v933, %v934
        %v936 = vrot.slane %v935, 2
        %v937 = vadd.f32 %v935, %v936
        %v938 = vrot.slane %v937, 1
        %v939 = vadd.f32 %v937, %v938
        %s940 = vtos %v939
        %v941 = vstv %s940
        %v942 = vmul.f32 %v941, %v792
        %v943 = vsub.f32 %v928, %v942
        %v944 = vmul.f32 %v943, %v943
        %v945 = vsel %vm774, %v944, 0.0
        %946 = vadd.xlane.f32.xlu0 %v945
        %v947 = vpop.xlane.xlu0 %946
        %v948 = vrot.slane %v947, 4
        %v949 = vadd.f32 %v947, %v948
        %v950 = vrot.slane %v949, 2
        %v951 = vadd.f32 %v949, %v950
        %v952 = vrot.slane %v951, 1
        %v953 = vadd.f32 %v951, %v952
        %s954 = vtos %v953
        %v955 = vstv %s954
        %v956 = vmul.f32 %v955, %v792
        %v957 = vadd.f32 %v956, 1e-05
        %v958 = vrsqrt.pop %v957
        %v959 = vmul.f32 %v958, %v957
        %v960 = vmul.f32 %v959, %v958
        %v961 = vmul.f32 0.5, %v960
        %v962 = vsub.f32 1.5, %v961
        %v963 = vmul.f32 %v958, %v962
        %vm964 = vweird.f32 %v957
        %vm965 = vweird.f32 %v958
        %vm966 = vmor %vm964, %vm965
        %v967 = vsel %vm966, %v958, %v963
        %v968 = vmul.f32 %v943, %v967
        %v969 = vld [vmem:[%s7] sm:$0x1]
        %v971 = vperm.slane %v969, 0
        %v973 = vmul.f32 %v968, %v971
        %v974 = vld [vmem:[%s8] sm:$0x1]
        %v976 = vperm.slane %v974, 0
        %v978 = vadd.f32 %v973, %v976
        %v979 = vpack.c.bf16 %v978, %v978
        %v981 = vunpack.c.l.b16 %v979
        %v982 = vpack.c.b16 %v981, %v981
        %983 = vrot.lane.b32.xlu0 %v982, 16
        %v984 = vpop.permute.xlu0 %983
        %v987 = vsel %vm774, %v830, %v984
        %v988 = vld [vmem:[#allocation3] sm:$0xff]
        %s989 = smul.addr %s576, 4
        %s990 = scalar_lea.vmem [#allocation15], %s989
        %v991 = vld [vmem:[%s990] sm:$0xf]
        %v992 = vld [vmem:[%s990 + $0x4] sm:$0xf]
        %v993 = vld [vmem:[%s990 + $0x8] sm:$0xf]
        %v994 = vld [vmem:[%s990 + $0xc] sm:$0xf]
        %v999 = vunpack.c.l.b16 %v991
        %v1000 = vunpack.c.l.b16 %v992
        %v1001 = vunpack.c.l.b16 %v993
        %v1002 = vunpack.c.l.b16 %v994
        %v1003 = vpack.c.b16 %v1000, %v999
        %v1004 = vpack.c.b16 %v1002, %v1001
        %v1007 = vsel %vm595, %v987, 0
        %1009 = vmatpush.bf16.msra.mxu0 0
        %1010 = vmatpush.bf16.msra.mxu0 0
        %1011 = vmatpush.bf16.msra.mxu0 0
        %1012 = vmatpush.bf16.msra.mxu0 0
        %1013 = vmatpush.bf16.msra.mxu0 0
        %1014 = vmatpush.bf16.msra.mxu0 0
        %1015 = vmatpush.bf16.msra.mxu0 %v1004
        %1016 = vmatpush.bf16.msra.mxu0 %v1003
        %1017 = vmatmul.bf16.gmra.mxu0 %v1007
        %v1018 = vpop.f32.mrf.mxu0
        %v1019 = vadd.f32 0.0, %v1018
        %v1020 = vpop.f32.mrf.mxu0
        %1021 = vdwg.mxu0
        %v1022 = vadd.f32 %v988, %v1019
        %1023 = vst.msk [vmem:[#allocation3] sm:$0xff] %vm595, %v1022
        %p1024 = scmp.eq.s32.totalorder %s41, 1
        // Predicated region
        $region93: #{tpu_custom_call.1} parent=59 // pred_check
          %p1025 = pneg %p1024
        $region94: #{tpu_custom_call.1} parent=59 // pred_check_branch
          %1027 = sbr.rel (%p1025) target = $region96
        $region95: #{tpu_custom_call.1} parent=59 // pred_region
          %v1028 = vld [vmem:[#allocation3] sm:$0xff]
          %v1029 = vpack.c.bf16 %v1028, %v1028
          %vm1030 = vcmask 257024
          %1031 = vst.msk [vmem:[%s516] sm:$0xf] %vm1030, %v1029
        $region96: #{tpu_custom_call.1} parent=59 // pred_fallthru
          _
        %s1032 = sand.u32 %s271, 1
        %s1033 = scalar_lea.sflag [#allocation6], %s1032
        %s1034 = sand.u32 %s271, 1
        %s1035 = smul.addr %s1034, 4
        %s1036 = scalar_lea.vmem [#allocation17], %s1035
        %s1037 = sand.u32 %s299, 1
        %s1038 = scalar_lea.sflag [#allocation19], %s1037
        %s1039 = sand.u32 %s299, 1
        %s1040 = smul.addr %s1039, 8
        %s1041 = scalar_lea.vmem [#allocation18], %s1040
        // Predicated region
        $region97: #{tpu_custom_call.1} parent=59 // pred_check
          %p1042 = pneg %p281
        $region98: #{tpu_custom_call.1} parent=59 // pred_check_branch
          %1044 = sbr.rel (%p1042) target = $region100
        $region99: #{tpu_custom_call.1} parent=59 // pred_region
          %1046 = vsyncadd %s1033, 0
          %s1047 = smul.addr %s40, 4
          %s1048 = scalar_lea.hbm %s10, %s1047
          %s1050 = sshll.u32 %s1036, 4
          %s1051 = int_to_ptr.vmem [resolvable:$true] %s1050
          %s1052 = sshll.u32 %s1048, 4
          %s1053 = int_to_ptr.hbm [resolvable:$true] %s1052
          %1055 = dma.vmem_to_hbm [thread:$0]  %s1051, 64, %s1053, %s1033
        $region100: #{tpu_custom_call.1} parent=59 // pred_fallthru
          _
        // Predicated region
        $region101: #{tpu_custom_call.1} parent=59 // pred_check
          %p1056 = pneg %p309
        $region102: #{tpu_custom_call.1} parent=59 // pred_check_branch
          %1058 = sbr.rel (%p1056) target = $region104
        $region103: #{tpu_custom_call.1} parent=59 // pred_region
          %s1059 = smul.u32 2, %s41
          %1061 = vsyncadd %s1038, 0
          %s1062 = smul.addr %s40, 4
          %s1063 = sadd.s32 %s1059, %s1062
          %s1064 = smul.addr %s1063, 4
          %s1065 = scalar_lea.hbm %s11, %s1064
          %s1066 = sshll.u32 %s1041, 4
          %s1067 = int_to_ptr.vmem [resolvable:$true] %s1066
          %s1068 = sshll.u32 %s1065, 4
          %s1069 = int_to_ptr.hbm [resolvable:$true] %s1068
          %1074 = dma.vmem_to_hbm [thread:$0]  %s1067, 128, %s1069, %s1038, 64, 64, 4
        $region104: #{tpu_custom_call.1} parent=59 // pred_fallthru
          _
      $region60: #{tpu_custom_call.1} parent=5 // pred_fallthru
        _
      %p1075 = scmp.le.s32.totalorder 2, %s31
      // Predicated region
      $region105: #{tpu_custom_call.1} parent=5 // pred_check
        %p1076 = pneg %p1075
      $region106: #{tpu_custom_call.1} parent=5 // pred_check_branch
        %1078 = sbr.rel (%p1076) target = $region108
      $region107: #{tpu_custom_call.1} parent=5 // pred_region
        %s1079 = ssub.s32 %s31, 2
        // Predicated region
        $region109: #{tpu_custom_call.1} parent=107 // pred_check
          %p1080 = pneg %p287
        $region110: #{tpu_custom_call.1} parent=107 // pred_check_branch
          %1082 = sbr.rel (%p1080) target = $region112
        $region111: #{tpu_custom_call.1} parent=107 // pred_region
          %s1083 = sand.u32 %s272, 1
          %s1084 = scalar_lea.sflag [#allocation6], %s1083
          %s1085 = sand.u32 %s272, 1
          %s1086 = smul.addr %s1085, 4
          %s1087 = scalar_lea.vmem [#allocation17], %s1086
          %1089 = dma.done %s1084, 64
        $region112: #{tpu_custom_call.1} parent=107 // pred_fallthru
          _
        // Predicated region
        $region113: #{tpu_custom_call.1} parent=107 // pred_check
          %p1090 = pneg %p315
        $region114: #{tpu_custom_call.1} parent=107 // pred_check_branch
          %1092 = sbr.rel (%p1090) target = $region116
        $region115: #{tpu_custom_call.1} parent=107 // pred_region
          %s1093 = sand.u32 %s300, 1
          %s1094 = scalar_lea.sflag [#allocation19], %s1093
          %s1095 = sand.u32 %s300, 1
          %s1096 = smul.addr %s1095, 8
          %s1097 = scalar_lea.vmem [#allocation18], %s1096
          %1099 = dma.done %s1094, 128
        $region116: #{tpu_custom_call.1} parent=107 // pred_fallthru
          _
      $region108: #{tpu_custom_call.1} parent=5 // pred_fallthru
        _
    $region6: #{tpu_custom_call.1} parent=1 // loop_footer
      %s35 = sadd.s32 1, %s31
    $region7: #{tpu_custom_call.1} parent=1 // loop_footer_branch
      %30 = sbr.rel target = $region3
    $region8: #{tpu_custom_call.1} parent=1 // loop_exit
      _
    %1100 = vsyncpa [#allocation5], 1
    %s1101 = scalar_lea.sflag [#allocation5], 1
    %1102 = vsyncpa %s1101, 1
    %1103 = vsyncpa [#allocation9], 1
    %1104 = vsyncpa [#allocation12], 1
    %1105 = vsyncpa [#allocation16], 1
    %1106 = vsyncpa [#allocation6], 1
    %s1107 = scalar_lea.sflag [#allocation6], 1
    %1108 = vsyncpa %s1107, 1
    %1109 = vsyncpa [#allocation19], 1
    %s1110 = scalar_lea.sflag [#allocation19], 1
    %1111 = vsyncpa %s1110, 1
    %1112 = vsyncpa [#allocation7], 1
    %s1113 = scalar_lea.sflag [#allocation7], 1
    %1114 = vsyncpa %s1113, 1

// kernel: tpu_custom_call.1
$region0: #{tpu_custom_call.1}
  #allocation0 [shape = 'u32[]', space=smem, size = 0x4, offset = 0x4, fixed_abs, tag = 'smem constant byte address 0x4 - core index']
  #allocation1 [shape = 'u32[72,128]{1,0:T(1,128)}', space=vmem, size = 0x9000, scoped, tag = 'internal scratch']
  #allocation2 [shape = 'bf16[8,32]{1,0:T(8,128)(2,1)}', space=vmem, size = 0x800, scoped, tag = 'scratch operand']
  #allocation3 [shape = 'f32[8,32]{1,0:T(8,128)}', space=vmem, size = 0x1000, scoped, tag = 'scratch operand']
  %s0 = inlined_call_operand.hbm [shape: f32[2,8,32], index: 0, kind: input, shape index: {}]
  %s1 = inlined_call_operand.hbm [shape: f32[1,32], index: 1, kind: input, shape index: {}]
  %s2 = inlined_call_operand.vmem [shape: f32[1,32], index: 2, kind: input, shape index: {}]
  %s3 = inlined_call_operand.hbm [shape: bf16[2,32,32], index: 3, kind: input, shape index: {}]
  %s4 = inlined_call_operand.hbm [shape: bf16[2,32,32], index: 4, kind: input, shape index: {}]
  %s5 = inlined_call_operand.hbm [shape: bf16[2,32,32], index: 5, kind: input, shape index: {}]
  %s6 = inlined_call_operand.vmem [shape: f32[1,4], index: 6, kind: input, shape index: {}]
  %s7 = inlined_call_operand.vmem [shape: f32[1,16], index: 7, kind: input, shape index: {}]
  %s8 = inlined_call_operand.vmem [shape: f32[1,16], index: 8, kind: input, shape index: {}]
  %s9 = inlined_call_operand.hbm [shape: bf16[2,32,32], index: 9, kind: input, shape index: {}]
  %s10 = inlined_call_operand.hbm [shape: bf16[2,8,32], index: 10, kind: output, shape index: {0}]
  %s11 = inlined_call_operand.hbm [shape: bf16[2,4,8,8], index: 11, kind: output, shape index: {1}]
  %12 = xla_tuple %s10, %s11
  %s13 = sld [smem:[#allocation0]]
  $region117: #{tpu_custom_call.1} parent=0
    _
  %s15 = ssub.s32 1, %s13
  %s16 = scalar_select 0, %s15, %s13
  $region1: #{tpu_custom_call.1} parent=0
    #allocation4 [shape = 'u8[8192]{0}', space=vmem, size = 0x2000, scoped, tag = 'input window, operand 0']
    #allocation5 [shape = 's32[2]{0}', space=sflag, size = 0x8, scoped, tag = 'scoped memory for tpu_custom_call.1']
    #allocation6 [shape = 's32[2]{0}', space=sflag, size = 0x8, scoped, tag = 'scoped memory for tpu_custom_call.1']
    #allocation7 [shape = 's32[2]{0}', space=sflag, size = 0x8, scoped, tag = 'scoped memory for tpu_custom_call.1']
    #allocation8 [shape = 'u8[512]{0}', space=vmem, size = 0x400, scoped, tag = 'input window, operand 1, single buffered']
    #allocation9 [shape = 's32[1]{0}', space=sflag, size = 0x4, scoped, tag = 'scoped memory for tpu_custom_call.1']
    #allocation10 [shape = 'u8[16384]{0}', space=vmem, size = 0x4000, scoped, tag = 'input window, operand 3, single buffered']
    #allocation11 [shape = 'u8[16384]{0}', space=vmem, size = 0x4000, scoped, tag = 'input window, operand 4, single buffered']
    #allocation12 [shape = 's32[1]{0}', space=sflag, size = 0x4, scoped, tag = 'scoped memory for tpu_custom_call.1']
    #allocation13 [shape = 'u8[16384]{0}', space=vmem, size = 0x4000, scoped, tag = 'input window, operand 5, single buffered']
    #allocation14 [shape = 'u8[512]{0}', space=smem, size = 0x200, scoped, tag = 'input window, operand 6, single buffered']
    #allocation15 [shape = 'u8[16384]{0}', space=vmem, size = 0x4000, scoped, tag = 'input window, operand 9, single buffered']
    #allocation16 [shape = 's32[1]{0}', space=sflag, size = 0x4, scoped, tag = 'scoped memory for tpu_custom_call.1']
    #allocation17 [shape = 'u8[4096]{0}', space=vmem, size = 0x1000, scoped, tag = 'output window, operand 0']
    #allocation18 [shape = 'u8[8192]{0}', space=vmem, size = 0x2000, scoped, tag = 'output window, operand 1']
    #allocation19 [shape = 's32[2]{0}', space=sflag, size = 0x8, scoped, tag = 'scoped memory for tpu_custom_call.1']
    %17 = vsyncpa [#allocation5], 0
    %s18 = scalar_lea.sflag [#allocation5], 1
    %19 = vsyncpa %s18, 0
    %20 = vsyncpa [#allocation9], 0
    %21 = vsyncpa [#allocation12], 0
    %22 = vsyncpa [#allocation7], 0
    %23 = vsyncpa [#allocation16], 0
    %24 = vsyncpa [#allocation6], 0
    %s25 = scalar_lea.sflag [#allocation6], 1
    %26 = vsyncpa %s25, 0
    %27 = vsyncpa [#allocation19], 0
    %s28 = scalar_lea.sflag [#allocation19], 1
    %29 = vsyncpa %s28, 0
    loop: start=0, step=1, limit=6
    $region2: #{tpu_custom_call.1} parent=1 // loop_pre_header
      _
    $region3: #{tpu_custom_call.1} parent=1 // loop_header
      %s31 = sphi 0, %s35
      %p32 = scmp.ge.s32.totalorder %s31, 6
      %s38 = sphi 0, %s50
      %s39 = sphi 0, %s46
      %s40 = sphi 0, %s38
      %s41 = sphi 0, %s39
      %s42 = sphi 0, %s40
      %s43 = sphi 0, %s41
      %s53 = sphi 0, %s55
      %s56 = sphi 0, %s53
      %s57 = sphi 0, %s56
      %s73 = sphi 0, %s57
      %s77 = sphi 0, %s77
      %s79 = sphi 0, %s77
      %s80 = sphi 0, %s79
      %s94 = sphi 0, %s80
      %s98 = sphi 0, %s98
      %s100 = sphi 0, %s98
      %s101 = sphi 0, %s100
      %s115 = sphi 0, %s101
      %s119 = sphi 0, %s119
      %s121 = sphi 0, %s119
      %s122 = sphi 0, %s121
      %s136 = sphi 0, %s122
      %s140 = sphi 0, %s140
      %s142 = sphi 0, %s140
      %s143 = sphi 0, %s142
      %s157 = sphi 0, %s143
      %s161 = sphi 0, %s161
      %s163 = sphi 0, %s161
      %s164 = sphi 0, %s163
      %s178 = sphi 0, %s164
      %s182 = sphi 0, %s182
      %s184 = sphi 0, %s182
      %s185 = sphi 0, %s184
      %s199 = sphi 0, %s185
      %s203 = sphi 0, %s203
      %s205 = sphi 0, %s203
      %s206 = sphi 0, %s205
      %s220 = sphi 0, %s206
      %s224 = sphi 0, %s224
      %s226 = sphi 0, %s224
      %s227 = sphi 0, %s226
      %s241 = sphi 0, %s227
      %s245 = sphi 0, %s245
      %s247 = sphi 0, %s245
      %s248 = sphi 0, %s247
      %s262 = sphi 0, %s248
      %s268 = sphi 0, %s270
      %s271 = sphi 0, %s268
      %s272 = sphi 0, %s271
      %s288 = sphi 0, %s272
      %s296 = sphi 0, %s298
      %s299 = sphi 0, %s296
      %s300 = sphi 0, %s299
      %s316 = sphi 0, %s300
    $region4: #{tpu_custom_call.1} parent=1 // loop_header_branch
      %34 = sbr.rel (%p32) target = $region8
    $region5: #{tpu_custom_call.1} parent=1 // loop_body
      %s36 = ssub.s32 %s31, 1
      %s37 = ssub.s32 %s31, 2
      %s44 = sadd.s32 1, %s39
      %p45 = scmp.ge.s32.totalorder %s44, 2
      %s46 = scalar_select %p45, 0, %s44
      %s47 = sadd.s32 1, %s38
      %s48 = scalar_select %p45, %s47, %s38
      %p49 = scmp.ge.s32.totalorder %s48, 2
      %s50 = scalar_select %p49, 0, %s48
      %s51 = ssub.s32 %s38, %s50
      %p52 = scmp.eq.s32.totalorder %s51, 0
      %s54 = sadd.s32 %s53, 1
      %s55 = scalar_select %p52, %s53, %s54
      %p58 = pneg %p52
      %p59 = scmp.eq.s32.totalorder %s31, 3
      %p60 = por %p58, %p59
      %p61 = scmp.ne.s32.totalorder %s53, %s56
      %p62 = scmp.eq.s32.totalorder %s31, 0
      %p63 = por %p61, %p62
      %p64 = scmp.ne.s32.totalorder %s53, %s56
      %p65 = scmp.eq.s32.totalorder %s36, 3
      %p66 = por %p64, %p65
      %p67 = scmp.ne.s32.totalorder %s56, %s57
      %p68 = scmp.eq.s32.totalorder %s36, 0
      %p69 = por %p67, %p68
      %p70 = scmp.ne.s32.totalorder %s56, %s57
      %p71 = scmp.eq.s32.totalorder %s37, 3
      %p72 = por %p70, %p71
      %p74 = scmp.ne.s32.totalorder %s57, %s73
      %p75 = scmp.eq.s32.totalorder %s37, 0
      %p76 = por %p74, %p75
      %s78 = sadd.s32 %s77, 1
      %p81 = scmp.eq.s32.totalorder %s31, 3
      %p82 = scmp.ne.s32.totalorder %s77, %s79
      %p83 = scmp.eq.s32.totalorder %s31, 0
      %p84 = por %p82, %p83
      %p85 = scmp.ne.s32.totalorder %s77, %s79
      %p86 = scmp.eq.s32.totalorder %s36, 3
      %p87 = por %p85, %p86
      %p88 = scmp.ne.s32.totalorder %s79, %s80
      %p89 = scmp.eq.s32.totalorder %s36, 0
      %p90 = por %p88, %p89
      %p91 = scmp.ne.s32.totalorder %s79, %s80
      %p92 = scmp.eq.s32.totalorder %s37, 3
      %p93 = por %p91, %p92
      %p95 = scmp.ne.s32.totalorder %s80, %s94
      %p96 = scmp.eq.s32.totalorder %s37, 0
      %p97 = por %p95, %p96
      %s99 = sadd.s32 %s98, 1
      %p102 = scmp.eq.s32.totalorder %s31, 3
      %p103 = scmp.ne.s32.totalorder %s98, %s100
      %p104 = scmp.eq.s32.totalorder %s31, 0
      %p105 = por %p103, %p104
      %p106 = scmp.ne.s32.totalorder %s98, %s100
      %p107 = scmp.eq.s32.totalorder %s36, 3
      %p108 = por %p106, %p107
      %p109 = scmp.ne.s32.totalorder %s100, %s101
      %p110 = scmp.eq.s32.totalorder %s36, 0
      %p111 = por %p109, %p110
      %p112 = scmp.ne.s32.totalorder %s100, %s101
      %p113 = scmp.eq.s32.totalorder %s37, 3
      %p114 = por %p112, %p113
      %p116 = scmp.ne.s32.totalorder %s101, %s115
      %p117 = scmp.eq.s32.totalorder %s37, 0
      %p118 = por %p116, %p117
      %s120 = sadd.s32 %s119, 1
      %p123 = scmp.eq.s32.totalorder %s31, 3
      %p124 = scmp.ne.s32.totalorder %s119, %s121
      %p125 = scmp.eq.s32.totalorder %s31, 0
      %p126 = por %p124, %p125
      %p127 = scmp.ne.s32.totalorder %s119, %s121
      %p128 = scmp.eq.s32.totalorder %s36, 3
      %p129 = por %p127, %p128
      %p130 = scmp.ne.s32.totalorder %s121, %s122
      %p131 = scmp.eq.s32.totalorder %s36, 0
      %p132 = por %p130, %p131
      %p133 = scmp.ne.s32.totalorder %s121, %s122
      %p134 = scmp.eq.s32.totalorder %s37, 3
      %p135 = por %p133, %p134
      %p137 = scmp.ne.s32.totalorder %s122, %s136
      %p138 = scmp.eq.s32.totalorder %s37, 0
      %p139 = por %p137, %p138
      %s141 = sadd.s32 %s140, 1
      %p144 = scmp.eq.s32.totalorder %s31, 3
      %p145 = scmp.ne.s32.totalorder %s140, %s142
      %p146 = scmp.eq.s32.totalorder %s31, 0
      %p147 = por %p145, %p146
      %p148 = scmp.ne.s32.totalorder %s140, %s142
      %p149 = scmp.eq.s32.totalorder %s36, 3
      %p150 = por %p148, %p149
      %p151 = scmp.ne.s32.totalorder %s142, %s143
      %p152 = scmp.eq.s32.totalorder %s36, 0
      %p153 = por %p151, %p152
      %p154 = scmp.ne.s32.totalorder %s142, %s143
      %p155 = scmp.eq.s32.totalorder %s37, 3
      %p156 = por %p154, %p155
      %p158 = scmp.ne.s32.totalorder %s143, %s157
      %p159 = scmp.eq.s32.totalorder %s37, 0
      %p160 = por %p158, %p159
      %s162 = sadd.s32 %s161, 1
      %p165 = scmp.eq.s32.totalorder %s31, 3
      %p166 = scmp.ne.s32.totalorder %s161, %s163
      %p167 = scmp.eq.s32.totalorder %s31, 0
      %p168 = por %p166, %p167
      %p169 = scmp.ne.s32.totalorder %s161, %s163
      %p170 = scmp.eq.s32.totalorder %s36, 3
      %p171 = por %p169, %p170
      %p172 = scmp.ne.s32.totalorder %s163, %s164
      %p173 = scmp.eq.s32.totalorder %s36, 0
      %p174 = por %p172, %p173
      %p175 = scmp.ne.s32.totalorder %s163, %s164
      %p176 = scmp.eq.s32.totalorder %s37, 3
      %p177 = por %p175, %p176
      %p179 = scmp.ne.s32.totalorder %s164, %s178
      %p180 = scmp.eq.s32.totalorder %s37, 0
      %p181 = por %p179, %p180
      %s183 = sadd.s32 %s182, 1
      %p186 = scmp.eq.s32.totalorder %s31, 3
      %p187 = scmp.ne.s32.totalorder %s182, %s184
      %p188 = scmp.eq.s32.totalorder %s31, 0
      %p189 = por %p187, %p188
      %p190 = scmp.ne.s32.totalorder %s182, %s184
      %p191 = scmp.eq.s32.totalorder %s36, 3
      %p192 = por %p190, %p191
      %p193 = scmp.ne.s32.totalorder %s184, %s185
      %p194 = scmp.eq.s32.totalorder %s36, 0
      %p195 = por %p193, %p194
      %p196 = scmp.ne.s32.totalorder %s184, %s185
      %p197 = scmp.eq.s32.totalorder %s37, 3
      %p198 = por %p196, %p197
      %p200 = scmp.ne.s32.totalorder %s185, %s199
      %p201 = scmp.eq.s32.totalorder %s37, 0
      %p202 = por %p200, %p201
      %s204 = sadd.s32 %s203, 1
      %p207 = scmp.eq.s32.totalorder %s31, 3
      %p208 = scmp.ne.s32.totalorder %s203, %s205
      %p209 = scmp.eq.s32.totalorder %s31, 0
      %p210 = por %p208, %p209
      %p211 = scmp.ne.s32.totalorder %s203, %s205
      %p212 = scmp.eq.s32.totalorder %s36, 3
      %p213 = por %p211, %p212
      %p214 = scmp.ne.s32.totalorder %s205, %s206
      %p215 = scmp.eq.s32.totalorder %s36, 0
      %p216 = por %p214, %p215
      %p217 = scmp.ne.s32.totalorder %s205, %s206
      %p218 = scmp.eq.s32.totalorder %s37, 3
      %p219 = por %p217, %p218
      %p221 = scmp.ne.s32.totalorder %s206, %s220
      %p222 = scmp.eq.s32.totalorder %s37, 0
      %p223 = por %p221, %p222
      %s225 = sadd.s32 %s224, 1
      %p228 = scmp.eq.s32.totalorder %s31, 3
      %p229 = scmp.ne.s32.totalorder %s224, %s226
      %p230 = scmp.eq.s32.totalorder %s31, 0
      %p231 = por %p229, %p230
      %p232 = scmp.ne.s32.totalorder %s224, %s226
      %p233 = scmp.eq.s32.totalorder %s36, 3
      %p234 = por %p232, %p233
      %p235 = scmp.ne.s32.totalorder %s226, %s227
      %p236 = scmp.eq.s32.totalorder %s36, 0
      %p237 = por %p235, %p236
      %p238 = scmp.ne.s32.totalorder %s226, %s227
      %p239 = scmp.eq.s32.totalorder %s37, 3
      %p240 = por %p238, %p239
      %p242 = scmp.ne.s32.totalorder %s227, %s241
      %p243 = scmp.eq.s32.totalorder %s37, 0
      %p244 = por %p242, %p243
      %s246 = sadd.s32 %s245, 1
      %p249 = scmp.eq.s32.totalorder %s31, 3
      %p250 = scmp.ne.s32.totalorder %s245, %s247
      %p251 = scmp.eq.s32.totalorder %s31, 0
      %p252 = por %p250, %p251
      %p253 = scmp.ne.s32.totalorder %s245, %s247
      %p254 = scmp.eq.s32.totalorder %s36, 3
      %p255 = por %p253, %p254
      %p256 = scmp.ne.s32.totalorder %s247, %s248
      %p257 = scmp.eq.s32.totalorder %s36, 0
      %p258 = por %p256, %p257
      %p259 = scmp.ne.s32.totalorder %s247, %s248
      %p260 = scmp.eq.s32.totalorder %s37, 3
      %p261 = por %p259, %p260
      %p263 = scmp.ne.s32.totalorder %s248, %s262
      %p264 = scmp.eq.s32.totalorder %s37, 0
      %p265 = por %p263, %p264
      %s266 = ssub.s32 %s38, %s50
      %p267 = scmp.eq.s32.totalorder %s266, 0
      %s269 = sadd.s32 %s268, 1
      %s270 = scalar_select %p267, %s268, %s269
      %p273 = pneg %p267
      %p274 = scmp.eq.s32.totalorder %s31, 3
      %p275 = por %p273, %p274
      %p276 = scmp.ne.s32.totalorder %s268, %s271
      %p277 = scmp.eq.s32.totalorder %s31, 0
      %p278 = por %p276, %p277
      %p279 = scmp.ne.s32.totalorder %s268, %s271
      %p280 = scmp.eq.s32.totalorder %s36, 3
      %p281 = por %p279, %p280
      %p282 = scmp.ne.s32.totalorder %s271, %s272
      %p283 = scmp.eq.s32.totalorder %s36, 0
      %p284 = por %p282, %p283
      %p285 = scmp.ne.s32.totalorder %s271, %s272
      %p286 = scmp.eq.s32.totalorder %s37, 3
      %p287 = por %p285, %p286
      %p289 = scmp.ne.s32.totalorder %s272, %s288
      %p290 = scmp.eq.s32.totalorder %s37, 0
      %p291 = por %p289, %p290
      %s292 = ssub.s32 %s38, %s50
      %s293 = ssub.s32 %s39, %s46
      %s294 = sor.u32 %s292, %s293
      %p295 = scmp.eq.s32.totalorder %s294, 0
      %s297 = sadd.s32 %s296, 1
      %s298 = scalar_select %p295, %s296, %s297
      %p301 = pneg %p295
      %p302 = scmp.eq.s32.totalorder %s31, 3
      %p303 = por %p301, %p302
      %p304 = scmp.ne.s32.totalorder %s296, %s299
      %p305 = scmp.eq.s32.totalorder %s31, 0
      %p306 = por %p304, %p305
      %p307 = scmp.ne.s32.totalorder %s296, %s299
      %p308 = scmp.eq.s32.totalorder %s36, 3
      %p309 = por %p307, %p308
      %p310 = scmp.ne.s32.totalorder %s299, %s300
      %p311 = scmp.eq.s32.totalorder %s36, 0
      %p312 = por %p310, %p311
      %p313 = scmp.ne.s32.totalorder %s299, %s300
      %p314 = scmp.eq.s32.totalorder %s37, 3
      %p315 = por %p313, %p314
      %p317 = scmp.ne.s32.totalorder %s300, %s316
      %p318 = scmp.eq.s32.totalorder %s37, 0
      %p319 = por %p317, %p318
      %p320 = scmp.le.s32.totalorder 1, %s31
      %p321 = scmp.lt.s32.totalorder %s31, 5
      %p322 = pnand %p320, %p321
      %p323 = pneg %p322
      // Predicated region
      $region9: #{tpu_custom_call.1} parent=5 // pred_check
        _
      $region10: #{tpu_custom_call.1} parent=5 // pred_check_branch
        %325 = sbr.rel (%p322) target = $region12
      $region11: #{tpu_custom_call.1} parent=5 // pred_region
        %s326 = ssub.s32 %s31, 1
        // Predicated region
        $region13: #{tpu_custom_call.1} parent=11 // pred_check
          %p327 = pneg %p90
        $region14: #{tpu_custom_call.1} parent=11 // pred_check_branch
          %329 = sbr.rel (%p327) target = $region16
        $region15: #{tpu_custom_call.1} parent=11 // pred_region
          %331 = vsyncadd [#allocation9], 0
          %s333 = sshll.u32 %s1, 4
          %s334 = int_to_ptr.hbm [resolvable:$true] %s333
          %s335 = sshll.u32 [#allocation8], 4
          %s336 = int_to_ptr.vmem [resolvable:$true] %s335
          %338 = dma.hbm_to_vmem [thread:$0]  %s334, 16, %s336, [#allocation9]
        $region16: #{tpu_custom_call.1} parent=11 // pred_fallthru
          _
        // Predicated region
        $region17: #{tpu_custom_call.1} parent=11 // pred_check
          %p339 = pneg %p111
        $region18: #{tpu_custom_call.1} parent=11 // pred_check_branch
          %341 = sbr.rel (%p339) target = $region20
        $region19: #{tpu_custom_call.1} parent=11 // pred_region
          _
        $region20: #{tpu_custom_call.1} parent=11 // pred_fallthru
          _
        // Predicated region
        $region21: #{tpu_custom_call.1} parent=11 // pred_check
          %p342 = pneg %p132
        $region22: #{tpu_custom_call.1} parent=11 // pred_check_branch
          %344 = sbr.rel (%p342) target = $region24
        $region23: #{tpu_custom_call.1} parent=11 // pred_region
          %346 = vsyncadd [#allocation9], 0
          %s347 = sshll.u32 %s3, 4
          %s348 = int_to_ptr.hbm [resolvable:$true] %s347
          %s349 = sshll.u32 [#allocation10], 4
          %s350 = int_to_ptr.vmem [resolvable:$true] %s349
          %355 = dma.hbm_to_vmem [thread:$0]  %s348, 512, %s350, [#allocation9], 64, 64, 4
        $region24: #{tpu_custom_call.1} parent=11 // pred_fallthru
          _
        // Predicated region
        $region25: #{tpu_custom_call.1} parent=11 // pred_check
          %p356 = pneg %p153
        $region26: #{tpu_custom_call.1} parent=11 // pred_check_branch
          %358 = sbr.rel (%p356) target = $region28
        $region27: #{tpu_custom_call.1} parent=11 // pred_region
          %360 = vsyncadd [#allocation12], 0
          %s361 = sshll.u32 %s4, 4
          %s362 = int_to_ptr.hbm [resolvable:$true] %s361
          %s363 = sshll.u32 [#allocation11], 4
          %s364 = int_to_ptr.vmem [resolvable:$true] %s363
          %369 = dma.hbm_to_vmem [thread:$0]  %s362, 512, %s364, [#allocation12], 64, 64, 4
        $region28: #{tpu_custom_call.1} parent=11 // pred_fallthru
          _
        // Predicated region
        $region29: #{tpu_custom_call.1} parent=11 // pred_check
          %p370 = pneg %p174
        $region30: #{tpu_custom_call.1} parent=11 // pred_check_branch
          %372 = sbr.rel (%p370) target = $region32
        $region31: #{tpu_custom_call.1} parent=11 // pred_region
          %374 = vsyncadd [#allocation12], 0
          %s375 = sshll.u32 %s5, 4
          %s376 = int_to_ptr.hbm [resolvable:$true] %s375
          %s377 = sshll.u32 [#allocation13], 4
          %s378 = int_to_ptr.vmem [resolvable:$true] %s377
          %383 = dma.hbm_to_vmem [thread:$0]  %s376, 512, %s378, [#allocation12], 64, 64, 4
        $region32: #{tpu_custom_call.1} parent=11 // pred_fallthru
          _
        // Predicated region
        $region33: #{tpu_custom_call.1} parent=11 // pred_check
          %p384 = pneg %p195
        $region34: #{tpu_custom_call.1} parent=11 // pred_check_branch
          %386 = sbr.rel (%p384) target = $region36
        $region35: #{tpu_custom_call.1} parent=11 // pred_region
          %388 = vsyncadd [#allocation7], 0
          %s390 = sshll.u32 %s6, 4
          %s391 = int_to_ptr.vmem [resolvable:$true] %s390
          %393 = dma.vmem_to_smem %s391, 16, [#allocation14], [#allocation7]
        $region36: #{tpu_custom_call.1} parent=11 // pred_fallthru
          _
        // Predicated region
        $region37: #{tpu_custom_call.1} parent=11 // pred_check
          %p394 = pneg %p216
        $region38: #{tpu_custom_call.1} parent=11 // pred_check_branch
          %396 = sbr.rel (%p394) target = $region40
        $region39: #{tpu_custom_call.1} parent=11 // pred_region
          _
        $region40: #{tpu_custom_call.1} parent=11 // pred_fallthru
          _
        // Predicated region
        $region41: #{tpu_custom_call.1} parent=11 // pred_check
          %p397 = pneg %p237
        $region42: #{tpu_custom_call.1} parent=11 // pred_check_branch
          %399 = sbr.rel (%p397) target = $region44
        $region43: #{tpu_custom_call.1} parent=11 // pred_region
          _
        $region44: #{tpu_custom_call.1} parent=11 // pred_fallthru
          _
        // Predicated region
        $region45: #{tpu_custom_call.1} parent=11 // pred_check
          %p400 = pneg %p258
        $region46: #{tpu_custom_call.1} parent=11 // pred_check_branch
          %402 = sbr.rel (%p400) target = $region48
        $region47: #{tpu_custom_call.1} parent=11 // pred_region
          %404 = vsyncadd [#allocation16], 0
          %s405 = sshll.u32 %s9, 4
          %s406 = int_to_ptr.hbm [resolvable:$true] %s405
          %s407 = sshll.u32 [#allocation15], 4
          %s408 = int_to_ptr.vmem [resolvable:$true] %s407
          %413 = dma.hbm_to_vmem [thread:$0]  %s406, 512, %s408, [#allocation16], 64, 64, 4
        $region48: #{tpu_custom_call.1} parent=11 // pred_fallthru
          _
      $region12: #{tpu_custom_call.1} parent=5 // pred_fallthru
        _
      %p414 = scmp.lt.s32.totalorder %s31, 4
      // Predicated region
      $region49: #{tpu_custom_call.1} parent=5 // pred_check
        %p415 = pneg %p414
      $region50: #{tpu_custom_call.1} parent=5 // pred_check_branch
        %417 = sbr.rel (%p415) target = $region52
      $region51: #{tpu_custom_call.1} parent=5 // pred_region
        // Predicated region
        $region53: #{tpu_custom_call.1} parent=51 // pred_check
          %p418 = pneg %p63
        $region54: #{tpu_custom_call.1} parent=51 // pred_check_branch
          %420 = sbr.rel (%p418) target = $region56
        $region55: #{tpu_custom_call.1} parent=51 // pred_region
          %s421 = sand.u32 %s53, 1
          %s422 = scalar_lea.sflag [#allocation5], %s421
          %s423 = sand.u32 %s53, 1
          %s424 = smul.addr %s423, 8
          %s425 = scalar_lea.vmem [#allocation4], %s424
          %427 = vsyncadd %s422, 0
          %s428 = smul.addr %s38, 8
          %s429 = scalar_lea.hbm %s0, %s428
          %s431 = sshll.u32 %s429, 4
          %s432 = int_to_ptr.hbm [resolvable:$true] %s431
          %s433 = sshll.u32 %s425, 4
          %s434 = int_to_ptr.vmem [resolvable:$true] %s433
          %436 = dma.hbm_to_vmem [thread:$0]  %s432, 128, %s434, %s422
        $region56: #{tpu_custom_call.1} parent=51 // pred_fallthru
          _
      $region52: #{tpu_custom_call.1} parent=5 // pred_fallthru
        _
      %p437 = scmp.le.s32.totalorder 1, %s31
      %p438 = scmp.lt.s32.totalorder %s31, 5
      %p439 = pnand %p437, %p438
      %p440 = pneg %p439
      // Predicated region
      $region57: #{tpu_custom_call.1} parent=5 // pred_check
        _
      $region58: #{tpu_custom_call.1} parent=5 // pred_check_branch
        %442 = sbr.rel (%p439) target = $region60
      $region59: #{tpu_custom_call.1} parent=5 // pred_region
        %s443 = ssub.s32 %s31, 1
        %s444 = sand.u32 %s56, 1
        %s445 = scalar_lea.sflag [#allocation5], %s444
        %s446 = sand.u32 %s56, 1
        %s447 = smul.addr %s446, 8
        %s448 = scalar_lea.vmem [#allocation4], %s447
        // Predicated region
        $region61: #{tpu_custom_call.1} parent=59 // pred_check
          %p449 = pneg %p69
        $region62: #{tpu_custom_call.1} parent=59 // pred_check_branch
          %451 = sbr.rel (%p449) target = $region64
        $region63: #{tpu_custom_call.1} parent=59 // pred_region
          %453 = dma.done %s445, 128
        $region64: #{tpu_custom_call.1} parent=59 // pred_fallthru
          _
        // Predicated region
        $region65: #{tpu_custom_call.1} parent=59 // pred_check
          %p454 = pneg %p90
        $region66: #{tpu_custom_call.1} parent=59 // pred_check_branch
          %456 = sbr.rel (%p454) target = $region68
        $region67: #{tpu_custom_call.1} parent=59 // pred_region
          %458 = dma.done [#allocation9], 16
        $region68: #{tpu_custom_call.1} parent=59 // pred_fallthru
          _
        // Predicated region
        $region69: #{tpu_custom_call.1} parent=59 // pred_check
          %p459 = pneg %p132
        $region70: #{tpu_custom_call.1} parent=59 // pred_check_branch
          %461 = sbr.rel (%p459) target = $region72
        $region71: #{tpu_custom_call.1} parent=59 // pred_region
          %463 = dma.done [#allocation9], 512
        $region72: #{tpu_custom_call.1} parent=59 // pred_fallthru
          _
        // Predicated region
        $region73: #{tpu_custom_call.1} parent=59 // pred_check
          %p464 = pneg %p153
        $region74: #{tpu_custom_call.1} parent=59 // pred_check_branch
          %466 = sbr.rel (%p464) target = $region76
        $region75: #{tpu_custom_call.1} parent=59 // pred_region
          %468 = dma.done [#allocation12], 512
        $region76: #{tpu_custom_call.1} parent=59 // pred_fallthru
          _
        // Predicated region
        $region77: #{tpu_custom_call.1} parent=59 // pred_check
          %p469 = pneg %p174
        $region78: #{tpu_custom_call.1} parent=59 // pred_check_branch
          %471 = sbr.rel (%p469) target = $region80
        $region79: #{tpu_custom_call.1} parent=59 // pred_region
          %473 = dma.done [#allocation12], 512
        $region80: #{tpu_custom_call.1} parent=59 // pred_fallthru
          _
        // Predicated region
        $region81: #{tpu_custom_call.1} parent=59 // pred_check
          %p474 = pneg %p195
        $region82: #{tpu_custom_call.1} parent=59 // pred_check_branch
          %476 = sbr.rel (%p474) target = $region84
        $region83: #{tpu_custom_call.1} parent=59 // pred_region
          %478 = dma.done [#allocation7], 16
        $region84: #{tpu_custom_call.1} parent=59 // pred_fallthru
          _
        // Predicated region
        $region85: #{tpu_custom_call.1} parent=59 // pred_check
          %p479 = pneg %p258
        $region86: #{tpu_custom_call.1} parent=59 // pred_check_branch
          %481 = sbr.rel (%p479) target = $region88
        $region87: #{tpu_custom_call.1} parent=59 // pred_region
          %483 = dma.done [#allocation16], 512
        $region88: #{tpu_custom_call.1} parent=59 // pred_fallthru
          _
        %484 = sfence
        %s485 = sand.u32 %s56, 1
        %s486 = scalar_lea.sflag [#allocation5], %s485
        %s487 = sand.u32 %s56, 1
        %s488 = smul.addr %s487, 8
        %s489 = scalar_lea.vmem [#allocation4], %s488
        %p490 = pneg %p69
        %p491 = pneg %p66
        %p492 = pneg %p90
        %p493 = pneg %p87
        %p494 = pneg %p111
        %p495 = pneg %p108
        %p496 = pneg %p132
        %p497 = pneg %p129
        %p498 = pneg %p153
        %p499 = pneg %p150
        %p500 = pneg %p174
        %p501 = pneg %p171
        %p502 = pneg %p195
        %p503 = pneg %p192
        %p504 = pneg %p216
        %p505 = pneg %p213
        %p506 = pneg %p237
        %p507 = pneg %p234
        %p508 = pneg %p258
        %p509 = pneg %p255
        %p510 = pneg %p284
        %p511 = pneg %p281
        %s512 = sand.u32 %s271, 1
        %s513 = scalar_lea.sflag [#allocation6], %s512
        %s514 = sand.u32 %s271, 1
        %s515 = smul.addr %s514, 4
        %s516 = scalar_lea.vmem [#allocation17], %s515
        %p517 = pneg %p312
        %p518 = pneg %p309
        %s519 = sand.u32 %s299, 1
        %s520 = scalar_lea.sflag [#allocation19], %s519
        %s521 = sand.u32 %s299, 1
        %s522 = smul.addr %s521, 8
        %s523 = scalar_lea.vmem [#allocation18], %s522
        %s524 = smul.u32 2, %s41
        %p526 = scmp.eq.s32.totalorder %s41, 0
        // Predicated region
        $region89: #{tpu_custom_call.1} parent=59 // pred_check
          %p527 = pneg %p526
        $region90: #{tpu_custom_call.1} parent=59 // pred_check_branch
          %529 = sbr.rel (%p527) target = $region92
        $region91: #{tpu_custom_call.1} parent=59 // pred_region
          %v530 = vld [vmem:[%s448] sm:$0xff]
          %v531 = vld [vmem:[#allocation8] sm:$0x1]
          %v532 = vld [vmem:[%s2] sm:$0x1]
          %vm533 = vcmask 261120
          %v534 = vsel %vm533, %v530, 0.0
          %535 = vadd.xlane.f32.xlu0 %v534
          %v536 = vpop.xlane.xlu0 %535
          %v537 = vrcp.pop 32.0
          %v538 = vmul.f32 32.0, %v537
          %v539 = vsub.f32 1.0, %v538
          %v540 = vmul.f32 %v537, %v539
          %v541 = vadd.f32 %v537, %v540
          %vm542 = vweird.f32 %v537
          %v543 = vsel %vm542, %v537, %v541
          %v544 = vmul.f32 %v536, %v543
          %v545 = vsub.f32 %v530, %v544
          %v546 = vmul.f32 %v545, %v545
          %v547 = vsel %vm533, %v546, 0.0
          %548 = vadd.xlane.f32.xlu0 %v547
          %v549 = vpop.xlane.xlu0 %548
          %v550 = vmul.f32 %v549, %v543
          %v551 = vadd.f32 %v550, 1e-05
          %v552 = vrsqrt.pop %v551
          %v553 = vmul.f32 %v552, %v551
          %v554 = vmul.f32 %v553, %v552
          %v555 = vmul.f32 0.5, %v554
          %v556 = vsub.f32 1.5, %v555
          %v557 = vmul.f32 %v552, %v556
          %vm558 = vweird.f32 %v551
          %vm559 = vweird.f32 %v552
          %vm560 = vmor %vm558, %vm559
          %v561 = vsel %vm560, %v552, %v557
          %v562 = vmul.f32 %v545, %v561
          %v564 = vperm.slane %v531, 0
          %v566 = vmul.f32 %v562, %v564
          %v568 = vperm.slane %v532, 0
          %v570 = vadd.f32 %v566, %v568
          %v571 = vpack.c.bf16 %v570, %v570
          %vm572 = vcmask 257024
          %573 = vst.msk [vmem:[#allocation2] sm:$0xf] %vm572, %v571
          %574 = vst.msk [vmem:[#allocation3] sm:$0xff] %vm533, 0.0
        $region92: #{tpu_custom_call.1} parent=59 // pred_fallthru
          _
        %v575 = vld [vmem:[#allocation2] sm:$0xf]
        %s576 = smul.u32 %s41, 4
        %s577 = smul.addr %s576, 4
        %s578 = scalar_lea.vmem [#allocation10], %s577
        %v579 = vld [vmem:[%s578] sm:$0xf]
        %v580 = vld [vmem:[%s578 + $0x4] sm:$0xf]
        %v581 = vld [vmem:[%s578 + $0x8] sm:$0xf]
        %v582 = vld [vmem:[%s578 + $0xc] sm:$0xf]
        %v587 = vunpack.c.l.b16 %v579
        %v588 = vunpack.c.l.b16 %v580
        %v589 = vunpack.c.l.b16 %v581
        %v590 = vunpack.c.l.b16 %v582
        %v591 = vpack.c.b16 %v588, %v587
        %v592 = vpack.c.b16 %v590, %v589
        %vm595 = vcmask 261120
        %v597 = vsel %vm595, %v575, 0
        %599 = vmatpush.bf16.msra.mxu0 0
        %600 = vmatpush.bf16.msra.mxu0 0
        %601 = vmatpush.bf16.msra.mxu0 0
        %602 = vmatpush.bf16.msra.mxu0 0
        %603 = vmatpush.bf16.msra.mxu0 0
        %604 = vmatpush.bf16.msra.mxu0 0
        %605 = vmatpush.bf16.msra.mxu0 %v592
        %606 = vmatpush.bf16.msra.mxu0 %v591
        %607 = vmatmul.bf16.gmra.mxu0 %v597
        %v608 = vpop.f32.mrf.mxu0
        %v609 = vadd.f32 0.0, %v608
        %v610 = vpop.f32.mrf.mxu0
        %611 = vdwg.mxu0
        %s612 = smul.addr %s576, 4
        %s613 = scalar_lea.vmem [#allocation11], %s612
        %v614 = vld [vmem:[%s613] sm:$0xf]
        %v615 = vld [vmem:[%s613 + $0x4] sm:$0xf]
        %v616 = vld [vmem:[%s613 + $0x8] sm:$0xf]
        %v617 = vld [vmem:[%s613 + $0xc] sm:$0xf]
        %v622 = vunpack.c.l.b16 %v614
        %v623 = vunpack.c.l.b16 %v615
        %v624 = vunpack.c.l.b16 %v616
        %v625 = vunpack.c.l.b16 %v617
        %v626 = vpack.c.b16 %v623, %v622
        %v627 = vpack.c.b16 %v625, %v624
        %630 = vmatpush.bf16.msra.mxu0 0
        %631 = vmatpush.bf16.msra.mxu0 0
        %632 = vmatpush.bf16.msra.mxu0 0
        %633 = vmatpush.bf16.msra.mxu0 0
        %634 = vmatpush.bf16.msra.mxu0 0
        %635 = vmatpush.bf16.msra.mxu0 0
        %636 = vmatpush.bf16.msra.mxu0 %v627
        %637 = vmatpush.bf16.msra.mxu0 %v626
        %638 = vmatmul.bf16.gmra.mxu0 %v597
        %v639 = vpop.f32.mrf.mxu0
        %v640 = vadd.f32 0.0, %v639
        %v641 = vpop.f32.mrf.mxu0
        %642 = vdwg.mxu0
        %s643 = smul.addr %s576, 4
        %s644 = scalar_lea.vmem [#allocation13], %s643
        %v645 = vld [vmem:[%s644] sm:$0xf]
        %v646 = vld [vmem:[%s644 + $0x4] sm:$0xf]
        %v647 = vld [vmem:[%s644 + $0x8] sm:$0xf]
        %v648 = vld [vmem:[%s644 + $0xc] sm:$0xf]
        %v653 = vunpack.c.l.b16 %v645
        %v654 = vunpack.c.l.b16 %v646
        %v655 = vunpack.c.l.b16 %v647
        %v656 = vunpack.c.l.b16 %v648
        %v657 = vpack.c.b16 %v654, %v653
        %v658 = vpack.c.b16 %v656, %v655
        %661 = vmatpush.bf16.msra.mxu0 0
        %662 = vmatpush.bf16.msra.mxu0 0
        %663 = vmatpush.bf16.msra.mxu0 0
        %664 = vmatpush.bf16.msra.mxu0 0
        %665 = vmatpush.bf16.msra.mxu0 0
        %666 = vmatpush.bf16.msra.mxu0 0
        %667 = vmatpush.bf16.msra.mxu0 %v658
        %668 = vmatpush.bf16.msra.mxu0 %v657
        %669 = vmatmul.bf16.gmra.mxu0 %v597
        %v670 = vpop.f32.mrf.mxu0
        %v671 = vadd.f32 0.0, %v670
        %v672 = vpop.f32.mrf.mxu0
        %673 = vdwg.mxu0
        %v674 = vpack.c.bf16 %v609, %v609
        %v675 = vpack.c.bf16 %v640, %v640
        %v676 = vpack.c.bf16 %v671, %v671
        %vm677 = vcmask 64512
        %v679 = vsel %vm677, %v674, 0
        %v682 = vsel %vm677, %v675, 0
        %684 = vmatpush.bf16.xpose.msra.mxu0 0
        %685 = vmatpush.bf16.xpose.msra.mxu0 0
        %686 = vmatpush.bf16.xpose.msra.mxu0 0
        %687 = vmatpush.bf16.xpose.msra.mxu0 0
        %688 = vmatpush.bf16.xpose.msra.mxu0 0
        %689 = vmatpush.bf16.xpose.msra.mxu0 0
        %690 = vmatpush.bf16.xpose.msra.mxu0 0
        %691 = vmatpush.bf16.xpose.msra.mxu0 %v682
        %692 = vmatmul.bf16.gmra.mxu0 %v679
        %v693 = vpop.f32.mrf.mxu0
        %v694 = vadd.f32 0.0, %v693
        %v695 = vpop.f32.mrf.mxu0
        %696 = vdwg.mxu0
        %v697 = vmul.f32 %v694, 0.35355338
        %699 = vrot.lane.b32.xlu0 %v674, 120
        %v700 = vpop.permute.xlu0 %699
        %702 = vrot.lane.b32.xlu0 %v675, 120
        %v703 = vpop.permute.xlu0 %702
        %v705 = vsel %vm677, %v700, 0
        %v708 = vsel %vm677, %v703, 0
        %710 = vmatpush.bf16.xpose.msra.mxu0 0
        %711 = vmatpush.bf16.xpose.msra.mxu0 0
        %712 = vmatpush.bf16.xpose.msra.mxu0 0
        %713 = vmatpush.bf16.xpose.msra.mxu0 0
        %714 = vmatpush.bf16.xpose.msra.mxu0 0
        %715 = vmatpush.bf16.xpose.msra.mxu0 0
        %716 = vmatpush.bf16.xpose.msra.mxu0 0
        %717 = vmatpush.bf16.xpose.msra.mxu0 %v708
        %718 = vmatmul.bf16.gmra.mxu0 %v705
        %v719 = vpop.f32.mrf.mxu0
        %v720 = vadd.f32 0.0, %v719
        %v721 = vpop.f32.mrf.mxu0
        %722 = vdwg.mxu0
        %v723 = vmul.f32 %v720, 0.35355338
        %v724 = vsel %vm677, %v697, -inf
        %725 = vmax.xlane.f32.xlu0 %v724
        %v726 = vpop.xlane.xlu0 %725
        %v727 = vsub.f32 %v697, %v726
        %v728 = vmul.f32 %v727, 1.442695
        %v729 = vpow.pop %v728
        %v730 = vsel %vm677, %v729, 0.0
        %731 = vadd.xlane.f32.xlu0 %v730
        %v732 = vpop.xlane.xlu0 %731
        %v733 = vrcp.pop %v732
        %v734 = vmul.f32 %v729, %v733
        %v735 = vsel %vm677, %v723, -inf
        %736 = vmax.xlane.f32.xlu0 %v735
        %v737 = vpop.xlane.xlu0 %736
        %v738 = vsub.f32 %v723, %v737
        %v739 = vmul.f32 %v738, 1.442695
        %v740 = vpow.pop %v739
        %v741 = vsel %vm677, %v740, 0.0
        %742 = vadd.xlane.f32.xlu0 %v741
        %v743 = vpop.xlane.xlu0 %742
        %v744 = vrcp.pop %v743
        %v745 = vmul.f32 %v740, %v744
        %s746 = smul.u32 %s41, 2
        %s747 = sld [smem:[#allocation14 + %s746]]
        %v748 = vstv %s747
        %v749 = vmul.f32 %v748, %v745
        %v750 = vsub.f32 %v734, %v749
        %v751 = vpack.c.bf16 %v750, %v750
        %vm752 = vcmask 60416
        %753 = vst.msk [vmem:[%s523] sm:$0xf] %vm752, %v751
        %v755 = vsel %vm677, %v751, 0
        %vm757 = vcmask 1043456
        %v759 = vsel %vm757, %v676, 0
        %761 = vmatpush.bf16.msra.mxu0 0
        %762 = vmatpush.bf16.msra.mxu0 0
        %763 = vmatpush.bf16.msra.mxu0 0
        %764 = vmatpush.bf16.msra.mxu0 0
        %765 = vmatpush.bf16.msra.mxu0 0
        %766 = vmatpush.bf16.msra.mxu0 0
        %767 = vmatpush.bf16.msra.mxu0 0
        %768 = vmatpush.bf16.msra.mxu0 %v759
        %769 = vmatmul.bf16.gmra.mxu0 %v755
        %v770 = vpop.f32.mrf.mxu0
        %v771 = vadd.f32 0.0, %v770
        %v772 = vpop.f32.mrf.mxu0
        %773 = vdwg.mxu0
        %vm774 = vcmask 130048
        %v775 = vsel %vm774, %v771, 0.0
        %776 = vadd.xlane.f32.xlu0 %v775
        %v777 = vpop.xlane.xlu0 %776
        %v778 = vrot.slane %v777, 4
        %v779 = vadd.f32 %v777, %v778
        %v780 = vrot.slane %v779, 2
        %v781 = vadd.f32 %v779, %v780
        %v782 = vrot.slane %v781, 1
        %v783 = vadd.f32 %v781, %v782
        %s784 = vtos %v783
        %v785 = vstv %s784
        %v786 = vrcp.pop 128.0
        %v787 = vmul.f32 128.0, %v786
        %v788 = vsub.f32 1.0, %v787
        %v789 = vmul.f32 %v786, %v788
        %v790 = vadd.f32 %v786, %v789
        %vm791 = vweird.f32 %v786
        %v792 = vsel %vm791, %v786, %v790
        %v793 = vmul.f32 %v785, %v792
        %v794 = vsub.f32 %v771, %v793
        %v795 = vmul.f32 %v794, %v794
        %v796 = vsel %vm774, %v795, 0.0
        %797 = vadd.xlane.f32.xlu0 %v796
        %v798 = vpop.xlane.xlu0 %797
        %v799 = vrot.slane %v798, 4
        %v800 = vadd.f32 %v798, %v799
        %v801 = vrot.slane %v800, 2
        %v802 = vadd.f32 %v800, %v801
        %v803 = vrot.slane %v802, 1
        %v804 = vadd.f32 %v802, %v803
        %s805 = vtos %v804
        %v806 = vstv %s805
        %v807 = vmul.f32 %v806, %v792
        %v808 = vadd.f32 %v807, 1e-05
        %v809 = vrsqrt.pop %v808
        %v810 = vmul.f32 %v809, %v808
        %v811 = vmul.f32 %v810, %v809
        %v812 = vmul.f32 0.5, %v811
        %v813 = vsub.f32 1.5, %v812
        %v814 = vmul.f32 %v809, %v813
        %vm815 = vweird.f32 %v808
        %vm816 = vweird.f32 %v809
        %vm817 = vmor %vm815, %vm816
        %v818 = vsel %vm817, %v809, %v814
        %v819 = vmul.f32 %v794, %v818
        %v820 = vld [vmem:[%s7] sm:$0x1]
        %v822 = vperm.slane %v820, 0
        %v824 = vmul.f32 %v819, %v822
        %v825 = vld [vmem:[%s8] sm:$0x1]
        %v827 = vperm.slane %v825, 0
        %v829 = vadd.f32 %v824, %v827
        %v830 = vpack.c.bf16 %v829, %v829
        %831 = vrot.lane.b32.xlu0 %v674, 112
        %v832 = vpop.permute.xlu0 %831
        %833 = vrot.lane.b32.xlu0 %v675, 112
        %v834 = vpop.permute.xlu0 %833
        %v836 = vsel %vm677, %v832, 0
        %v839 = vsel %vm677, %v834, 0
        %841 = vmatpush.bf16.xpose.msra.mxu0 0
        %842 = vmatpush.bf16.xpose.msra.mxu0 0
        %843 = vmatpush.bf16.xpose.msra.mxu0 0
        %844 = vmatpush.bf16.xpose.msra.mxu0 0
        %845 = vmatpush.bf16.xpose.msra.mxu0 0
        %846 = vmatpush.bf16.xpose.msra.mxu0 0
        %847 = vmatpush.bf16.xpose.msra.mxu0 0
        %848 = vmatpush.bf16.xpose.msra.mxu0 %v839
        %849 = vmatmul.bf16.gmra.mxu0 %v836
        %v850 = vpop.f32.mrf.mxu0
        %v851 = vadd.f32 0.0, %v850
        %v852 = vpop.f32.mrf.mxu0
        %853 = vdwg.mxu0
        %v854 = vmul.f32 %v851, 0.35355338
        %855 = vrot.lane.b32.xlu0 %v674, 104
        %v856 = vpop.permute.xlu0 %855
        %857 = vrot.lane.b32.xlu0 %v675, 104
        %v858 = vpop.permute.xlu0 %857
        %v860 = vsel %vm677, %v856, 0
        %v863 = vsel %vm677, %v858, 0
        %865 = vmatpush.bf16.xpose.msra.mxu0 0
        %866 = vmatpush.bf16.xpose.msra.mxu0 0
        %867 = vmatpush.bf16.xpose.msra.mxu0 0
        %868 = vmatpush.bf16.xpose.msra.mxu0 0
        %869 = vmatpush.bf16.xpose.msra.mxu0 0
        %870 = vmatpush.bf16.xpose.msra.mxu0 0
        %871 = vmatpush.bf16.xpose.msra.mxu0 0
        %872 = vmatpush.bf16.xpose.msra.mxu0 %v863
        %873 = vmatmul.bf16.gmra.mxu0 %v860
        %v874 = vpop.f32.mrf.mxu0
        %v875 = vadd.f32 0.0, %v874
        %v876 = vpop.f32.mrf.mxu0
        %877 = vdwg.mxu0
        %v878 = vmul.f32 %v875, 0.35355338
        %v879 = vsel %vm677, %v854, -inf
        %880 = vmax.xlane.f32.xlu0 %v879
        %v881 = vpop.xlane.xlu0 %880
        %v882 = vsub.f32 %v854, %v881
        %v883 = vmul.f32 %v882, 1.442695
        %v884 = vpow.pop %v883
        %v885 = vsel %vm677, %v884, 0.0
        %886 = vadd.xlane.f32.xlu0 %v885
        %v887 = vpop.xlane.xlu0 %886
        %v888 = vrcp.pop %v887
        %v889 = vmul.f32 %v884, %v888
        %v890 = vsel %vm677, %v878, -inf
        %891 = vmax.xlane.f32.xlu0 %v890
        %v892 = vpop.xlane.xlu0 %891
        %v893 = vsub.f32 %v878, %v892
        %v894 = vmul.f32 %v893, 1.442695
        %v895 = vpow.pop %v894
        %v896 = vsel %vm677, %v895, 0.0
        %897 = vadd.xlane.f32.xlu0 %v896
        %v898 = vpop.xlane.xlu0 %897
        %v899 = vrcp.pop %v898
        %v900 = vmul.f32 %v895, %v899
        %s901 = sadd.s32 %s746, 1
        %s902 = sld [smem:[#allocation14 + %s901]]
        %v903 = vstv %s902
        %v904 = vmul.f32 %v903, %v900
        %v905 = vsub.f32 %v889, %v904
        %v906 = vpack.c.bf16 %v905, %v905
        %s907 = scalar_lea.vmem %s523, 4 [#allocation18]
        %908 = vst.msk [vmem:[%s907] sm:$0xf] %vm752, %v906
        %910 = vrot.lane.b32.xlu0 %v676, 112
        %v911 = vpop.permute.xlu0 %910
        %v913 = vsel %vm677, %v906, 0
        %v916 = vsel %vm757, %v911, 0
        %918 = vmatpush.bf16.msra.mxu0 0
        %919 = vmatpush.bf16.msra.mxu0 0
        %920 = vmatpush.bf16.msra.mxu0 0
        %921 = vmatpush.bf16.msra.mxu0 0
        %922 = vmatpush.bf16.msra.mxu0 0
        %923 = vmatpush.bf16.msra.mxu0 0
        %924 = vmatpush.bf16.msra.mxu0 0
        %925 = vmatpush.bf16.msra.mxu0 %v916
        %926 = vmatmul.bf16.gmra.mxu0 %v913
        %v927 = vpop.f32.mrf.mxu0
        %v928 = vadd.f32 0.0, %v927
        %v929 = vpop.f32.mrf.mxu0
        %930 = vdwg.mxu0
        %v931 = vsel %vm774, %v928, 0.0
        %932 = vadd.xlane.f32.xlu0 %v931
        %v933 = vpop.xlane.xlu0 %932
        %v934 = vrot.slane %v933, 4
        %v935 = vadd.f32 %v933, %v934
        %v936 = vrot.slane %v935, 2
        %v937 = vadd.f32 %v935, %v936
        %v938 = vrot.slane %v937, 1
        %v939 = vadd.f32 %v937, %v938
        %s940 = vtos %v939
        %v941 = vstv %s940
        %v942 = vmul.f32 %v941, %v792
        %v943 = vsub.f32 %v928, %v942
        %v944 = vmul.f32 %v943, %v943
        %v945 = vsel %vm774, %v944, 0.0
        %946 = vadd.xlane.f32.xlu0 %v945
        %v947 = vpop.xlane.xlu0 %946
        %v948 = vrot.slane %v947, 4
        %v949 = vadd.f32 %v947, %v948
        %v950 = vrot.slane %v949, 2
        %v951 = vadd.f32 %v949, %v950
        %v952 = vrot.slane %v951, 1
        %v953 = vadd.f32 %v951, %v952
        %s954 = vtos %v953
        %v955 = vstv %s954
        %v956 = vmul.f32 %v955, %v792
        %v957 = vadd.f32 %v956, 1e-05
        %v958 = vrsqrt.pop %v957
        %v959 = vmul.f32 %v958, %v957
        %v960 = vmul.f32 %v959, %v958
        %v961 = vmul.f32 0.5, %v960
        %v962 = vsub.f32 1.5, %v961
        %v963 = vmul.f32 %v958, %v962
        %vm964 = vweird.f32 %v957
        %vm965 = vweird.f32 %v958
        %vm966 = vmor %vm964, %vm965
        %v967 = vsel %vm966, %v958, %v963
        %v968 = vmul.f32 %v943, %v967
        %v969 = vld [vmem:[%s7] sm:$0x1]
        %v971 = vperm.slane %v969, 0
        %v973 = vmul.f32 %v968, %v971
        %v974 = vld [vmem:[%s8] sm:$0x1]
        %v976 = vperm.slane %v974, 0
        %v978 = vadd.f32 %v973, %v976
        %v979 = vpack.c.bf16 %v978, %v978
        %v981 = vunpack.c.l.b16 %v979
        %v982 = vpack.c.b16 %v981, %v981
        %983 = vrot.lane.b32.xlu0 %v982, 16
        %v984 = vpop.permute.xlu0 %983
        %v987 = vsel %vm774, %v830, %v984
        %v988 = vld [vmem:[#allocation3] sm:$0xff]
        %s989 = smul.addr %s576, 4
        %s990 = scalar_lea.vmem [#allocation15], %s989
        %v991 = vld [vmem:[%s990] sm:$0xf]
        %v992 = vld [vmem:[%s990 + $0x4] sm:$0xf]
        %v993 = vld [vmem:[%s990 + $0x8] sm:$0xf]
        %v994 = vld [vmem:[%s990 + $0xc] sm:$0xf]
        %v999 = vunpack.c.l.b16 %v991
        %v1000 = vunpack.c.l.b16 %v992
        %v1001 = vunpack.c.l.b16 %v993
        %v1002 = vunpack.c.l.b16 %v994
        %v1003 = vpack.c.b16 %v1000, %v999
        %v1004 = vpack.c.b16 %v1002, %v1001
        %v1007 = vsel %vm595, %v987, 0
        %1009 = vmatpush.bf16.msra.mxu0 0
        %1010 = vmatpush.bf16.msra.mxu0 0
        %1011 = vmatpush.bf16.msra.mxu0 0
        %1012 = vmatpush.bf16.msra.mxu0 0
        %1013 = vmatpush.bf16.msra.mxu0 0
        %1014 = vmatpush.bf16.msra.mxu0 0
        %1015 = vmatpush.bf16.msra.mxu0 %v1004
        %1016 = vmatpush.bf16.msra.mxu0 %v1003
        %1017 = vmatmul.bf16.gmra.mxu0 %v1007
        %v1018 = vpop.f32.mrf.mxu0
        %v1019 = vadd.f32 0.0, %v1018
        %v1020 = vpop.f32.mrf.mxu0
        %1021 = vdwg.mxu0
        %v1022 = vadd.f32 %v988, %v1019
        %1023 = vst.msk [vmem:[#allocation3] sm:$0xff] %vm595, %v1022
        %p1024 = scmp.eq.s32.totalorder %s41, 1
        // Predicated region
        $region93: #{tpu_custom_call.1} parent=59 // pred_check
          %p1025 = pneg %p1024
        $region94: #{tpu_custom_call.1} parent=59 // pred_check_branch
          %1027 = sbr.rel (%p1025) target = $region96
        $region95: #{tpu_custom_call.1} parent=59 // pred_region
          %v1028 = vld [vmem:[#allocation3] sm:$0xff]
          %v1029 = vpack.c.bf16 %v1028, %v1028
          %vm1030 = vcmask 257024
          %1031 = vst.msk [vmem:[%s516] sm:$0xf] %vm1030, %v1029
        $region96: #{tpu_custom_call.1} parent=59 // pred_fallthru
          _
        %s1032 = sand.u32 %s271, 1
        %s1033 = scalar_lea.sflag [#allocation6], %s1032
        %s1034 = sand.u32 %s271, 1
        %s1035 = smul.addr %s1034, 4
        %s1036 = scalar_lea.vmem [#allocation17], %s1035
        %s1037 = sand.u32 %s299, 1
        %s1038 = scalar_lea.sflag [#allocation19], %s1037
        %s1039 = sand.u32 %s299, 1
        %s1040 = smul.addr %s1039, 8
        %s1041 = scalar_lea.vmem [#allocation18], %s1040
        // Predicated region
        $region97: #{tpu_custom_call.1} parent=59 // pred_check
          %p1042 = pneg %p281
        $region98: #{tpu_custom_call.1} parent=59 // pred_check_branch
          %1044 = sbr.rel (%p1042) target = $region100
        $region99: #{tpu_custom_call.1} parent=59 // pred_region
          %1046 = vsyncadd %s1033, 0
          %s1047 = smul.addr %s40, 4
          %s1048 = scalar_lea.hbm %s10, %s1047
          %s1050 = sshll.u32 %s1036, 4
          %s1051 = int_to_ptr.vmem [resolvable:$true] %s1050
          %s1052 = sshll.u32 %s1048, 4
          %s1053 = int_to_ptr.hbm [resolvable:$true] %s1052
          %1055 = dma.vmem_to_hbm [thread:$0]  %s1051, 64, %s1053, %s1033
        $region100: #{tpu_custom_call.1} parent=59 // pred_fallthru
          _
        // Predicated region
        $region101: #{tpu_custom_call.1} parent=59 // pred_check
          %p1056 = pneg %p309
        $region102: #{tpu_custom_call.1} parent=59 // pred_check_branch
          %1058 = sbr.rel (%p1056) target = $region104
        $region103: #{tpu_custom_call.1} parent=59 // pred_region
          %s1059 = smul.u32 2, %s41
          %1061 = vsyncadd %s1038, 0
          %s1062 = smul.addr %s40, 4
          %s1063 = sadd.s32 %s1059, %s1062
          %s1064 = smul.addr %s1063, 4
          %s1065 = scalar_lea.hbm %s11, %s1064
          %s1066 = sshll.u32 %s1041, 4
          %s1067 = int_to_ptr.vmem [resolvable:$true] %s1066
          %s1068 = sshll.u32 %s1065, 4
          %s1069 = int_to_ptr.hbm [resolvable:$true] %s1068
          %1074 = dma.vmem_to_hbm [thread:$0]  %s1067, 128, %s1069, %s1038, 64, 64, 4
        $region104: #{tpu_custom_call.1} parent=59 // pred_fallthru
          _
      $region60: #{tpu_custom_call.1} parent=5 // pred_fallthru
        _
      %p1075 = scmp.le.s32.totalorder 2, %s31
      // Predicated region
      $region105: #{tpu_custom_call.1} parent=5 // pred_check
        %p1076 = pneg %p1075
      $region106: #{tpu_custom_call.1} parent=5 // pred_check_branch
        %1078 = sbr.rel (%p1076) target = $region108
      $region107: #{tpu_custom_call.1} parent=5 // pred_region
        %s1079 = ssub.s32 %s31, 2
        // Predicated region
        $region109: #{tpu_custom_call.1} parent=107 // pred_check
          %p1080 = pneg %p287
        $region110: #{tpu_custom_call.1} parent=107 // pred_check_branch
          %1082 = sbr.rel (%p1080) target = $region112
        $region111: #{tpu_custom_call.1} parent=107 // pred_region
          %s1083 = sand.u32 %s272, 1
          %s1084 = scalar_lea.sflag [#allocation6], %s1083
          %s1085 = sand.u32 %s272, 1
          %s1086 = smul.addr %s1085, 4
          %s1087 = scalar_lea.vmem [#allocation17], %s1086
          %1089 = dma.done %s1084, 64
        $region112: #{tpu_custom_call.1} parent=107 // pred_fallthru
          _
        // Predicated region
        $region113: #{tpu_custom_call.1} parent=107 // pred_check
          %p1090 = pneg %p315
        $region114: #{tpu_custom_call.1} parent=107 // pred_check_branch
          %1092 = sbr.rel (%p1090) target = $region116
        $region115: #{tpu_custom_call.1} parent=107 // pred_region
          %s1093 = sand.u32 %s300, 1
          %s1094 = scalar_lea.sflag [#allocation19], %s1093
          %s1095 = sand.u32 %s300, 1
          %s1096 = smul.addr %s1095, 8
          %s1097 = scalar_lea.vmem [#allocation18], %s1096
          %1099 = dma.done %s1094, 128
        $region116: #{tpu_custom_call.1} parent=107 // pred_fallthru
          _
      $region108: #{tpu_custom_call.1} parent=5 // pred_fallthru
        _
    $region6: #{tpu_custom_call.1} parent=1 // loop_footer
      %s35 = sadd.s32 1, %s31
    $region7: #{tpu_custom_call.1} parent=1 // loop_footer_branch
      %30 = sbr.rel target = $region3
    $region8: #{tpu_custom_call.1} parent=1 // loop_exit
      _
    %1100 = vsyncpa [#allocation5], 1
    %s1101 = scalar_lea.sflag [#allocation5], 1
    %1102 = vsyncpa %s1101, 1
    %1103 = vsyncpa [#allocation9], 1
    %1104 = vsyncpa [#allocation12], 1
    %1105 = vsyncpa [#allocation16], 1
    %1106 = vsyncpa [#allocation6], 1
    %s1107 = scalar_lea.sflag [#allocation6], 1
    %1108 = vsyncpa %s1107, 1
    %1109 = vsyncpa [#allocation19], 1
    %s1110 = scalar_lea.sflag [#allocation19], 1
    %1111 = vsyncpa %s1110, 1
    %1112 = vsyncpa [#allocation7], 1
    %s1113 = scalar_lea.sflag [#allocation7], 1
    %1114 = vsyncpa %s1113, 1

</llo_original>
